<compile_context>
chip_gen: v7x
topology: tpu7x:2x2x1
jax: 0.10.0
libtpu: 0.0.40
codegen_flags: <defaults>
</compile_context>

<pallas_src>
import functools

import jax
import jax.numpy as jnp
from jax import lax
from jax.experimental import pallas as pl
from jax.experimental.pallas import tpu as pltpu


# ---------------------------------------------------------------------------
# In-kernel math helpers
# ---------------------------------------------------------------------------

def _layernorm(x, gamma, beta, eps):
    """LayerNorm over the last axis (PyTorch semantics: biased variance)."""
    mu = jnp.mean(x, axis=-1, keepdims=True)
    c = x - mu
    var = jnp.mean(c * c, axis=-1, keepdims=True)
    return c * lax.rsqrt(var + eps) * gamma + beta


def _erf_approx(x):
    # Abramowitz & Stegun 7.1.26, |error| <= 1.5e-7.  Uses only
    # exp/add/mul/div/select, so it is guaranteed to lower in Mosaic.
    a1, a2, a3, a4, a5 = (0.254829592, -0.284496736, 1.421413741,
                          -1.453152027, 1.061405429)
    p = 0.3275911
    s = jnp.where(x >= 0.0, 1.0, -1.0)
    z = jnp.abs(x)
    t = 1.0 / (1.0 + p * z)
    poly = ((((a5 * t + a4) * t + a3) * t + a2) * t + a1) * t
    return s * (1.0 - poly * jnp.exp(-z * z))


def _gelu_exact(x):
    # nn.GELU() default = exact (erf-based) GELU.
    return 0.5 * x * (1.0 + _erf_approx(x * 0.7071067811865476))


# ---------------------------------------------------------------------------
# Fused whole-forward kernel
# ---------------------------------------------------------------------------

def _limubert_kernel(tok_ref, patch_g_ref, patch_b_ref, proj_w_ref, proj_b_ref,
                     embed_g_ref, embed_b_ref, cls_ref, pos_ref, bias_ref,
                     ln1_g_ref, ln1_b_ref, wqkv_ref, wo_ref, bo_ref,
                     ln2_g_ref, ln2_b_ref, w1_ref, b1_ref, w2_ref, b2_ref,
                     final_g_ref, final_b_ref,
                     o_ref, x_scr,
                     *, depth, heads, dim_head, num_win, batch_tile, pool, eps):
    S = num_win + 1
    inner = heads * dim_head
    scale = dim_head ** (-0.5)

    # ---- projector on the (bt*N, P) token slab ----------------------------
    t = tok_ref[...].astype(jnp.float32)
    tn = _layernorm(t, patch_g_ref[...], patch_b_ref[...], eps)
    pw = proj_w_ref[...]
    proj = jnp.dot(tn.astype(pw.dtype), pw,
                   preferred_element_type=jnp.float32) + proj_b_ref[...]
    proj = _layernorm(proj, embed_g_ref[...], embed_b_ref[...], eps)   # (bt*N, D)

    # ---- assemble the (bt*S, D) slab: cls token + positional embedding ----
    pos = pos_ref[...].astype(jnp.float32)                              # (S, D)
    cls_row = cls_ref[...].astype(jnp.float32) + pos[0:1, :]            # (1, D)
    for b in range(batch_tile):                                         # static, tiny
        x_scr[pl.ds(b * S, 1), :] = cls_row
        x_scr[pl.ds(b * S + 1, num_win), :] = (
            proj[b * num_win:(b + 1) * num_win, :] + pos[1:S, :])
    x = x_scr[...]                                                      # (rows, D) f32

    # Block-diagonal additive bias keeps folded batch items from attending
    # across each other.
    bias = bias_ref[...].astype(jnp.float32)                            # (rows, rows)

    # ---- transformer layers (weights resident in VMEM, looped in-kernel) --
    # depth is a small static constant; a static loop keeps all indexing
    # static.  For very deep models switch to lax.fori_loop + ref[d].
    for d in range(depth):
        # SelfAttention (pre-LN, bias-free fused qkv, to_out Linear + bias)
        xn = _layernorm(x, ln1_g_ref[d], ln1_b_ref[d], eps)
        wqkv = wqkv_ref[d]                                              # (D, 3*inner)
        qkv = jnp.dot(xn.astype(wqkv.dtype), wqkv,
                      preferred_element_type=jnp.float32)               # (rows, 3*inner)
        heads_out = []
        for h in range(heads):                                          # static, small H
            q = qkv[:, h * dim_head:(h + 1) * dim_head] * scale
            k = qkv[:, inner + h * dim_head:inner + (h + 1) * dim_head]
            v = qkv[:, 2 * inner + h * dim_head:2 * inner + (h + 1) * dim_head]
            # q @ k^T over the whole slab (no materialized transpose).
            s = lax.dot_general(q, k, (((1,), (1,)), ((), ())),
                                preferred_element_type=jnp.float32) + bias
            s = s - jnp.max(s, axis=-1, keepdims=True)
            p = jnp.exp(s)
            p = p * pl.reciprocal(jnp.sum(p, axis=-1, keepdims=True), approx=True)
            heads_out.append(jnp.dot(p.astype(v.dtype), v,
                                     preferred_element_type=jnp.float32))
        attn = jnp.concatenate(heads_out, axis=-1)                      # (rows, inner)
        wo = wo_ref[d]                                                  # (inner, D)
        x = x + jnp.dot(attn.astype(wo.dtype), wo,
                        preferred_element_type=jnp.float32) + bo_ref[d]

        # FeedForward (pre-LN, Linear -> GELU(exact) -> Linear)
        xn2 = _layernorm(x, ln2_g_ref[d], ln2_b_ref[d], eps)
        w1 = w1_ref[d]
        h1 = jnp.dot(xn2.astype(w1.dtype), w1,
                     preferred_element_type=jnp.float32) + b1_ref[d]
        h1 = _gelu_exact(h1)
        w2 = w2_ref[d]
        x = x + jnp.dot(h1.astype(w2.dtype), w2,
                        preferred_element_type=jnp.float32) + b2_ref[d]

    # ---- final LayerNorm + pooling ----------------------------------------
    fg = final_g_ref[...]
    fb = final_b_ref[...]
    if pool == 'cls':
        # norm(x)[:, 0] == norm(x[:, 0]) -> only normalize the cls rows.
        x_cls = jnp.concatenate([x[b * S:b * S + 1, :] for b in range(batch_tile)],
                                axis=0)                                  # (bt, D)
        o_ref[...] = _layernorm(x_cls, fg, fb, eps).astype(o_ref.dtype)
    else:
        o_ref[...] = _layernorm(x, fg, fb, eps).astype(o_ref.dtype)


# ---------------------------------------------------------------------------
# Wrapper
# ---------------------------------------------------------------------------

def _pick_batch_tile(batch):
    # Fold the whole batch into one grid step when it is small: per-step work
    # at LIMU-BERT shapes is ~us-scale, so splitting it across grid steps
    # (or TensorCores) only adds per-step overhead.  Only tile large batches,
    # with an 8-aligned tile so all block shapes stay (8,128)-legal.
    if batch <= 16:
        return batch
    for bt in (16, 8):
        if batch % bt == 0:
            return bt
    return batch  # TODO(synk): pad odd large batches instead of one huge step.


def limubert_enc_pallas(sig, params, *, heads, dim_head, pool='cls', eps=1e-5):
    B, N, L, C = sig.shape
    P = L * C
    D = params['proj_w'].shape[1]
    depth = params['wqkv'].shape[0]
    mlp = params['w1'].shape[2]
    inner = heads * dim_head
    S = N + 1

    bt = _pick_batch_tile(B)
    grid = (B // bt,)
    rows = bt * S

    # Rearrange('b n l c -> b n (l c)') flattened to a (B*N, P) token slab.
    tokens = sig.reshape(B * N, P)

    # Block-diagonal additive attention bias for the folded (bt*S, D) slab.
    ids = jnp.arange(rows, dtype=jnp.int32) // S
    attn_bias = jnp.where(ids[:, None] == ids[None, :], 0.0, -1e30).astype(jnp.float32)

    pos = params['pos_embedding'][:S]                                    # (S, D)

    kernel = functools.partial(
        _limubert_kernel, depth=depth, heads=heads, dim_head=dim_head,
        num_win=N, batch_tile=bt, pool=pool, eps=eps)

    c2 = lambda i: (0, 0)
    c3 = lambda i: (0, 0, 0)
    in_specs = [
        pl.BlockSpec((bt * N, P), lambda i: (i, 0)),   # tokens
        pl.BlockSpec((1, P), c2),                      # patch LN gamma
        pl.BlockSpec((1, P), c2),                      # patch LN beta
        pl.BlockSpec((P, D), c2),                      # proj W
        pl.BlockSpec((1, D), c2),                      # proj b
        pl.BlockSpec((1, D), c2),                      # embed LN gamma
        pl.BlockSpec((1, D), c2),                      # embed LN beta
        pl.BlockSpec((1, D), c2),                      # cls token
        pl.BlockSpec((S, D), c2),                      # pos embedding
        pl.BlockSpec((rows, rows), c2),                # block-diag attn bias
        pl.BlockSpec((depth, 1, D), c3),               # ln1 gamma
        pl.BlockSpec((depth, 1, D), c3),               # ln1 beta
        pl.BlockSpec((depth, D, 3 * inner), c3),       # fused Wqkv
        pl.BlockSpec((depth, inner, D), c3),           # Wo
        pl.BlockSpec((depth, 1, D), c3),               # to_out bias
        pl.BlockSpec((depth, 1, D), c3),               # ln2 gamma
        pl.BlockSpec((depth, 1, D), c3),               # ln2 beta
        pl.BlockSpec((depth, D, mlp), c3),             # FF W1
        pl.BlockSpec((depth, 1, mlp), c3),             # FF b1
        pl.BlockSpec((depth, mlp, D), c3),             # FF W2
        pl.BlockSpec((depth, 1, D), c3),               # FF b2
        pl.BlockSpec((1, D), c2),                      # final LN gamma
        pl.BlockSpec((1, D), c2),                      # final LN beta
    ]
    if pool == 'cls':
        out_shape = jax.ShapeDtypeStruct((B, D), sig.dtype)
        out_specs = pl.BlockSpec((bt, D), lambda i: (i, 0))
    else:
        out_shape = jax.ShapeDtypeStruct((B * S, D), sig.dtype)
        out_specs = pl.BlockSpec((rows, D), lambda i: (i, 0))

    grid_spec = pltpu.PrefetchScalarGridSpec(
        num_scalar_prefetch=0,
        grid=grid,
        in_specs=in_specs,
        out_specs=out_specs,
        scratch_shapes=[pltpu.VMEM((rows, D), jnp.float32)],
    )
    out = pl.pallas_call(
        kernel,
        out_shape=out_shape,
        grid_spec=grid_spec,
        compiler_params=pltpu.CompilerParams(dimension_semantics=("parallel",)),
    )(tokens, params['patch_g'], params['patch_b'], params['proj_w'],
      params['proj_b'], params['embed_g'], params['embed_b'],
      params['cls_token'], pos, attn_bias,
      params['ln1_g'], params['ln1_b'], params['wqkv'], params['wo'],
      params['bo'], params['ln2_g'], params['ln2_b'],
      params['w1'], params['b1'], params['w2'], params['b2'],
      params['final_g'], params['final_b'])

    if pool == 'cls':
        return out
    xf = out.reshape(B, S, D)
    if pool == 'all':
        return xf[:, 1:]
    return xf.mean(axis=1) if pool == 'mean' else xf[:, 0]


def prepare_params(raw, *, heads, dim_head, weights_dtype=None):
    """Repack raw (PyTorch-style) weights into a fused-kernel-friendly layout:
    per-layer tensors stacked along a leading depth axis, vectors as (1, ·)
    rows.  `weights_dtype=jnp.bfloat16` optionally casts matmul weight
    matrices for bf16 MXU operands on v6e/v7x (accumulation stays f32)."""
    del heads, dim_head  # fused QKV layout needs no per-head repacking
    wcast = ((lambda w: jnp.asarray(w).astype(weights_dtype))
             if weights_dtype is not None else (lambda w: jnp.asarray(w)))
    row = lambda v: jnp.asarray(v).reshape(1, -1)
    layers = raw['layers']
    stack_row = lambda k: jnp.stack([row(lp[k]) for lp in layers])        # (depth,1,·)
    stack_mat = lambda k: jnp.stack([wcast(lp[k]) for lp in layers])      # (depth,·,·)

    return dict(
        patch_g=row(raw['patch_g']), patch_b=row(raw['patch_b']),
        proj_w=wcast(raw['proj_w']), proj_b=row(raw['proj_b']),
        embed_g=row(raw['embed_g']), embed_b=row(raw['embed_b']),
        cls_token=jnp.asarray(raw['cls_token']).reshape(1, -1),
        pos_embedding=jnp.asarray(raw['pos_embedding'])[0],               # (N+1, D)
        ln1_g=stack_row('ln1_g'), ln1_b=stack_row('ln1_b'),
        wqkv=stack_mat('wqkv'), wo=stack_mat('wo'), bo=stack_row('bo'),
        ln2_g=stack_row('ln2_g'), ln2_b=stack_row('ln2_b'),
        w1=stack_mat('w1'), b1=stack_row('b1'),
        w2=stack_mat('w2'), b2=stack_row('b2'),
        final_g=row(raw['final_g']), final_b=row(raw['final_b']))


# ---------------------------------------------------------------------------
# Pure-JAX reference mirroring the PyTorch module
# ---------------------------------------------------------------------------

def _ln_ref(x, g, b, eps=1e-5):
    mu = x.mean(-1, keepdims=True)
    var = ((x - mu) ** 2).mean(-1, keepdims=True)
    return (x - mu) / jnp.sqrt(var + eps) * g + b


def limubert_enc_ref(sig, raw, *, heads, dim_head, pool='cls', eps=1e-5):
    B, N, L, C = sig.shape
    inner = heads * dim_head
    scale = dim_head ** (-0.5)
    x = sig.reshape(B, N, L * C)
    x = _ln_ref(x, raw['patch_g'], raw['patch_b'], eps)
    x = x @ raw['proj_w'] + raw['proj_b']
    x = _ln_ref(x, raw['embed_g'], raw['embed_b'], eps)
    D = x.shape[-1]
    cls = jnp.broadcast_to(raw['cls_token'], (B, 1, D))
    x = jnp.concatenate([cls, x], axis=1) + raw['pos_embedding'][:, :N + 1]
    S = N + 1
    for lp in raw['layers']:
        xn = _ln_ref(x, lp['ln1_g'], lp['ln1_b'], eps)
        qkv = xn @ lp['wqkv']
        q, k, v = qkv[..., :inner], qkv[..., inner:2 * inner], qkv[..., 2 * inner:]
        split = lambda t: t.reshape(B, S, heads, dim_head).transpose(0, 2, 1, 3)
        qh, kh, vh = split(q), split(k), split(v)
        dots = jnp.einsum('bhnd,bhmd->bhnm', qh, kh) * scale
        attn = jax.nn.softmax(dots, axis=-1)
        out = jnp.einsum('bhnm,bhmd->bhnd', attn, vh)
        out = out.transpose(0, 2, 1, 3).reshape(B, S, inner)
        x = out @ lp['wo'] + lp['bo'] + x
        xn2 = _ln_ref(x, lp['ln2_g'], lp['ln2_b'], eps)
        h1 = jax.nn.gelu(xn2 @ lp['w1'] + lp['b1'], approximate=False)
        x = h1 @ lp['w2'] + lp['b2'] + x
    x = _ln_ref(x, raw['final_g'], raw['final_b'], eps)
    if pool == 'all':
        return x[:, 1:]
    return x.mean(axis=1) if pool == 'mean' else x[:, 0]


if __name__ == "__main__":
    # Small shapes consistent with LIMUBertEnc:
    # sig: (batch, num_win, win_len, channels); patch_dim = channels * win_len.
    B, NUM_WIN, WIN_LEN, CHANNELS = 2, 8, 4, 4
    DIM, DEPTH, HEADS, DIM_HEAD, MLP_DIM = 32, 2, 4, 8, 64
    P = CHANNELS * WIN_LEN          # 16
    INNER = HEADS * DIM_HEAD        # 32

    key = jax.random.PRNGKey(0)
    ks = iter(jax.random.split(key, 64))
    nrm = lambda shape, s=1.0: s * jax.random.normal(next(ks), shape, dtype=jnp.float32)

    raw = dict(
        patch_g=1.0 + 0.1 * nrm((P,)), patch_b=0.1 * nrm((P,)),
        proj_w=nrm((P, DIM), 0.1), proj_b=nrm((DIM,), 0.1),
        embed_g=1.0 + 0.1 * nrm((DIM,)), embed_b=0.1 * nrm((DIM,)),
        cls_token=nrm((1, 1, DIM)),
        pos_embedding=nrm((1, NUM_WIN + 1, DIM)),
        final_g=1.0 + 0.1 * nrm((DIM,)), final_b=0.1 * nrm((DIM,)),
        layers=[dict(
            ln1_g=1.0 + 0.1 * nrm((DIM,)), ln1_b=0.1 * nrm((DIM,)),
            wqkv=nrm((DIM, 3 * INNER), 0.05),
            wo=nrm((INNER, DIM), 0.05), bo=nrm((DIM,), 0.05),
            ln2_g=1.0 + 0.1 * nrm((DIM,)), ln2_b=0.1 * nrm((DIM,)),
            w1=nrm((DIM, MLP_DIM), 0.05), b1=nrm((MLP_DIM,), 0.05),
            w2=nrm((MLP_DIM, DIM), 0.05), b2=nrm((DIM,), 0.05),
        ) for _ in range(DEPTH)],
    )
    sig = nrm((B, NUM_WIN, WIN_LEN, CHANNELS))

    # weights_dtype=jnp.bfloat16 would halve weight traffic / use bf16 MXU
    # operands on v6e/v7x; the demo keeps f32 for a tight tolerance check.
    params = prepare_params(raw, heads=HEADS, dim_head=DIM_HEAD)
    out = limubert_enc_pallas(sig, params, heads=HEADS, dim_head=DIM_HEAD, pool='cls')
    out = jax.block_until_ready(out)

    ref = limubert_enc_ref(sig, raw, heads=HEADS, dim_head=DIM_HEAD, pool='cls')
    assert out.shape == (B, DIM), out.shape
    max_err = float(jnp.max(jnp.abs(out - ref)))
    # Tolerance covers pl.reciprocal(approx=True) in the softmax and the
    # in-kernel polynomial erf (|err| <= 1.5e-7) used for exact GELU.
    assert max_err < 2e-3, f"mismatch vs reference: max_err={max_err}"

    print("KERNEL_OK")
</pallas_src>

<mosaic_0001>
module attributes {stable_mosaic.version = 11 : i64} {
  func.func @_limubert_kernel(%arg0: i32, %arg1: memref<16x16xf32, #tpu.memory_space<vmem>>, %arg2: memref<1x16xf32, #tpu.memory_space<vmem>>, %arg3: memref<1x16xf32, #tpu.memory_space<vmem>>, %arg4: memref<16x32xf32, #tpu.memory_space<vmem>>, %arg5: memref<1x32xf32, #tpu.memory_space<vmem>>, %arg6: memref<1x32xf32, #tpu.memory_space<vmem>>, %arg7: memref<1x32xf32, #tpu.memory_space<vmem>>, %arg8: memref<1x32xf32, #tpu.memory_space<vmem>>, %arg9: memref<9x32xf32, #tpu.memory_space<vmem>>, %arg10: memref<18x18xf32, #tpu.memory_space<vmem>>, %arg11: memref<2x1x32xf32, #tpu.memory_space<vmem>>, %arg12: memref<2x1x32xf32, #tpu.memory_space<vmem>>, %arg13: memref<2x32x96xf32, #tpu.memory_space<vmem>>, %arg14: memref<2x32x32xf32, #tpu.memory_space<vmem>>, %arg15: memref<2x1x32xf32, #tpu.memory_space<vmem>>, %arg16: memref<2x1x32xf32, #tpu.memory_space<vmem>>, %arg17: memref<2x1x32xf32, #tpu.memory_space<vmem>>, %arg18: memref<2x32x64xf32, #tpu.memory_space<vmem>>, %arg19: memref<2x1x64xf32, #tpu.memory_space<vmem>>, %arg20: memref<2x64x32xf32, #tpu.memory_space<vmem>>, %arg21: memref<2x1x32xf32, #tpu.memory_space<vmem>>, %arg22: memref<1x32xf32, #tpu.memory_space<vmem>>, %arg23: memref<1x32xf32, #tpu.memory_space<vmem>>, %arg24: memref<2x32xf32, #tpu.memory_space<vmem>>, %arg25: memref<18x32xf32, #tpu.memory_space<vmem>>) attributes {dimension_semantics = [#tpu.dimension_semantics<parallel>], iteration_bounds = array<i64: 1>, scalar_prefetch = 0 : i64, scratch_operands = 1 : i64, tpu.core_type = #tpu.core_type<tc>, window_params = [{transform_indices = @transform_0, window_bounds = array<i64: 16, 16>}, {pipeline_mode = #tpu.pipeline_mode<synchronous>, transform_indices = @transform_1, window_bounds = array<i64: 1, 16>}, {pipeline_mode = #tpu.pipeline_mode<synchronous>, transform_indices = @transform_2, window_bounds = array<i64: 1, 16>}, {pipeline_mode = #tpu.pipeline_mode<synchronous>, transform_indices = @transform_3, window_bounds = array<i64: 16, 32>}, {pipeline_mode = #tpu.pipeline_mode<synchronous>, transform_indices = @transform_4, window_bounds = array<i64: 1, 32>}, {pipeline_mode = #tpu.pipeline_mode<synchronous>, transform_indices = @transform_5, window_bounds = array<i64: 1, 32>}, {pipeline_mode = #tpu.pipeline_mode<synchronous>, transform_indices = @transform_6, window_bounds = array<i64: 1, 32>}, {pipeline_mode = #tpu.pipeline_mode<synchronous>, transform_indices = @transform_7, window_bounds = array<i64: 1, 32>}, {pipeline_mode = #tpu.pipeline_mode<synchronous>, transform_indices = @transform_8, window_bounds = array<i64: 9, 32>}, {pipeline_mode = #tpu.pipeline_mode<synchronous>, transform_indices = @transform_9, window_bounds = array<i64: 18, 18>}, {pipeline_mode = #tpu.pipeline_mode<synchronous>, transform_indices = @transform_10, window_bounds = array<i64: 2, 1, 32>}, {pipeline_mode = #tpu.pipeline_mode<synchronous>, transform_indices = @transform_11, window_bounds = array<i64: 2, 1, 32>}, {pipeline_mode = #tpu.pipeline_mode<synchronous>, transform_indices = @transform_12, window_bounds = array<i64: 2, 32, 96>}, {pipeline_mode = #tpu.pipeline_mode<synchronous>, transform_indices = @transform_13, window_bounds = array<i64: 2, 32, 32>}, {pipeline_mode = #tpu.pipeline_mode<synchronous>, transform_indices = @transform_14, window_bounds = array<i64: 2, 1, 32>}, {pipeline_mode = #tpu.pipeline_mode<synchronous>, transform_indices = @transform_15, window_bounds = array<i64: 2, 1, 32>}, {pipeline_mode = #tpu.pipeline_mode<synchronous>, transform_indices = @transform_16, window_bounds = array<i64: 2, 1, 32>}, {pipeline_mode = #tpu.pipeline_mode<synchronous>, transform_indices = @transform_17, window_bounds = array<i64: 2, 32, 64>}, {pipeline_mode = #tpu.pipeline_mode<synchronous>, transform_indices = @transform_18, window_bounds = array<i64: 2, 1, 64>}, {pipeline_mode = #tpu.pipeline_mode<synchronous>, transform_indices = @transform_19, window_bounds = array<i64: 2, 64, 32>}, {pipeline_mode = #tpu.pipeline_mode<synchronous>, transform_indices = @transform_20, window_bounds = array<i64: 2, 1, 32>}, {pipeline_mode = #tpu.pipeline_mode<synchronous>, transform_indices = @transform_21, window_bounds = array<i64: 1, 32>}, {pipeline_mode = #tpu.pipeline_mode<synchronous>, transform_indices = @transform_22, window_bounds = array<i64: 1, 32>}, {transform_indices = @transform_23, window_bounds = array<i64: 2, 32>}]} {
    %c0 = arith.constant 0 : index
    %c0_0 = arith.constant 0 : index
    %0 = vector.load %arg1[%c0, %c0_0] : memref<16x16xf32, #tpu.memory_space<vmem>>, vector<16x16xf32>
    %c0_1 = arith.constant 0 : index
    %c0_2 = arith.constant 0 : index
    %1 = vector.load %arg2[%c0_1, %c0_2] : memref<1x16xf32, #tpu.memory_space<vmem>>, vector<1x16xf32>
    %c0_3 = arith.constant 0 : index
    %c0_4 = arith.constant 0 : index
    %2 = vector.load %arg3[%c0_3, %c0_4] : memref<1x16xf32, #tpu.memory_space<vmem>>, vector<1x16xf32>
    %cst = arith.constant dense<0.000000e+00> : vector<16xf32>
    %3 = vector.multi_reduction <add>, %0, %cst [1] : vector<16x16xf32> to vector<16xf32>
    %4 = vector.shape_cast %3 : vector<16xf32> to vector<16x1xf32>
    %cst_5 = arith.constant 1.600000e+01 : f32
    %5 = vector.broadcast %cst_5 : f32 to vector<16x1xf32>
    %6 = arith.divf %4, %5 : vector<16x1xf32>
    %7 = vector.broadcast %6 : vector<16x1xf32> to vector<16x16xf32>
    %8 = arith.subf %0, %7 : vector<16x16xf32>
    %9 = arith.mulf %8, %8 : vector<16x16xf32>
    %cst_6 = arith.constant dense<0.000000e+00> : vector<16xf32>
    %10 = vector.multi_reduction <add>, %9, %cst_6 [1] : vector<16x16xf32> to vector<16xf32>
    %11 = vector.shape_cast %10 : vector<16xf32> to vector<16x1xf32>
    %cst_7 = arith.constant 1.600000e+01 : f32
    %12 = vector.broadcast %cst_7 : f32 to vector<16x1xf32>
    %13 = arith.divf %11, %12 : vector<16x1xf32>
    %cst_8 = arith.constant 9.99999974E-6 : f32
    %14 = vector.broadcast %cst_8 : f32 to vector<16x1xf32>
    %15 = arith.addf %13, %14 : vector<16x1xf32>
    %16 = math.rsqrt %15 : vector<16x1xf32>
    %17 = vector.broadcast %16 : vector<16x1xf32> to vector<16x16xf32>
    %18 = arith.mulf %8, %17 : vector<16x16xf32>
    %19 = vector.broadcast %1 : vector<1x16xf32> to vector<16x16xf32>
    %20 = arith.mulf %18, %19 : vector<16x16xf32>
    %21 = vector.broadcast %2 : vector<1x16xf32> to vector<16x16xf32>
    %22 = arith.addf %20, %21 : vector<16x16xf32>
    %c0_9 = arith.constant 0 : index
    %c0_10 = arith.constant 0 : index
    %23 = vector.load %arg4[%c0_9, %c0_10] : memref<16x32xf32, #tpu.memory_space<vmem>>, vector<16x32xf32>
    %cst_11 = arith.constant dense<0.000000e+00> : vector<16x32xf32>
    %24 = tpu.matmul %22, %23, %cst_11 {dimension_numbers = #tpu.dot_dimension_numbers<[1], [0], [0], [1], [0, 0, 1, 1], [], []>} : vector<16x16xf32>, vector<16x32xf32>, vector<16x32xf32> -> vector<16x32xf32>
    %c0_12 = arith.constant 0 : index
    %c0_13 = arith.constant 0 : index
    %25 = vector.load %arg5[%c0_12, %c0_13] : memref<1x32xf32, #tpu.memory_space<vmem>>, vector<1x32xf32>
    %26 = vector.broadcast %25 : vector<1x32xf32> to vector<16x32xf32>
    %27 = arith.addf %24, %26 : vector<16x32xf32>
    %c0_14 = arith.constant 0 : index
    %c0_15 = arith.constant 0 : index
    %28 = vector.load %arg6[%c0_14, %c0_15] : memref<1x32xf32, #tpu.memory_space<vmem>>, vector<1x32xf32>
    %c0_16 = arith.constant 0 : index
    %c0_17 = arith.constant 0 : index
    %29 = vector.load %arg7[%c0_16, %c0_17] : memref<1x32xf32, #tpu.memory_space<vmem>>, vector<1x32xf32>
    %cst_18 = arith.constant dense<0.000000e+00> : vector<16xf32>
    %30 = vector.multi_reduction <add>, %27, %cst_18 [1] : vector<16x32xf32> to vector<16xf32>
    %31 = vector.shape_cast %30 : vector<16xf32> to vector<16x1xf32>
    %cst_19 = arith.constant 3.200000e+01 : f32
    %32 = vector.broadcast %cst_19 : f32 to vector<16x1xf32>
    %33 = arith.divf %31, %32 : vector<16x1xf32>
    %34 = vector.broadcast %33 : vector<16x1xf32> to vector<16x32xf32>
    %35 = arith.subf %27, %34 : vector<16x32xf32>
    %36 = arith.mulf %35, %35 : vector<16x32xf32>
    %cst_20 = arith.constant dense<0.000000e+00> : vector<16xf32>
    %37 = vector.multi_reduction <add>, %36, %cst_20 [1] : vector<16x32xf32> to vector<16xf32>
    %38 = vector.shape_cast %37 : vector<16xf32> to vector<16x1xf32>
    %cst_21 = arith.constant 3.200000e+01 : f32
    %39 = vector.broadcast %cst_21 : f32 to vector<16x1xf32>
    %40 = arith.divf %38, %39 : vector<16x1xf32>
    %cst_22 = arith.constant 9.99999974E-6 : f32
    %41 = vector.broadcast %cst_22 : f32 to vector<16x1xf32>
    %42 = arith.addf %40, %41 : vector<16x1xf32>
    %43 = math.rsqrt %42 : vector<16x1xf32>
    %44 = vector.broadcast %43 : vector<16x1xf32> to vector<16x32xf32>
    %45 = arith.mulf %35, %44 : vector<16x32xf32>
    %46 = vector.broadcast %28 : vector<1x32xf32> to vector<16x32xf32>
    %47 = arith.mulf %45, %46 : vector<16x32xf32>
    %48 = vector.broadcast %29 : vector<1x32xf32> to vector<16x32xf32>
    %49 = arith.addf %47, %48 : vector<16x32xf32>
    %c0_23 = arith.constant 0 : index
    %c0_24 = arith.constant 0 : index
    %50 = vector.load %arg9[%c0_23, %c0_24] : memref<9x32xf32, #tpu.memory_space<vmem>>, vector<9x32xf32>
    %c0_25 = arith.constant 0 : index
    %c0_26 = arith.constant 0 : index
    %51 = vector.load %arg8[%c0_25, %c0_26] : memref<1x32xf32, #tpu.memory_space<vmem>>, vector<1x32xf32>
    %52 = vector.extract_strided_slice %50 {offsets = [0, 0], sizes = [1, 32], strides = [1, 1]} : vector<9x32xf32> to vector<1x32xf32>
    %53 = arith.addf %51, %52 : vector<1x32xf32>
    %c0_27 = arith.constant 0 : index
    %c0_28 = arith.constant 0 : index
    %54 = vector.load %arg25[%c0_27, %c0_28] : memref<18x32xf32, #tpu.memory_space<vmem>>, vector<1x32xf32>
    tpu.vector_store %arg25[%c0_27, %c0_28], %53 {strides = array<i32>} : memref<18x32xf32, #tpu.memory_space<vmem>>, vector<1x32xf32>,
    %55 = vector.extract_strided_slice %49 {offsets = [0, 0], sizes = [8, 32], strides = [1, 1]} : vector<16x32xf32> to vector<8x32xf32>
    %56 = vector.extract_strided_slice %50 {offsets = [1, 0], sizes = [8, 32], strides = [1, 1]} : vector<9x32xf32> to vector<8x32xf32>
    %57 = arith.addf %55, %56 : vector<8x32xf32>
    %c1 = arith.constant 1 : index
    %c0_29 = arith.constant 0 : index
    %58 = vector.load %arg25[%c1, %c0_29] : memref<18x32xf32, #tpu.memory_space<vmem>>, vector<8x32xf32>
    tpu.vector_store %arg25[%c1, %c0_29], %57 {strides = array<i32>} : memref<18x32xf32, #tpu.memory_space<vmem>>, vector<8x32xf32>,
    %c9 = arith.constant 9 : index
    %c0_30 = arith.constant 0 : index
    %59 = vector.load %arg25[%c9, %c0_30] : memref<18x32xf32, #tpu.memory_space<vmem>>, vector<1x32xf32>
    tpu.vector_store %arg25[%c9, %c0_30], %53 {strides = array<i32>} : memref<18x32xf32, #tpu.memory_space<vmem>>, vector<1x32xf32>,
    %60 = vector.extract_strided_slice %49 {offsets = [8, 0], sizes = [8, 32], strides = [1, 1]} : vector<16x32xf32> to vector<8x32xf32>
    %61 = vector.extract_strided_slice %50 {offsets = [1, 0], sizes = [8, 32], strides = [1, 1]} : vector<9x32xf32> to vector<8x32xf32>
    %62 = arith.addf %60, %61 : vector<8x32xf32>
    %c10 = arith.constant 10 : index
    %c0_31 = arith.constant 0 : index
    %63 = vector.load %arg25[%c10, %c0_31] : memref<18x32xf32, #tpu.memory_space<vmem>>, vector<8x32xf32>
    tpu.vector_store %arg25[%c10, %c0_31], %62 {strides = array<i32>} : memref<18x32xf32, #tpu.memory_space<vmem>>, vector<8x32xf32>,
    %c0_32 = arith.constant 0 : index
    %c0_33 = arith.constant 0 : index
    %64 = vector.load %arg25[%c0_32, %c0_33] : memref<18x32xf32, #tpu.memory_space<vmem>>, vector<18x32xf32>
    %c0_34 = arith.constant 0 : index
    %c0_35 = arith.constant 0 : index
    %65 = vector.load %arg10[%c0_34, %c0_35] : memref<18x18xf32, #tpu.memory_space<vmem>>, vector<18x18xf32>
    %c0_36 = arith.constant 0 : index
    %c0_37 = arith.constant 0 : index
    %c0_38 = arith.constant 0 : index
    %66 = vector.load %arg11[%c0_36, %c0_37, %c0_38] : memref<2x1x32xf32, #tpu.memory_space<vmem>>, vector<1x1x32xf32>
    %67 = vector.shape_cast %66 : vector<1x1x32xf32> to vector<1x32xf32>
    %c0_39 = arith.constant 0 : index
    %c0_40 = arith.constant 0 : index
    %c0_41 = arith.constant 0 : index
    %68 = vector.load %arg12[%c0_39, %c0_40, %c0_41] : memref<2x1x32xf32, #tpu.memory_space<vmem>>, vector<1x1x32xf32>
    %69 = vector.shape_cast %68 : vector<1x1x32xf32> to vector<1x32xf32>
    %cst_42 = arith.constant dense<0.000000e+00> : vector<18xf32>
    %70 = vector.multi_reduction <add>, %64, %cst_42 [1] : vector<18x32xf32> to vector<18xf32>
    %71 = vector.shape_cast %70 : vector<18xf32> to vector<18x1xf32>
    %cst_43 = arith.constant 3.200000e+01 : f32
    %72 = vector.broadcast %cst_43 : f32 to vector<18x1xf32>
    %73 = arith.divf %71, %72 : vector<18x1xf32>
    %74 = vector.broadcast %73 : vector<18x1xf32> to vector<18x32xf32>
    %75 = arith.subf %64, %74 : vector<18x32xf32>
    %76 = arith.mulf %75, %75 : vector<18x32xf32>
    %cst_44 = arith.constant dense<0.000000e+00> : vector<18xf32>
    %77 = vector.multi_reduction <add>, %76, %cst_44 [1] : vector<18x32xf32> to vector<18xf32>
    %78 = vector.shape_cast %77 : vector<18xf32> to vector<18x1xf32>
    %cst_45 = arith.constant 3.200000e+01 : f32
    %79 = vector.broadcast %cst_45 : f32 to vector<18x1xf32>
    %80 = arith.divf %78, %79 : vector<18x1xf32>
    %cst_46 = arith.constant 9.99999974E-6 : f32
    %81 = vector.broadcast %cst_46 : f32 to vector<18x1xf32>
    %82 = arith.addf %80, %81 : vector<18x1xf32>
    %83 = math.rsqrt %82 : vector<18x1xf32>
    %84 = vector.broadcast %83 : vector<18x1xf32> to vector<18x32xf32>
    %85 = arith.mulf %75, %84 : vector<18x32xf32>
    %86 = vector.broadcast %67 : vector<1x32xf32> to vector<18x32xf32>
    %87 = arith.mulf %85, %86 : vector<18x32xf32>
    %88 = vector.broadcast %69 : vector<1x32xf32> to vector<18x32xf32>
    %89 = arith.addf %87, %88 : vector<18x32xf32>
    %c0_47 = arith.constant 0 : index
    %c0_48 = arith.constant 0 : index
    %c0_49 = arith.constant 0 : index
    %90 = vector.load %arg13[%c0_47, %c0_48, %c0_49] : memref<2x32x96xf32, #tpu.memory_space<vmem>>, vector<1x32x96xf32>
    %91 = vector.shape_cast %90 : vector<1x32x96xf32> to vector<32x96xf32>
    %cst_50 = arith.constant dense<0.000000e+00> : vector<18x96xf32>
    %92 = tpu.matmul %89, %91, %cst_50 {dimension_numbers = #tpu.dot_dimension_numbers<[1], [0], [0], [1], [0, 0, 1, 1], [], []>} : vector<18x32xf32>, vector<32x96xf32>, vector<18x96xf32> -> vector<18x96xf32>
    %93 = vector.extract_strided_slice %92 {offsets = [0, 0], sizes = [18, 8], strides = [1, 1]} : vector<18x96xf32> to vector<18x8xf32>
    %cst_51 = arith.constant 0.353553385 : f32
    %94 = vector.broadcast %cst_51 : f32 to vector<18x8xf32>
    %95 = arith.mulf %93, %94 : vector<18x8xf32>
    %96 = vector.extract_strided_slice %92 {offsets = [0, 32], sizes = [18, 8], strides = [1, 1]} : vector<18x96xf32> to vector<18x8xf32>
    %97 = vector.extract_strided_slice %92 {offsets = [0, 64], sizes = [18, 8], strides = [1, 1]} : vector<18x96xf32> to vector<18x8xf32>
    %cst_52 = arith.constant dense<0.000000e+00> : vector<18x18xf32>
    %98 = tpu.matmul %95, %96, %cst_52 {dimension_numbers = #tpu.dot_dimension_numbers<[1], [1], [0], [0], [0, 0, 1, 0], [], []>} : vector<18x8xf32>, vector<18x8xf32>, vector<18x18xf32> -> vector<18x18xf32>
    %99 = arith.addf %98, %65 : vector<18x18xf32>
    %cst_53 = arith.constant dense<0xFF800000> : vector<18xf32>
    %100 = vector.multi_reduction <maximumf>, %99, %cst_53 [1] : vector<18x18xf32> to vector<18xf32>
    %101 = vector.shape_cast %100 : vector<18xf32> to vector<18x1xf32>
    %102 = vector.broadcast %101 : vector<18x1xf32> to vector<18x18xf32>
    %103 = arith.subf %99, %102 : vector<18x18xf32>
    %104 = math.exp %103 : vector<18x18xf32>
    %cst_54 = arith.constant dense<0.000000e+00> : vector<18xf32>
    %105 = vector.multi_reduction <add>, %104, %cst_54 [1] : vector<18x18xf32> to vector<18xf32>
    %106 = vector.shape_cast %105 : vector<18xf32> to vector<18x1xf32>
    %107 = tpu.reciprocal %106 {approx = true} : vector<18x1xf32> -> vector<18x1xf32>
    %108 = vector.broadcast %107 : vector<18x1xf32> to vector<18x18xf32>
    %109 = arith.mulf %104, %108 : vector<18x18xf32>
    %cst_55 = arith.constant dense<0.000000e+00> : vector<18x8xf32>
    %110 = tpu.matmul %109, %97, %cst_55 {dimension_numbers = #tpu.dot_dimension_numbers<[1], [0], [0], [1], [0, 0, 1, 1], [], []>} : vector<18x18xf32>, vector<18x8xf32>, vector<18x8xf32> -> vector<18x8xf32>
    %111 = vector.extract_strided_slice %92 {offsets = [0, 8], sizes = [18, 8], strides = [1, 1]} : vector<18x96xf32> to vector<18x8xf32>
    %cst_56 = arith.constant 0.353553385 : f32
    %112 = vector.broadcast %cst_56 : f32 to vector<18x8xf32>
    %113 = arith.mulf %111, %112 : vector<18x8xf32>
    %114 = vector.extract_strided_slice %92 {offsets = [0, 40], sizes = [18, 8], strides = [1, 1]} : vector<18x96xf32> to vector<18x8xf32>
    %115 = vector.extract_strided_slice %92 {offsets = [0, 72], sizes = [18, 8], strides = [1, 1]} : vector<18x96xf32> to vector<18x8xf32>
    %cst_57 = arith.constant dense<0.000000e+00> : vector<18x18xf32>
    %116 = tpu.matmul %113, %114, %cst_57 {dimension_numbers = #tpu.dot_dimension_numbers<[1], [1], [0], [0], [0, 0, 1, 0], [], []>} : vector<18x8xf32>, vector<18x8xf32>, vector<18x18xf32> -> vector<18x18xf32>
    %117 = arith.addf %116, %65 : vector<18x18xf32>
    %cst_58 = arith.constant dense<0xFF800000> : vector<18xf32>
    %118 = vector.multi_reduction <maximumf>, %117, %cst_58 [1] : vector<18x18xf32> to vector<18xf32>
    %119 = vector.shape_cast %118 : vector<18xf32> to vector<18x1xf32>
    %120 = vector.broadcast %119 : vector<18x1xf32> to vector<18x18xf32>
    %121 = arith.subf %117, %120 : vector<18x18xf32>
    %122 = math.exp %121 : vector<18x18xf32>
    %cst_59 = arith.constant dense<0.000000e+00> : vector<18xf32>
    %123 = vector.multi_reduction <add>, %122, %cst_59 [1] : vector<18x18xf32> to vector<18xf32>
    %124 = vector.shape_cast %123 : vector<18xf32> to vector<18x1xf32>
    %125 = tpu.reciprocal %124 {approx = true} : vector<18x1xf32> -> vector<18x1xf32>
    %126 = vector.broadcast %125 : vector<18x1xf32> to vector<18x18xf32>
    %127 = arith.mulf %122, %126 : vector<18x18xf32>
    %cst_60 = arith.constant dense<0.000000e+00> : vector<18x8xf32>
    %128 = tpu.matmul %127, %115, %cst_60 {dimension_numbers = #tpu.dot_dimension_numbers<[1], [0], [0], [1], [0, 0, 1, 1], [], []>} : vector<18x18xf32>, vector<18x8xf32>, vector<18x8xf32> -> vector<18x8xf32>
    %129 = vector.extract_strided_slice %92 {offsets = [0, 16], sizes = [18, 8], strides = [1, 1]} : vector<18x96xf32> to vector<18x8xf32>
    %cst_61 = arith.constant 0.353553385 : f32
    %130 = vector.broadcast %cst_61 : f32 to vector<18x8xf32>
    %131 = arith.mulf %129, %130 : vector<18x8xf32>
    %132 = vector.extract_strided_slice %92 {offsets = [0, 48], sizes = [18, 8], strides = [1, 1]} : vector<18x96xf32> to vector<18x8xf32>
    %133 = vector.extract_strided_slice %92 {offsets = [0, 80], sizes = [18, 8], strides = [1, 1]} : vector<18x96xf32> to vector<18x8xf32>
    %cst_62 = arith.constant dense<0.000000e+00> : vector<18x18xf32>
    %134 = tpu.matmul %131, %132, %cst_62 {dimension_numbers = #tpu.dot_dimension_numbers<[1], [1], [0], [0], [0, 0, 1, 0], [], []>} : vector<18x8xf32>, vector<18x8xf32>, vector<18x18xf32> -> vector<18x18xf32>
    %135 = arith.addf %134, %65 : vector<18x18xf32>
    %cst_63 = arith.constant dense<0xFF800000> : vector<18xf32>
    %136 = vector.multi_reduction <maximumf>, %135, %cst_63 [1] : vector<18x18xf32> to vector<18xf32>
    %137 = vector.shape_cast %136 : vector<18xf32> to vector<18x1xf32>
    %138 = vector.broadcast %137 : vector<18x1xf32> to vector<18x18xf32>
    %139 = arith.subf %135, %138 : vector<18x18xf32>
    %140 = math.exp %139 : vector<18x18xf32>
    %cst_64 = arith.constant dense<0.000000e+00> : vector<18xf32>
    %141 = vector.multi_reduction <add>, %140, %cst_64 [1] : vector<18x18xf32> to vector<18xf32>
    %142 = vector.shape_cast %141 : vector<18xf32> to vector<18x1xf32>
    %143 = tpu.reciprocal %142 {approx = true} : vector<18x1xf32> -> vector<18x1xf32>
    %144 = vector.broadcast %143 : vector<18x1xf32> to vector<18x18xf32>
    %145 = arith.mulf %140, %144 : vector<18x18xf32>
    %cst_65 = arith.constant dense<0.000000e+00> : vector<18x8xf32>
    %146 = tpu.matmul %145, %133, %cst_65 {dimension_numbers = #tpu.dot_dimension_numbers<[1], [0], [0], [1], [0, 0, 1, 1], [], []>} : vector<18x18xf32>, vector<18x8xf32>, vector<18x8xf32> -> vector<18x8xf32>
    %147 = vector.extract_strided_slice %92 {offsets = [0, 24], sizes = [18, 8], strides = [1, 1]} : vector<18x96xf32> to vector<18x8xf32>
    %cst_66 = arith.constant 0.353553385 : f32
    %148 = vector.broadcast %cst_66 : f32 to vector<18x8xf32>
    %149 = arith.mulf %147, %148 : vector<18x8xf32>
    %150 = vector.extract_strided_slice %92 {offsets = [0, 56], sizes = [18, 8], strides = [1, 1]} : vector<18x96xf32> to vector<18x8xf32>
    %151 = vector.extract_strided_slice %92 {offsets = [0, 88], sizes = [18, 8], strides = [1, 1]} : vector<18x96xf32> to vector<18x8xf32>
    %cst_67 = arith.constant dense<0.000000e+00> : vector<18x18xf32>
    %152 = tpu.matmul %149, %150, %cst_67 {dimension_numbers = #tpu.dot_dimension_numbers<[1], [1], [0], [0], [0, 0, 1, 0], [], []>} : vector<18x8xf32>, vector<18x8xf32>, vector<18x18xf32> -> vector<18x18xf32>
    %153 = arith.addf %152, %65 : vector<18x18xf32>
    %cst_68 = arith.constant dense<0xFF800000> : vector<18xf32>
    %154 = vector.multi_reduction <maximumf>, %153, %cst_68 [1] : vector<18x18xf32> to vector<18xf32>
    %155 = vector.shape_cast %154 : vector<18xf32> to vector<18x1xf32>
    %156 = vector.broadcast %155 : vector<18x1xf32> to vector<18x18xf32>
    %157 = arith.subf %153, %156 : vector<18x18xf32>
    %158 = math.exp %157 : vector<18x18xf32>
    %cst_69 = arith.constant dense<0.000000e+00> : vector<18xf32>
    %159 = vector.multi_reduction <add>, %158, %cst_69 [1] : vector<18x18xf32> to vector<18xf32>
    %160 = vector.shape_cast %159 : vector<18xf32> to vector<18x1xf32>
    %161 = tpu.reciprocal %160 {approx = true} : vector<18x1xf32> -> vector<18x1xf32>
    %162 = vector.broadcast %161 : vector<18x1xf32> to vector<18x18xf32>
    %163 = arith.mulf %158, %162 : vector<18x18xf32>
    %cst_70 = arith.constant dense<0.000000e+00> : vector<18x8xf32>
    %164 = tpu.matmul %163, %151, %cst_70 {dimension_numbers = #tpu.dot_dimension_numbers<[1], [0], [0], [1], [0, 0, 1, 1], [], []>} : vector<18x18xf32>, vector<18x8xf32>, vector<18x8xf32> -> vector<18x8xf32>
    %165 = tpu.concatenate %110, %128, %146, %164 in 1 : vector<18x8xf32>, vector<18x8xf32>, vector<18x8xf32>, vector<18x8xf32> -> vector<18x32xf32>
    %c0_71 = arith.constant 0 : index
    %c0_72 = arith.constant 0 : index
    %c0_73 = arith.constant 0 : index
    %166 = vector.load %arg14[%c0_71, %c0_72, %c0_73] : memref<2x32x32xf32, #tpu.memory_space<vmem>>, vector<1x32x32xf32>
    %167 = vector.shape_cast %166 : vector<1x32x32xf32> to vector<32x32xf32>
    %cst_74 = arith.constant dense<0.000000e+00> : vector<18x32xf32>
    %168 = tpu.matmul %165, %167, %cst_74 {dimension_numbers = #tpu.dot_dimension_numbers<[1], [0], [0], [1], [0, 0, 1, 1], [], []>} : vector<18x32xf32>, vector<32x32xf32>, vector<18x32xf32> -> vector<18x32xf32>
    %169 = arith.addf %64, %168 : vector<18x32xf32>
    %c0_75 = arith.constant 0 : index
    %c0_76 = arith.constant 0 : index
    %c0_77 = arith.constant 0 : index
    %170 = vector.load %arg15[%c0_75, %c0_76, %c0_77] : memref<2x1x32xf32, #tpu.memory_space<vmem>>, vector<1x1x32xf32>
    %171 = vector.shape_cast %170 : vector<1x1x32xf32> to vector<1x32xf32>
    %172 = vector.broadcast %171 : vector<1x32xf32> to vector<18x32xf32>
    %173 = arith.addf %169, %172 : vector<18x32xf32>
    %c0_78 = arith.constant 0 : index
    %c0_79 = arith.constant 0 : index
    %c0_80 = arith.constant 0 : index
    %174 = vector.load %arg16[%c0_78, %c0_79, %c0_80] : memref<2x1x32xf32, #tpu.memory_space<vmem>>, vector<1x1x32xf32>
    %175 = vector.shape_cast %174 : vector<1x1x32xf32> to vector<1x32xf32>
    %c0_81 = arith.constant 0 : index
    %c0_82 = arith.constant 0 : index
    %c0_83 = arith.constant 0 : index
    %176 = vector.load %arg17[%c0_81, %c0_82, %c0_83] : memref<2x1x32xf32, #tpu.memory_space<vmem>>, vector<1x1x32xf32>
    %177 = vector.shape_cast %176 : vector<1x1x32xf32> to vector<1x32xf32>
    %cst_84 = arith.constant dense<0.000000e+00> : vector<18xf32>
    %178 = vector.multi_reduction <add>, %173, %cst_84 [1] : vector<18x32xf32> to vector<18xf32>
    %179 = vector.shape_cast %178 : vector<18xf32> to vector<18x1xf32>
    %cst_85 = arith.constant 3.200000e+01 : f32
    %180 = vector.broadcast %cst_85 : f32 to vector<18x1xf32>
    %181 = arith.divf %179, %180 : vector<18x1xf32>
    %182 = vector.broadcast %181 : vector<18x1xf32> to vector<18x32xf32>
    %183 = arith.subf %173, %182 : vector<18x32xf32>
    %184 = arith.mulf %183, %183 : vector<18x32xf32>
    %cst_86 = arith.constant dense<0.000000e+00> : vector<18xf32>
    %185 = vector.multi_reduction <add>, %184, %cst_86 [1] : vector<18x32xf32> to vector<18xf32>
    %186 = vector.shape_cast %185 : vector<18xf32> to vector<18x1xf32>
    %cst_87 = arith.constant 3.200000e+01 : f32
    %187 = vector.broadcast %cst_87 : f32 to vector<18x1xf32>
    %188 = arith.divf %186, %187 : vector<18x1xf32>
    %cst_88 = arith.constant 9.99999974E-6 : f32
    %189 = vector.broadcast %cst_88 : f32 to vector<18x1xf32>
    %190 = arith.addf %188, %189 : vector<18x1xf32>
    %191 = math.rsqrt %190 : vector<18x1xf32>
    %192 = vector.broadcast %191 : vector<18x1xf32> to vector<18x32xf32>
    %193 = arith.mulf %183, %192 : vector<18x32xf32>
    %194 = vector.broadcast %175 : vector<1x32xf32> to vector<18x32xf32>
    %195 = arith.mulf %193, %194 : vector<18x32xf32>
    %196 = vector.broadcast %177 : vector<1x32xf32> to vector<18x32xf32>
    %197 = arith.addf %195, %196 : vector<18x32xf32>
    %c0_89 = arith.constant 0 : index
    %c0_90 = arith.constant 0 : index
    %c0_91 = arith.constant 0 : index
    %198 = vector.load %arg18[%c0_89, %c0_90, %c0_91] : memref<2x32x64xf32, #tpu.memory_space<vmem>>, vector<1x32x64xf32>
    %199 = vector.shape_cast %198 : vector<1x32x64xf32> to vector<32x64xf32>
    %cst_92 = arith.constant dense<0.000000e+00> : vector<18x64xf32>
    %200 = tpu.matmul %197, %199, %cst_92 {dimension_numbers = #tpu.dot_dimension_numbers<[1], [0], [0], [1], [0, 0, 1, 1], [], []>} : vector<18x32xf32>, vector<32x64xf32>, vector<18x64xf32> -> vector<18x64xf32>
    %c0_93 = arith.constant 0 : index
    %c0_94 = arith.constant 0 : index
    %c0_95 = arith.constant 0 : index
    %201 = vector.load %arg19[%c0_93, %c0_94, %c0_95] : memref<2x1x64xf32, #tpu.memory_space<vmem>>, vector<1x1x64xf32>
    %202 = vector.shape_cast %201 : vector<1x1x64xf32> to vector<1x64xf32>
    %203 = vector.broadcast %202 : vector<1x64xf32> to vector<18x64xf32>
    %204 = arith.addf %200, %203 : vector<18x64xf32>
    %cst_96 = arith.constant 5.000000e-01 : f32
    %205 = vector.broadcast %cst_96 : f32 to vector<18x64xf32>
    %206 = arith.mulf %205, %204 : vector<18x64xf32>
    %cst_97 = arith.constant 0.707106769 : f32
    %207 = vector.broadcast %cst_97 : f32 to vector<18x64xf32>
    %208 = arith.mulf %204, %207 : vector<18x64xf32>
    %cst_98 = arith.constant 0.000000e+00 : f32
    %209 = vector.broadcast %cst_98 : f32 to vector<18x64xf32>
    %210 = arith.cmpf oge, %208, %209 : vector<18x64xf32>
    %cst_99 = arith.constant 1.000000e+00 : f32
    %cst_100 = arith.constant -1.000000e+00 : f32
    %211 = vector.broadcast %cst_99 : f32 to vector<18x64xf32>
    %212 = vector.broadcast %cst_100 : f32 to vector<18x64xf32>
    %213 = arith.select %210, %211, %212 : vector<18x64xi1>, vector<18x64xf32>
    %214 = math.absf %208 : vector<18x64xf32>
    %cst_101 = arith.constant 0.327591091 : f32
    %215 = vector.broadcast %cst_101 : f32 to vector<18x64xf32>
    %216 = arith.mulf %215, %214 : vector<18x64xf32>
    %cst_102 = arith.constant 1.000000e+00 : f32
    %217 = vector.broadcast %cst_102 : f32 to vector<18x64xf32>
    %218 = arith.addf %217, %216 : vector<18x64xf32>
    %cst_103 = arith.constant 1.000000e+00 : f32
    %219 = vector.broadcast %cst_103 : f32 to vector<18x64xf32>
    %220 = arith.divf %219, %218 : vector<18x64xf32>
    %cst_104 = arith.constant 1.06140542 : f32
    %221 = vector.broadcast %cst_104 : f32 to vector<18x64xf32>
    %222 = arith.mulf %221, %220 : vector<18x64xf32>
    %cst_105 = arith.constant -1.45315206 : f32
    %223 = vector.broadcast %cst_105 : f32 to vector<18x64xf32>
    %224 = arith.addf %222, %223 : vector<18x64xf32>
    %225 = arith.mulf %224, %220 : vector<18x64xf32>
    %cst_106 = arith.constant 1.42141378 : f32
    %226 = vector.broadcast %cst_106 : f32 to vector<18x64xf32>
    %227 = arith.addf %225, %226 : vector<18x64xf32>
    %228 = arith.mulf %227, %220 : vector<18x64xf32>
    %cst_107 = arith.constant -0.284496725 : f32
    %229 = vector.broadcast %cst_107 : f32 to vector<18x64xf32>
    %230 = arith.addf %228, %229 : vector<18x64xf32>
    %231 = arith.mulf %230, %220 : vector<18x64xf32>
    %cst_108 = arith.constant 0.254829586 : f32
    %232 = vector.broadcast %cst_108 : f32 to vector<18x64xf32>
    %233 = arith.addf %231, %232 : vector<18x64xf32>
    %234 = arith.mulf %233, %220 : vector<18x64xf32>
    %cst_109 = arith.constant 0.000000e+00 : f32
    %235 = vector.broadcast %cst_109 : f32 to vector<18x64xf32>
    %236 = arith.subf %235, %214 : vector<18x64xf32>
    %237 = arith.mulf %236, %214 : vector<18x64xf32>
    %238 = math.exp %237 : vector<18x64xf32>
    %239 = arith.mulf %234, %238 : vector<18x64xf32>
    %cst_110 = arith.constant 1.000000e+00 : f32
    %240 = vector.broadcast %cst_110 : f32 to vector<18x64xf32>
    %241 = arith.subf %240, %239 : vector<18x64xf32>
    %242 = arith.mulf %213, %241 : vector<18x64xf32>
    %cst_111 = arith.constant 1.000000e+00 : f32
    %243 = vector.broadcast %cst_111 : f32 to vector<18x64xf32>
    %244 = arith.addf %243, %242 : vector<18x64xf32>
    %245 = arith.mulf %206, %244 : vector<18x64xf32>
    %c0_112 = arith.constant 0 : index
    %c0_113 = arith.constant 0 : index
    %c0_114 = arith.constant 0 : index
    %246 = vector.load %arg20[%c0_112, %c0_113, %c0_114] : memref<2x64x32xf32, #tpu.memory_space<vmem>>, vector<1x64x32xf32>
    %247 = vector.shape_cast %246 : vector<1x64x32xf32> to vector<64x32xf32>
    %cst_115 = arith.constant dense<0.000000e+00> : vector<18x32xf32>
    %248 = tpu.matmul %245, %247, %cst_115 {dimension_numbers = #tpu.dot_dimension_numbers<[1], [0], [0], [1], [0, 0, 1, 1], [], []>} : vector<18x64xf32>, vector<64x32xf32>, vector<18x32xf32> -> vector<18x32xf32>
    %249 = arith.addf %173, %248 : vector<18x32xf32>
    %c0_116 = arith.constant 0 : index
    %c0_117 = arith.constant 0 : index
    %c0_118 = arith.constant 0 : index
    %250 = vector.load %arg21[%c0_116, %c0_117, %c0_118] : memref<2x1x32xf32, #tpu.memory_space<vmem>>, vector<1x1x32xf32>
    %251 = vector.shape_cast %250 : vector<1x1x32xf32> to vector<1x32xf32>
    %252 = vector.broadcast %251 : vector<1x32xf32> to vector<18x32xf32>
    %253 = arith.addf %249, %252 : vector<18x32xf32>
    %c1_119 = arith.constant 1 : index
    %c0_120 = arith.constant 0 : index
    %c0_121 = arith.constant 0 : index
    %254 = vector.load %arg11[%c1_119, %c0_120, %c0_121] : memref<2x1x32xf32, #tpu.memory_space<vmem>>, vector<1x1x32xf32>
    %255 = vector.shape_cast %254 : vector<1x1x32xf32> to vector<1x32xf32>
    %c1_122 = arith.constant 1 : index
    %c0_123 = arith.constant 0 : index
    %c0_124 = arith.constant 0 : index
    %256 = vector.load %arg12[%c1_122, %c0_123, %c0_124] : memref<2x1x32xf32, #tpu.memory_space<vmem>>, vector<1x1x32xf32>
    %257 = vector.shape_cast %256 : vector<1x1x32xf32> to vector<1x32xf32>
    %cst_125 = arith.constant dense<0.000000e+00> : vector<18xf32>
    %258 = vector.multi_reduction <add>, %253, %cst_125 [1] : vector<18x32xf32> to vector<18xf32>
    %259 = vector.shape_cast %258 : vector<18xf32> to vector<18x1xf32>
    %cst_126 = arith.constant 3.200000e+01 : f32
    %260 = vector.broadcast %cst_126 : f32 to vector<18x1xf32>
    %261 = arith.divf %259, %260 : vector<18x1xf32>
    %262 = vector.broadcast %261 : vector<18x1xf32> to vector<18x32xf32>
    %263 = arith.subf %253, %262 : vector<18x32xf32>
    %264 = arith.mulf %263, %263 : vector<18x32xf32>
    %cst_127 = arith.constant dense<0.000000e+00> : vector<18xf32>
    %265 = vector.multi_reduction <add>, %264, %cst_127 [1] : vector<18x32xf32> to vector<18xf32>
    %266 = vector.shape_cast %265 : vector<18xf32> to vector<18x1xf32>
    %cst_128 = arith.constant 3.200000e+01 : f32
    %267 = vector.broadcast %cst_128 : f32 to vector<18x1xf32>
    %268 = arith.divf %266, %267 : vector<18x1xf32>
    %cst_129 = arith.constant 9.99999974E-6 : f32
    %269 = vector.broadcast %cst_129 : f32 to vector<18x1xf32>
    %270 = arith.addf %268, %269 : vector<18x1xf32>
    %271 = math.rsqrt %270 : vector<18x1xf32>
    %272 = vector.broadcast %271 : vector<18x1xf32> to vector<18x32xf32>
    %273 = arith.mulf %263, %272 : vector<18x32xf32>
    %274 = vector.broadcast %255 : vector<1x32xf32> to vector<18x32xf32>
    %275 = arith.mulf %273, %274 : vector<18x32xf32>
    %276 = vector.broadcast %257 : vector<1x32xf32> to vector<18x32xf32>
    %277 = arith.addf %275, %276 : vector<18x32xf32>
    %c1_130 = arith.constant 1 : index
    %c0_131 = arith.constant 0 : index
    %c0_132 = arith.constant 0 : index
    %278 = vector.load %arg13[%c1_130, %c0_131, %c0_132] : memref<2x32x96xf32, #tpu.memory_space<vmem>>, vector<1x32x96xf32>
    %279 = vector.shape_cast %278 : vector<1x32x96xf32> to vector<32x96xf32>
    %cst_133 = arith.constant dense<0.000000e+00> : vector<18x96xf32>
    %280 = tpu.matmul %277, %279, %cst_133 {dimension_numbers = #tpu.dot_dimension_numbers<[1], [0], [0], [1], [0, 0, 1, 1], [], []>} : vector<18x32xf32>, vector<32x96xf32>, vector<18x96xf32> -> vector<18x96xf32>
    %281 = vector.extract_strided_slice %280 {offsets = [0, 0], sizes = [18, 8], strides = [1, 1]} : vector<18x96xf32> to vector<18x8xf32>
    %cst_134 = arith.constant 0.353553385 : f32
    %282 = vector.broadcast %cst_134 : f32 to vector<18x8xf32>
    %283 = arith.mulf %281, %282 : vector<18x8xf32>
    %284 = vector.extract_strided_slice %280 {offsets = [0, 32], sizes = [18, 8], strides = [1, 1]} : vector<18x96xf32> to vector<18x8xf32>
    %285 = vector.extract_strided_slice %280 {offsets = [0, 64], sizes = [18, 8], strides = [1, 1]} : vector<18x96xf32> to vector<18x8xf32>
    %cst_135 = arith.constant dense<0.000000e+00> : vector<18x18xf32>
    %286 = tpu.matmul %283, %284, %cst_135 {dimension_numbers = #tpu.dot_dimension_numbers<[1], [1], [0], [0], [0, 0, 1, 0], [], []>} : vector<18x8xf32>, vector<18x8xf32>, vector<18x18xf32> -> vector<18x18xf32>
    %287 = arith.addf %286, %65 : vector<18x18xf32>
    %cst_136 = arith.constant dense<0xFF800000> : vector<18xf32>
    %288 = vector.multi_reduction <maximumf>, %287, %cst_136 [1] : vector<18x18xf32> to vector<18xf32>
    %289 = vector.shape_cast %288 : vector<18xf32> to vector<18x1xf32>
    %290 = vector.broadcast %289 : vector<18x1xf32> to vector<18x18xf32>
    %291 = arith.subf %287, %290 : vector<18x18xf32>
    %292 = math.exp %291 : vector<18x18xf32>
    %cst_137 = arith.constant dense<0.000000e+00> : vector<18xf32>
    %293 = vector.multi_reduction <add>, %292, %cst_137 [1] : vector<18x18xf32> to vector<18xf32>
    %294 = vector.shape_cast %293 : vector<18xf32> to vector<18x1xf32>
    %295 = tpu.reciprocal %294 {approx = true} : vector<18x1xf32> -> vector<18x1xf32>
    %296 = vector.broadcast %295 : vector<18x1xf32> to vector<18x18xf32>
    %297 = arith.mulf %292, %296 : vector<18x18xf32>
    %cst_138 = arith.constant dense<0.000000e+00> : vector<18x8xf32>
    %298 = tpu.matmul %297, %285, %cst_138 {dimension_numbers = #tpu.dot_dimension_numbers<[1], [0], [0], [1], [0, 0, 1, 1], [], []>} : vector<18x18xf32>, vector<18x8xf32>, vector<18x8xf32> -> vector<18x8xf32>
    %299 = vector.extract_strided_slice %280 {offsets = [0, 8], sizes = [18, 8], strides = [1, 1]} : vector<18x96xf32> to vector<18x8xf32>
    %cst_139 = arith.constant 0.353553385 : f32
    %300 = vector.broadcast %cst_139 : f32 to vector<18x8xf32>
    %301 = arith.mulf %299, %300 : vector<18x8xf32>
    %302 = vector.extract_strided_slice %280 {offsets = [0, 40], sizes = [18, 8], strides = [1, 1]} : vector<18x96xf32> to vector<18x8xf32>
    %303 = vector.extract_strided_slice %280 {offsets = [0, 72], sizes = [18, 8], strides = [1, 1]} : vector<18x96xf32> to vector<18x8xf32>
    %cst_140 = arith.constant dense<0.000000e+00> : vector<18x18xf32>
    %304 = tpu.matmul %301, %302, %cst_140 {dimension_numbers = #tpu.dot_dimension_numbers<[1], [1], [0], [0], [0, 0, 1, 0], [], []>} : vector<18x8xf32>, vector<18x8xf32>, vector<18x18xf32> -> vector<18x18xf32>
    %305 = arith.addf %304, %65 : vector<18x18xf32>
    %cst_141 = arith.constant dense<0xFF800000> : vector<18xf32>
    %306 = vector.multi_reduction <maximumf>, %305, %cst_141 [1] : vector<18x18xf32> to vector<18xf32>
    %307 = vector.shape_cast %306 : vector<18xf32> to vector<18x1xf32>
    %308 = vector.broadcast %307 : vector<18x1xf32> to vector<18x18xf32>
    %309 = arith.subf %305, %308 : vector<18x18xf32>
    %310 = math.exp %309 : vector<18x18xf32>
    %cst_142 = arith.constant dense<0.000000e+00> : vector<18xf32>
    %311 = vector.multi_reduction <add>, %310, %cst_142 [1] : vector<18x18xf32> to vector<18xf32>
    %312 = vector.shape_cast %311 : vector<18xf32> to vector<18x1xf32>
    %313 = tpu.reciprocal %312 {approx = true} : vector<18x1xf32> -> vector<18x1xf32>
    %314 = vector.broadcast %313 : vector<18x1xf32> to vector<18x18xf32>
    %315 = arith.mulf %310, %314 : vector<18x18xf32>
    %cst_143 = arith.constant dense<0.000000e+00> : vector<18x8xf32>
    %316 = tpu.matmul %315, %303, %cst_143 {dimension_numbers = #tpu.dot_dimension_numbers<[1], [0], [0], [1], [0, 0, 1, 1], [], []>} : vector<18x18xf32>, vector<18x8xf32>, vector<18x8xf32> -> vector<18x8xf32>
    %317 = vector.extract_strided_slice %280 {offsets = [0, 16], sizes = [18, 8], strides = [1, 1]} : vector<18x96xf32> to vector<18x8xf32>
    %cst_144 = arith.constant 0.353553385 : f32
    %318 = vector.broadcast %cst_144 : f32 to vector<18x8xf32>
    %319 = arith.mulf %317, %318 : vector<18x8xf32>
    %320 = vector.extract_strided_slice %280 {offsets = [0, 48], sizes = [18, 8], strides = [1, 1]} : vector<18x96xf32> to vector<18x8xf32>
    %321 = vector.extract_strided_slice %280 {offsets = [0, 80], sizes = [18, 8], strides = [1, 1]} : vector<18x96xf32> to vector<18x8xf32>
    %cst_145 = arith.constant dense<0.000000e+00> : vector<18x18xf32>
    %322 = tpu.matmul %319, %320, %cst_145 {dimension_numbers = #tpu.dot_dimension_numbers<[1], [1], [0], [0], [0, 0, 1, 0], [], []>} : vector<18x8xf32>, vector<18x8xf32>, vector<18x18xf32> -> vector<18x18xf32>
    %323 = arith.addf %322, %65 : vector<18x18xf32>
    %cst_146 = arith.constant dense<0xFF800000> : vector<18xf32>
    %324 = vector.multi_reduction <maximumf>, %323, %cst_146 [1] : vector<18x18xf32> to vector<18xf32>
    %325 = vector.shape_cast %324 : vector<18xf32> to vector<18x1xf32>
    %326 = vector.broadcast %325 : vector<18x1xf32> to vector<18x18xf32>
    %327 = arith.subf %323, %326 : vector<18x18xf32>
    %328 = math.exp %327 : vector<18x18xf32>
    %cst_147 = arith.constant dense<0.000000e+00> : vector<18xf32>
    %329 = vector.multi_reduction <add>, %328, %cst_147 [1] : vector<18x18xf32> to vector<18xf32>
    %330 = vector.shape_cast %329 : vector<18xf32> to vector<18x1xf32>
    %331 = tpu.reciprocal %330 {approx = true} : vector<18x1xf32> -> vector<18x1xf32>
    %332 = vector.broadcast %331 : vector<18x1xf32> to vector<18x18xf32>
    %333 = arith.mulf %328, %332 : vector<18x18xf32>
    %cst_148 = arith.constant dense<0.000000e+00> : vector<18x8xf32>
    %334 = tpu.matmul %333, %321, %cst_148 {dimension_numbers = #tpu.dot_dimension_numbers<[1], [0], [0], [1], [0, 0, 1, 1], [], []>} : vector<18x18xf32>, vector<18x8xf32>, vector<18x8xf32> -> vector<18x8xf32>
    %335 = vector.extract_strided_slice %280 {offsets = [0, 24], sizes = [18, 8], strides = [1, 1]} : vector<18x96xf32> to vector<18x8xf32>
    %cst_149 = arith.constant 0.353553385 : f32
    %336 = vector.broadcast %cst_149 : f32 to vector<18x8xf32>
    %337 = arith.mulf %335, %336 : vector<18x8xf32>
    %338 = vector.extract_strided_slice %280 {offsets = [0, 56], sizes = [18, 8], strides = [1, 1]} : vector<18x96xf32> to vector<18x8xf32>
    %339 = vector.extract_strided_slice %280 {offsets = [0, 88], sizes = [18, 8], strides = [1, 1]} : vector<18x96xf32> to vector<18x8xf32>
    %cst_150 = arith.constant dense<0.000000e+00> : vector<18x18xf32>
    %340 = tpu.matmul %337, %338, %cst_150 {dimension_numbers = #tpu.dot_dimension_numbers<[1], [1], [0], [0], [0, 0, 1, 0], [], []>} : vector<18x8xf32>, vector<18x8xf32>, vector<18x18xf32> -> vector<18x18xf32>
    %341 = arith.addf %340, %65 : vector<18x18xf32>
    %cst_151 = arith.constant dense<0xFF800000> : vector<18xf32>
    %342 = vector.multi_reduction <maximumf>, %341, %cst_151 [1] : vector<18x18xf32> to vector<18xf32>
    %343 = vector.shape_cast %342 : vector<18xf32> to vector<18x1xf32>
    %344 = vector.broadcast %343 : vector<18x1xf32> to vector<18x18xf32>
    %345 = arith.subf %341, %344 : vector<18x18xf32>
    %346 = math.exp %345 : vector<18x18xf32>
    %cst_152 = arith.constant dense<0.000000e+00> : vector<18xf32>
    %347 = vector.multi_reduction <add>, %346, %cst_152 [1] : vector<18x18xf32> to vector<18xf32>
    %348 = vector.shape_cast %347 : vector<18xf32> to vector<18x1xf32>
    %349 = tpu.reciprocal %348 {approx = true} : vector<18x1xf32> -> vector<18x1xf32>
    %350 = vector.broadcast %349 : vector<18x1xf32> to vector<18x18xf32>
    %351 = arith.mulf %346, %350 : vector<18x18xf32>
    %cst_153 = arith.constant dense<0.000000e+00> : vector<18x8xf32>
    %352 = tpu.matmul %351, %339, %cst_153 {dimension_numbers = #tpu.dot_dimension_numbers<[1], [0], [0], [1], [0, 0, 1, 1], [], []>} : vector<18x18xf32>, vector<18x8xf32>, vector<18x8xf32> -> vector<18x8xf32>
    %353 = tpu.concatenate %298, %316, %334, %352 in 1 : vector<18x8xf32>, vector<18x8xf32>, vector<18x8xf32>, vector<18x8xf32> -> vector<18x32xf32>
    %c1_154 = arith.constant 1 : index
    %c0_155 = arith.constant 0 : index
    %c0_156 = arith.constant 0 : index
    %354 = vector.load %arg14[%c1_154, %c0_155, %c0_156] : memref<2x32x32xf32, #tpu.memory_space<vmem>>, vector<1x32x32xf32>
    %355 = vector.shape_cast %354 : vector<1x32x32xf32> to vector<32x32xf32>
    %cst_157 = arith.constant dense<0.000000e+00> : vector<18x32xf32>
    %356 = tpu.matmul %353, %355, %cst_157 {dimension_numbers = #tpu.dot_dimension_numbers<[1], [0], [0], [1], [0, 0, 1, 1], [], []>} : vector<18x32xf32>, vector<32x32xf32>, vector<18x32xf32> -> vector<18x32xf32>
    %357 = arith.addf %253, %356 : vector<18x32xf32>
    %c1_158 = arith.constant 1 : index
    %c0_159 = arith.constant 0 : index
    %c0_160 = arith.constant 0 : index
    %358 = vector.load %arg15[%c1_158, %c0_159, %c0_160] : memref<2x1x32xf32, #tpu.memory_space<vmem>>, vector<1x1x32xf32>
    %359 = vector.shape_cast %358 : vector<1x1x32xf32> to vector<1x32xf32>
    %360 = vector.broadcast %359 : vector<1x32xf32> to vector<18x32xf32>
    %361 = arith.addf %357, %360 : vector<18x32xf32>
    %c1_161 = arith.constant 1 : index
    %c0_162 = arith.constant 0 : index
    %c0_163 = arith.constant 0 : index
    %362 = vector.load %arg16[%c1_161, %c0_162, %c0_163] : memref<2x1x32xf32, #tpu.memory_space<vmem>>, vector<1x1x32xf32>
    %363 = vector.shape_cast %362 : vector<1x1x32xf32> to vector<1x32xf32>
    %c1_164 = arith.constant 1 : index
    %c0_165 = arith.constant 0 : index
    %c0_166 = arith.constant 0 : index
    %364 = vector.load %arg17[%c1_164, %c0_165, %c0_166] : memref<2x1x32xf32, #tpu.memory_space<vmem>>, vector<1x1x32xf32>
    %365 = vector.shape_cast %364 : vector<1x1x32xf32> to vector<1x32xf32>
    %cst_167 = arith.constant dense<0.000000e+00> : vector<18xf32>
    %366 = vector.multi_reduction <add>, %361, %cst_167 [1] : vector<18x32xf32> to vector<18xf32>
    %367 = vector.shape_cast %366 : vector<18xf32> to vector<18x1xf32>
    %cst_168 = arith.constant 3.200000e+01 : f32
    %368 = vector.broadcast %cst_168 : f32 to vector<18x1xf32>
    %369 = arith.divf %367, %368 : vector<18x1xf32>
    %370 = vector.broadcast %369 : vector<18x1xf32> to vector<18x32xf32>
    %371 = arith.subf %361, %370 : vector<18x32xf32>
    %372 = arith.mulf %371, %371 : vector<18x32xf32>
    %cst_169 = arith.constant dense<0.000000e+00> : vector<18xf32>
    %373 = vector.multi_reduction <add>, %372, %cst_169 [1] : vector<18x32xf32> to vector<18xf32>
    %374 = vector.shape_cast %373 : vector<18xf32> to vector<18x1xf32>
    %cst_170 = arith.constant 3.200000e+01 : f32
    %375 = vector.broadcast %cst_170 : f32 to vector<18x1xf32>
    %376 = arith.divf %374, %375 : vector<18x1xf32>
    %cst_171 = arith.constant 9.99999974E-6 : f32
    %377 = vector.broadcast %cst_171 : f32 to vector<18x1xf32>
    %378 = arith.addf %376, %377 : vector<18x1xf32>
    %379 = math.rsqrt %378 : vector<18x1xf32>
    %380 = vector.broadcast %379 : vector<18x1xf32> to vector<18x32xf32>
    %381 = arith.mulf %371, %380 : vector<18x32xf32>
    %382 = vector.broadcast %363 : vector<1x32xf32> to vector<18x32xf32>
    %383 = arith.mulf %381, %382 : vector<18x32xf32>
    %384 = vector.broadcast %365 : vector<1x32xf32> to vector<18x32xf32>
    %385 = arith.addf %383, %384 : vector<18x32xf32>
    %c1_172 = arith.constant 1 : index
    %c0_173 = arith.constant 0 : index
    %c0_174 = arith.constant 0 : index
    %386 = vector.load %arg18[%c1_172, %c0_173, %c0_174] : memref<2x32x64xf32, #tpu.memory_space<vmem>>, vector<1x32x64xf32>
    %387 = vector.shape_cast %386 : vector<1x32x64xf32> to vector<32x64xf32>
    %cst_175 = arith.constant dense<0.000000e+00> : vector<18x64xf32>
    %388 = tpu.matmul %385, %387, %cst_175 {dimension_numbers = #tpu.dot_dimension_numbers<[1], [0], [0], [1], [0, 0, 1, 1], [], []>} : vector<18x32xf32>, vector<32x64xf32>, vector<18x64xf32> -> vector<18x64xf32>
    %c1_176 = arith.constant 1 : index
    %c0_177 = arith.constant 0 : index
    %c0_178 = arith.constant 0 : index
    %389 = vector.load %arg19[%c1_176, %c0_177, %c0_178] : memref<2x1x64xf32, #tpu.memory_space<vmem>>, vector<1x1x64xf32>
    %390 = vector.shape_cast %389 : vector<1x1x64xf32> to vector<1x64xf32>
    %391 = vector.broadcast %390 : vector<1x64xf32> to vector<18x64xf32>
    %392 = arith.addf %388, %391 : vector<18x64xf32>
    %cst_179 = arith.constant 5.000000e-01 : f32
    %393 = vector.broadcast %cst_179 : f32 to vector<18x64xf32>
    %394 = arith.mulf %393, %392 : vector<18x64xf32>
    %cst_180 = arith.constant 0.707106769 : f32
    %395 = vector.broadcast %cst_180 : f32 to vector<18x64xf32>
    %396 = arith.mulf %392, %395 : vector<18x64xf32>
    %cst_181 = arith.constant 0.000000e+00 : f32
    %397 = vector.broadcast %cst_181 : f32 to vector<18x64xf32>
    %398 = arith.cmpf oge, %396, %397 : vector<18x64xf32>
    %cst_182 = arith.constant 1.000000e+00 : f32
    %cst_183 = arith.constant -1.000000e+00 : f32
    %399 = vector.broadcast %cst_182 : f32 to vector<18x64xf32>
    %400 = vector.broadcast %cst_183 : f32 to vector<18x64xf32>
    %401 = arith.select %398, %399, %400 : vector<18x64xi1>, vector<18x64xf32>
    %402 = math.absf %396 : vector<18x64xf32>
    %cst_184 = arith.constant 0.327591091 : f32
    %403 = vector.broadcast %cst_184 : f32 to vector<18x64xf32>
    %404 = arith.mulf %403, %402 : vector<18x64xf32>
    %cst_185 = arith.constant 1.000000e+00 : f32
    %405 = vector.broadcast %cst_185 : f32 to vector<18x64xf32>
    %406 = arith.addf %405, %404 : vector<18x64xf32>
    %cst_186 = arith.constant 1.000000e+00 : f32
    %407 = vector.broadcast %cst_186 : f32 to vector<18x64xf32>
    %408 = arith.divf %407, %406 : vector<18x64xf32>
    %cst_187 = arith.constant 1.06140542 : f32
    %409 = vector.broadcast %cst_187 : f32 to vector<18x64xf32>
    %410 = arith.mulf %409, %408 : vector<18x64xf32>
    %cst_188 = arith.constant -1.45315206 : f32
    %411 = vector.broadcast %cst_188 : f32 to vector<18x64xf32>
    %412 = arith.addf %410, %411 : vector<18x64xf32>
    %413 = arith.mulf %412, %408 : vector<18x64xf32>
    %cst_189 = arith.constant 1.42141378 : f32
    %414 = vector.broadcast %cst_189 : f32 to vector<18x64xf32>
    %415 = arith.addf %413, %414 : vector<18x64xf32>
    %416 = arith.mulf %415, %408 : vector<18x64xf32>
    %cst_190 = arith.constant -0.284496725 : f32
    %417 = vector.broadcast %cst_190 : f32 to vector<18x64xf32>
    %418 = arith.addf %416, %417 : vector<18x64xf32>
    %419 = arith.mulf %418, %408 : vector<18x64xf32>
    %cst_191 = arith.constant 0.254829586 : f32
    %420 = vector.broadcast %cst_191 : f32 to vector<18x64xf32>
    %421 = arith.addf %419, %420 : vector<18x64xf32>
    %422 = arith.mulf %421, %408 : vector<18x64xf32>
    %cst_192 = arith.constant 0.000000e+00 : f32
    %423 = vector.broadcast %cst_192 : f32 to vector<18x64xf32>
    %424 = arith.subf %423, %402 : vector<18x64xf32>
    %425 = arith.mulf %424, %402 : vector<18x64xf32>
    %426 = math.exp %425 : vector<18x64xf32>
    %427 = arith.mulf %422, %426 : vector<18x64xf32>
    %cst_193 = arith.constant 1.000000e+00 : f32
    %428 = vector.broadcast %cst_193 : f32 to vector<18x64xf32>
    %429 = arith.subf %428, %427 : vector<18x64xf32>
    %430 = arith.mulf %401, %429 : vector<18x64xf32>
    %cst_194 = arith.constant 1.000000e+00 : f32
    %431 = vector.broadcast %cst_194 : f32 to vector<18x64xf32>
    %432 = arith.addf %431, %430 : vector<18x64xf32>
    %433 = arith.mulf %394, %432 : vector<18x64xf32>
    %c1_195 = arith.constant 1 : index
    %c0_196 = arith.constant 0 : index
    %c0_197 = arith.constant 0 : index
    %434 = vector.load %arg20[%c1_195, %c0_196, %c0_197] : memref<2x64x32xf32, #tpu.memory_space<vmem>>, vector<1x64x32xf32>
    %435 = vector.shape_cast %434 : vector<1x64x32xf32> to vector<64x32xf32>
    %cst_198 = arith.constant dense<0.000000e+00> : vector<18x32xf32>
    %436 = tpu.matmul %433, %435, %cst_198 {dimension_numbers = #tpu.dot_dimension_numbers<[1], [0], [0], [1], [0, 0, 1, 1], [], []>} : vector<18x64xf32>, vector<64x32xf32>, vector<18x32xf32> -> vector<18x32xf32>
    %437 = arith.addf %361, %436 : vector<18x32xf32>
    %c1_199 = arith.constant 1 : index
    %c0_200 = arith.constant 0 : index
    %c0_201 = arith.constant 0 : index
    %438 = vector.load %arg21[%c1_199, %c0_200, %c0_201] : memref<2x1x32xf32, #tpu.memory_space<vmem>>, vector<1x1x32xf32>
    %439 = vector.shape_cast %438 : vector<1x1x32xf32> to vector<1x32xf32>
    %440 = vector.broadcast %439 : vector<1x32xf32> to vector<18x32xf32>
    %441 = arith.addf %437, %440 : vector<18x32xf32>
    %c0_202 = arith.constant 0 : index
    %c0_203 = arith.constant 0 : index
    %442 = vector.load %arg22[%c0_202, %c0_203] : memref<1x32xf32, #tpu.memory_space<vmem>>, vector<1x32xf32>
    %c0_204 = arith.constant 0 : index
    %c0_205 = arith.constant 0 : index
    %443 = vector.load %arg23[%c0_204, %c0_205] : memref<1x32xf32, #tpu.memory_space<vmem>>, vector<1x32xf32>
    %444 = vector.extract_strided_slice %441 {offsets = [0, 0], sizes = [1, 32], strides = [1, 1]} : vector<18x32xf32> to vector<1x32xf32>
    %445 = vector.extract_strided_slice %441 {offsets = [9, 0], sizes = [1, 32], strides = [1, 1]} : vector<18x32xf32> to vector<1x32xf32>
    %446 = tpu.concatenate %444, %445 in 0 : vector<1x32xf32>, vector<1x32xf32> -> vector<2x32xf32>
    %cst_206 = arith.constant dense<0.000000e+00> : vector<2xf32>
    %447 = vector.multi_reduction <add>, %446, %cst_206 [1] : vector<2x32xf32> to vector<2xf32>
    %448 = vector.shape_cast %447 : vector<2xf32> to vector<2x1xf32>
    %cst_207 = arith.constant 3.200000e+01 : f32
    %449 = vector.broadcast %cst_207 : f32 to vector<2x1xf32>
    %450 = arith.divf %448, %449 : vector<2x1xf32>
    %451 = vector.broadcast %450 : vector<2x1xf32> to vector<2x32xf32>
    %452 = arith.subf %446, %451 : vector<2x32xf32>
    %453 = arith.mulf %452, %452 : vector<2x32xf32>
    %cst_208 = arith.constant dense<0.000000e+00> : vector<2xf32>
    %454 = vector.multi_reduction <add>, %453, %cst_208 [1] : vector<2x32xf32> to vector<2xf32>
    %455 = vector.shape_cast %454 : vector<2xf32> to vector<2x1xf32>
    %cst_209 = arith.constant 3.200000e+01 : f32
    %456 = vector.broadcast %cst_209 : f32 to vector<2x1xf32>
    %457 = arith.divf %455, %456 : vector<2x1xf32>
    %cst_210 = arith.constant 9.99999974E-6 : f32
    %458 = vector.broadcast %cst_210 : f32 to vector<2x1xf32>
    %459 = arith.addf %457, %458 : vector<2x1xf32>
    %460 = math.rsqrt %459 : vector<2x1xf32>
    %461 = vector.broadcast %460 : vector<2x1xf32> to vector<2x32xf32>
    %462 = arith.mulf %452, %461 : vector<2x32xf32>
    %463 = vector.broadcast %442 : vector<1x32xf32> to vector<2x32xf32>
    %464 = arith.mulf %462, %463 : vector<2x32xf32>
    %465 = vector.broadcast %443 : vector<1x32xf32> to vector<2x32xf32>
    %466 = arith.addf %464, %465 : vector<2x32xf32>
    %c0_211 = arith.constant 0 : index
    %c0_212 = arith.constant 0 : index
    %467 = vector.load %arg24[%c0_211, %c0_212] : memref<2x32xf32, #tpu.memory_space<vmem>>, vector<2x32xf32>
    tpu.vector_store %arg24[%c0_211, %c0_212], %466 {strides = array<i32>} : memref<2x32xf32, #tpu.memory_space<vmem>>, vector<2x32xf32>,
    return
  }
  func.func @transform_0(%arg0: i32) -> (i32, i32) {
    %c0_i32 = arith.constant 0 : i32
    %c0_i32_0 = arith.constant 0 : i32
    return %arg0, %c0_i32 : i32, i32
  }
  func.func @transform_1(%arg0: i32) -> (i32, i32) {
    %c0_i32 = arith.constant 0 : i32
    %c0_i32_0 = arith.constant 0 : i32
    %c0_i32_1 = arith.constant 0 : i32
    return %c0_i32, %c0_i32_0 : i32, i32
  }
  func.func @transform_2(%arg0: i32) -> (i32, i32) {
    %c0_i32 = arith.constant 0 : i32
    %c0_i32_0 = arith.constant 0 : i32
    %c0_i32_1 = arith.constant 0 : i32
    return %c0_i32, %c0_i32_0 : i32, i32
  }
  func.func @transform_3(%arg0: i32) -> (i32, i32) {
    %c0_i32 = arith.constant 0 : i32
    %c0_i32_0 = arith.constant 0 : i32
    %c0_i32_1 = arith.constant 0 : i32
    return %c0_i32, %c0_i32_0 : i32, i32
  }
  func.func @transform_4(%arg0: i32) -> (i32, i32) {
    %c0_i32 = arith.constant 0 : i32
    %c0_i32_0 = arith.constant 0 : i32
    %c0_i32_1 = arith.constant 0 : i32
    return %c0_i32, %c0_i32_0 : i32, i32
  }
  func.func @transform_5(%arg0: i32) -> (i32, i32) {
    %c0_i32 = arith.constant 0 : i32
    %c0_i32_0 = arith.constant 0 : i32
    %c0_i32_1 = arith.constant 0 : i32
    return %c0_i32, %c0_i32_0 : i32, i32
  }
  func.func @transform_6(%arg0: i32) -> (i32, i32) {
    %c0_i32 = arith.constant 0 : i32
    %c0_i32_0 = arith.constant 0 : i32
    %c0_i32_1 = arith.constant 0 : i32
    return %c0_i32, %c0_i32_0 : i32, i32
  }
  func.func @transform_7(%arg0: i32) -> (i32, i32) {
    %c0_i32 = arith.constant 0 : i32
    %c0_i32_0 = arith.constant 0 : i32
    %c0_i32_1 = arith.constant 0 : i32
    return %c0_i32, %c0_i32_0 : i32, i32
  }
  func.func @transform_8(%arg0: i32) -> (i32, i32) {
    %c0_i32 = arith.constant 0 : i32
    %c0_i32_0 = arith.constant 0 : i32
    %c0_i32_1 = arith.constant 0 : i32
    return %c0_i32, %c0_i32_0 : i32, i32
  }
  func.func @transform_9(%arg0: i32) -> (i32, i32) {
    %c0_i32 = arith.constant 0 : i32
    %c0_i32_0 = arith.constant 0 : i32
    %c0_i32_1 = arith.constant 0 : i32
    return %c0_i32, %c0_i32_0 : i32, i32
  }
  func.func @transform_10(%arg0: i32) -> (i32, i32, i32) {
    %c0_i32 = arith.constant 0 : i32
    %c0_i32_0 = arith.constant 0 : i32
    %c0_i32_1 = arith.constant 0 : i32
    %c0_i32_2 = arith.constant 0 : i32
    return %c0_i32, %c0_i32_0, %c0_i32_1 : i32, i32, i32
  }
  func.func @transform_11(%arg0: i32) -> (i32, i32, i32) {
    %c0_i32 = arith.constant 0 : i32
    %c0_i32_0 = arith.constant 0 : i32
    %c0_i32_1 = arith.constant 0 : i32
    %c0_i32_2 = arith.constant 0 : i32
    return %c0_i32, %c0_i32_0, %c0_i32_1 : i32, i32, i32
  }
  func.func @transform_12(%arg0: i32) -> (i32, i32, i32) {
    %c0_i32 = arith.constant 0 : i32
    %c0_i32_0 = arith.constant 0 : i32
    %c0_i32_1 = arith.constant 0 : i32
    %c0_i32_2 = arith.constant 0 : i32
    return %c0_i32, %c0_i32_0, %c0_i32_1 : i32, i32, i32
  }
  func.func @transform_13(%arg0: i32) -> (i32, i32, i32) {
    %c0_i32 = arith.constant 0 : i32
    %c0_i32_0 = arith.constant 0 : i32
    %c0_i32_1 = arith.constant 0 : i32
    %c0_i32_2 = arith.constant 0 : i32
    return %c0_i32, %c0_i32_0, %c0_i32_1 : i32, i32, i32
  }
  func.func @transform_14(%arg0: i32) -> (i32, i32, i32) {
    %c0_i32 = arith.constant 0 : i32
    %c0_i32_0 = arith.constant 0 : i32
    %c0_i32_1 = arith.constant 0 : i32
    %c0_i32_2 = arith.constant 0 : i32
    return %c0_i32, %c0_i32_0, %c0_i32_1 : i32, i32, i32
  }
  func.func @transform_15(%arg0: i32) -> (i32, i32, i32) {
    %c0_i32 = arith.constant 0 : i32
    %c0_i32_0 = arith.constant 0 : i32
    %c0_i32_1 = arith.constant 0 : i32
    %c0_i32_2 = arith.constant 0 : i32
    return %c0_i32, %c0_i32_0, %c0_i32_1 : i32, i32, i32
  }
  func.func @transform_16(%arg0: i32) -> (i32, i32, i32) {
    %c0_i32 = arith.constant 0 : i32
    %c0_i32_0 = arith.constant 0 : i32
    %c0_i32_1 = arith.constant 0 : i32
    %c0_i32_2 = arith.constant 0 : i32
    return %c0_i32, %c0_i32_0, %c0_i32_1 : i32, i32, i32
  }
  func.func @transform_17(%arg0: i32) -> (i32, i32, i32) {
    %c0_i32 = arith.constant 0 : i32
    %c0_i32_0 = arith.constant 0 : i32
    %c0_i32_1 = arith.constant 0 : i32
    %c0_i32_2 = arith.constant 0 : i32
    return %c0_i32, %c0_i32_0, %c0_i32_1 : i32, i32, i32
  }
  func.func @transform_18(%arg0: i32) -> (i32, i32, i32) {
    %c0_i32 = arith.constant 0 : i32
    %c0_i32_0 = arith.constant 0 : i32
    %c0_i32_1 = arith.constant 0 : i32
    %c0_i32_2 = arith.constant 0 : i32
    return %c0_i32, %c0_i32_0, %c0_i32_1 : i32, i32, i32
  }
  func.func @transform_19(%arg0: i32) -> (i32, i32, i32) {
    %c0_i32 = arith.constant 0 : i32
    %c0_i32_0 = arith.constant 0 : i32
    %c0_i32_1 = arith.constant 0 : i32
    %c0_i32_2 = arith.constant 0 : i32
    return %c0_i32, %c0_i32_0, %c0_i32_1 : i32, i32, i32
  }
  func.func @transform_20(%arg0: i32) -> (i32, i32, i32) {
    %c0_i32 = arith.constant 0 : i32
    %c0_i32_0 = arith.constant 0 : i32
    %c0_i32_1 = arith.constant 0 : i32
    %c0_i32_2 = arith.constant 0 : i32
    return %c0_i32, %c0_i32_0, %c0_i32_1 : i32, i32, i32
  }
  func.func @transform_21(%arg0: i32) -> (i32, i32) {
    %c0_i32 = arith.constant 0 : i32
    %c0_i32_0 = arith.constant 0 : i32
    %c0_i32_1 = arith.constant 0 : i32
    return %c0_i32, %c0_i32_0 : i32, i32
  }
  func.func @transform_22(%arg0: i32) -> (i32, i32) {
    %c0_i32 = arith.constant 0 : i32
    %c0_i32_0 = arith.constant 0 : i32
    %c0_i32_1 = arith.constant 0 : i32
    return %c0_i32, %c0_i32_0 : i32, i32
  }
  func.func @transform_23(%arg0: i32) -> (i32, i32) {
    %c0_i32 = arith.constant 0 : i32
    %c0_i32_0 = arith.constant 0 : i32
    return %arg0, %c0_i32 : i32, i32
  }
}

</mosaic_0001>

<llo_original>
// kernel: tpu_custom_call.1
$region0: #{tpu_custom_call.1}
  #allocation0 [shape = 'u32[]', space=smem, size = 0x4, offset = 0x4, fixed_abs, tag = 'smem constant byte address 0x4 - core index']
  #allocation1 [shape = 'u32[144,128]{1,0:T(1,128)}', space=vmem, size = 0x12000, scoped, tag = 'internal scratch']
  #allocation2 [shape = 'f32[18,32]{1,0:T(8,128)}', space=vmem, size = 0x3000, scoped, tag = 'scratch operand']
  %s0 = inlined_call_operand.hbm [shape: f32[16,16], index: 0, kind: input, shape index: {}]
  %s1 = inlined_call_operand.vmem [shape: f32[1,16], index: 1, kind: input, shape index: {}]
  %s2 = inlined_call_operand.hbm [shape: f32[1,16], index: 2, kind: input, shape index: {}]
  %s3 = inlined_call_operand.hbm [shape: f32[16,32], index: 3, kind: input, shape index: {}]
  %s4 = inlined_call_operand.hbm [shape: f32[1,32], index: 4, kind: input, shape index: {}]
  %s5 = inlined_call_operand.hbm [shape: f32[1,32], index: 5, kind: input, shape index: {}]
  %s6 = inlined_call_operand.hbm [shape: f32[1,32], index: 6, kind: input, shape index: {}]
  %s7 = inlined_call_operand.hbm [shape: f32[1,32], index: 7, kind: input, shape index: {}]
  %s8 = inlined_call_operand.hbm [shape: f32[9,32], index: 8, kind: input, shape index: {}]
  %s9 = inlined_call_operand.hbm [shape: f32[18,18], index: 9, kind: input, shape index: {}]
  %s10 = inlined_call_operand.vmem [shape: f32[2,1,32], index: 10, kind: input, shape index: {}]
  %s11 = inlined_call_operand.vmem [shape: f32[2,1,32], index: 11, kind: input, shape index: {}]
  %s12 = inlined_call_operand.vmem [shape: f32[2,32,96], index: 12, kind: input, shape index: {}]
  %s13 = inlined_call_operand.vmem [shape: f32[2,32,32], index: 13, kind: input, shape index: {}]
  %s14 = inlined_call_operand.vmem [shape: f32[2,1,32], index: 14, kind: input, shape index: {}]
  %s15 = inlined_call_operand.hbm [shape: f32[2,1,32], index: 15, kind: input, shape index: {}]
  %s16 = inlined_call_operand.hbm [shape: f32[2,1,32], index: 16, kind: input, shape index: {}]
  %s17 = inlined_call_operand.vmem [shape: f32[2,32,64], index: 17, kind: input, shape index: {}]
  %s18 = inlined_call_operand.hbm [shape: f32[2,1,64], index: 18, kind: input, shape index: {}]
  %s19 = inlined_call_operand.vmem [shape: f32[2,64,32], index: 19, kind: input, shape index: {}]
  %s20 = inlined_call_operand.vmem [shape: f32[2,1,32], index: 20, kind: input, shape index: {}]
  %s21 = inlined_call_operand.vmem [shape: f32[1,32], index: 21, kind: input, shape index: {}]
  %s22 = inlined_call_operand.vmem [shape: f32[1,32], index: 22, kind: input, shape index: {}]
  %s23 = inlined_call_operand.hbm [shape: f32[2,32], index: 23, kind: output, shape index: {}]
  %s24 = sld [smem:[#allocation0]]
  $region150: #{tpu_custom_call.1} parent=0
    _
  %s26 = ssub.s32 1, %s24
  %s27 = scalar_select 0, %s26, %s24
  $region1: #{tpu_custom_call.1} parent=0
    #allocation3 [shape = 'u8[8192]{0}', space=vmem, size = 0x2000, scoped, tag = 'input window, operand 0, single buffered']
    #allocation4 [shape = 's32[1]{0}', space=sflag, size = 0x4, scoped, tag = 'scoped memory for tpu_custom_call.1']
    #allocation5 [shape = 's32[1]{0}', space=sflag, size = 0x4, scoped, tag = 'scoped memory for tpu_custom_call.1']
    #allocation6 [shape = 'u8[512]{0}', space=vmem, size = 0x400, scoped, tag = 'input window, operand 2, single buffered']
    #allocation7 [shape = 's32[1]{0}', space=sflag, size = 0x4, scoped, tag = 'scoped memory for tpu_custom_call.1']
    #allocation8 [shape = 'u8[8192]{0}', space=vmem, size = 0x2000, scoped, tag = 'input window, operand 3, single buffered']
    #allocation9 [shape = 'u8[512]{0}', space=vmem, size = 0x400, scoped, tag = 'input window, operand 4, single buffered']
    #allocation10 [shape = 's32[1]{0}', space=sflag, size = 0x4, scoped, tag = 'scoped memory for tpu_custom_call.1']
    #allocation11 [shape = 'u8[512]{0}', space=vmem, size = 0x400, scoped, tag = 'input window, operand 5, single buffered']
    #allocation12 [shape = 'u8[512]{0}', space=vmem, size = 0x400, scoped, tag = 'input window, operand 6, single buffered']
    #allocation13 [shape = 's32[1]{0}', space=sflag, size = 0x4, scoped, tag = 'scoped memory for tpu_custom_call.1']
    #allocation14 [shape = 'u8[512]{0}', space=vmem, size = 0x400, scoped, tag = 'input window, operand 7, single buffered']
    #allocation15 [shape = 'u8[8192]{0}', space=vmem, size = 0x2000, scoped, tag = 'input window, operand 8, single buffered']
    #allocation16 [shape = 's32[1]{0}', space=sflag, size = 0x4, scoped, tag = 'scoped memory for tpu_custom_call.1']
    #allocation17 [shape = 'u8[12288]{0}', space=vmem, size = 0x3000, scoped, tag = 'input window, operand 9, single buffered']
    #allocation18 [shape = 'u8[1024]{0}', space=vmem, size = 0x400, scoped, tag = 'input window, operand 15, single buffered']
    #allocation19 [shape = 's32[1]{0}', space=sflag, size = 0x4, scoped, tag = 'scoped memory for tpu_custom_call.1']
    #allocation20 [shape = 'u8[1024]{0}', space=vmem, size = 0x400, scoped, tag = 'input window, operand 16, single buffered']
    #allocation21 [shape = 'u8[1024]{0}', space=vmem, size = 0x400, scoped, tag = 'input window, operand 18, single buffered']
    #allocation22 [shape = 's32[1]{0}', space=sflag, size = 0x4, scoped, tag = 'scoped memory for tpu_custom_call.1']
    #allocation23 [shape = 'u8[1024]{0}', space=vmem, size = 0x400, scoped, tag = 'output window, operand 0, single buffered']
    %28 = vsyncpa [#allocation4], 0
    %29 = vsyncpa [#allocation7], 0
    %30 = vsyncpa [#allocation10], 0
    %31 = vsyncpa [#allocation13], 0
    %32 = vsyncpa [#allocation16], 0
    %33 = vsyncpa [#allocation19], 0
    %34 = vsyncpa [#allocation22], 0
    %35 = vsyncpa [#allocation5], 0
    // Predicated region
    $region2: #{tpu_custom_call.1} parent=1 // pred_check
      _
    $region3: #{tpu_custom_call.1} parent=1 // pred_check_branch
      %37 = sbr.rel (0) target = $region5
    $region4: #{tpu_custom_call.1} parent=1 // pred_region
      %s39 = ssub.s32 256, 256
      %40 = vsyncadd [#allocation4], %s39
      %s41 = sshll.u32 [#allocation3], 4
      %s42 = int_to_ptr.vmem [resolvable:$true] %s41
      %47 = dma.hbm_to_vmem [thread:$0]  %s0, 256, %s42, [#allocation4], 128, 128, 8
    $region5: #{tpu_custom_call.1} parent=1 // pred_fallthru
      _
    // Predicated region
    $region6: #{tpu_custom_call.1} parent=1 // pred_check
      _
    $region7: #{tpu_custom_call.1} parent=1 // pred_check_branch
      %49 = sbr.rel (0) target = $region9
    $region8: #{tpu_custom_call.1} parent=1 // pred_region
      _
    $region9: #{tpu_custom_call.1} parent=1 // pred_fallthru
      _
    // Predicated region
    $region10: #{tpu_custom_call.1} parent=1 // pred_check
      _
    $region11: #{tpu_custom_call.1} parent=1 // pred_check_branch
      %51 = sbr.rel (0) target = $region13
    $region12: #{tpu_custom_call.1} parent=1 // pred_region
      %s53 = ssub.s32 16, 16
      %54 = vsyncadd [#allocation7], %s53
      %s56 = sshll.u32 [#allocation6], 4
      %s57 = int_to_ptr.vmem [resolvable:$true] %s56
      %59 = dma.hbm_to_vmem [thread:$0]  %s2, 16, %s57, [#allocation7]
    $region13: #{tpu_custom_call.1} parent=1 // pred_fallthru
      _
    // Predicated region
    $region14: #{tpu_custom_call.1} parent=1 // pred_check
      _
    $region15: #{tpu_custom_call.1} parent=1 // pred_check_branch
      %61 = sbr.rel (0) target = $region17
    $region16: #{tpu_custom_call.1} parent=1 // pred_region
      %s63 = ssub.s32 256, 256
      %64 = vsyncadd [#allocation7], %s63
      %s65 = sshll.u32 [#allocation8], 4
      %s66 = int_to_ptr.vmem [resolvable:$true] %s65
      %71 = dma.hbm_to_vmem [thread:$0]  %s3, 256, %s66, [#allocation7], 128, 128, 8
    $region17: #{tpu_custom_call.1} parent=1 // pred_fallthru
      _
    // Predicated region
    $region18: #{tpu_custom_call.1} parent=1 // pred_check
      _
    $region19: #{tpu_custom_call.1} parent=1 // pred_check_branch
      %73 = sbr.rel (0) target = $region21
    $region20: #{tpu_custom_call.1} parent=1 // pred_region
      %s75 = ssub.s32 16, 16
      %76 = vsyncadd [#allocation10], %s75
      %s78 = sshll.u32 [#allocation9], 4
      %s79 = int_to_ptr.vmem [resolvable:$true] %s78
      %81 = dma.hbm_to_vmem [thread:$0]  %s4, 16, %s79, [#allocation10]
    $region21: #{tpu_custom_call.1} parent=1 // pred_fallthru
      _
    // Predicated region
    $region22: #{tpu_custom_call.1} parent=1 // pred_check
      _
    $region23: #{tpu_custom_call.1} parent=1 // pred_check_branch
      %83 = sbr.rel (0) target = $region25
    $region24: #{tpu_custom_call.1} parent=1 // pred_region
      %s85 = ssub.s32 16, 16
      %86 = vsyncadd [#allocation10], %s85
      %s88 = sshll.u32 [#allocation11], 4
      %s89 = int_to_ptr.vmem [resolvable:$true] %s88
      %91 = dma.hbm_to_vmem [thread:$0]  %s5, 16, %s89, [#allocation10]
    $region25: #{tpu_custom_call.1} parent=1 // pred_fallthru
      _
    // Predicated region
    $region26: #{tpu_custom_call.1} parent=1 // pred_check
      _
    $region27: #{tpu_custom_call.1} parent=1 // pred_check_branch
      %93 = sbr.rel (0) target = $region29
    $region28: #{tpu_custom_call.1} parent=1 // pred_region
      %s95 = ssub.s32 16, 16
      %96 = vsyncadd [#allocation13], %s95
      %s98 = sshll.u32 [#allocation12], 4
      %s99 = int_to_ptr.vmem [resolvable:$true] %s98
      %101 = dma.hbm_to_vmem [thread:$0]  %s6, 16, %s99, [#allocation13]
    $region29: #{tpu_custom_call.1} parent=1 // pred_fallthru
      _
    // Predicated region
    $region30: #{tpu_custom_call.1} parent=1 // pred_check
      _
    $region31: #{tpu_custom_call.1} parent=1 // pred_check_branch
      %103 = sbr.rel (0) target = $region33
    $region32: #{tpu_custom_call.1} parent=1 // pred_region
      %s105 = ssub.s32 16, 16
      %106 = vsyncadd [#allocation13], %s105
      %s108 = sshll.u32 [#allocation14], 4
      %s109 = int_to_ptr.vmem [resolvable:$true] %s108
      %111 = dma.hbm_to_vmem [thread:$0]  %s7, 16, %s109, [#allocation13]
    $region33: #{tpu_custom_call.1} parent=1 // pred_fallthru
      _
    // Predicated region
    $region34: #{tpu_custom_call.1} parent=1 // pred_check
      _
    $region35: #{tpu_custom_call.1} parent=1 // pred_check_branch
      %113 = sbr.rel (0) target = $region37
    $region36: #{tpu_custom_call.1} parent=1 // pred_region
      %s115 = ssub.s32 256, 256
      %116 = vsyncadd [#allocation16], %s115
      %s117 = sshll.u32 [#allocation15], 4
      %s118 = int_to_ptr.vmem [resolvable:$true] %s117
      %123 = dma.hbm_to_vmem [thread:$0]  %s8, 256, %s118, [#allocation16], 128, 128, 8
    $region37: #{tpu_custom_call.1} parent=1 // pred_fallthru
      _
    // Predicated region
    $region38: #{tpu_custom_call.1} parent=1 // pred_check
      _
    $region39: #{tpu_custom_call.1} parent=1 // pred_check_branch
      %125 = sbr.rel (0) target = $region41
    $region40: #{tpu_custom_call.1} parent=1 // pred_region
      %s127 = ssub.s32 384, 384
      %128 = vsyncadd [#allocation16], %s127
      %s129 = sshll.u32 [#allocation17], 4
      %s130 = int_to_ptr.vmem [resolvable:$true] %s129
      %135 = dma.hbm_to_vmem [thread:$0]  %s9, 384, %s130, [#allocation16], 128, 128, 8
    $region41: #{tpu_custom_call.1} parent=1 // pred_fallthru
      _
    // Predicated region
    $region42: #{tpu_custom_call.1} parent=1 // pred_check
      _
    $region43: #{tpu_custom_call.1} parent=1 // pred_check_branch
      %137 = sbr.rel (0) target = $region45
    $region44: #{tpu_custom_call.1} parent=1 // pred_region
      _
    $region45: #{tpu_custom_call.1} parent=1 // pred_fallthru
      _
    // Predicated region
    $region46: #{tpu_custom_call.1} parent=1 // pred_check
      _
    $region47: #{tpu_custom_call.1} parent=1 // pred_check_branch
      %139 = sbr.rel (0) target = $region49
    $region48: #{tpu_custom_call.1} parent=1 // pred_region
      _
    $region49: #{tpu_custom_call.1} parent=1 // pred_fallthru
      _
    // Predicated region
    $region50: #{tpu_custom_call.1} parent=1 // pred_check
      _
    $region51: #{tpu_custom_call.1} parent=1 // pred_check_branch
      %141 = sbr.rel (0) target = $region53
    $region52: #{tpu_custom_call.1} parent=1 // pred_region
      _
    $region53: #{tpu_custom_call.1} parent=1 // pred_fallthru
      _
    // Predicated region
    $region54: #{tpu_custom_call.1} parent=1 // pred_check
      _
    $region55: #{tpu_custom_call.1} parent=1 // pred_check_branch
      %143 = sbr.rel (0) target = $region57
    $region56: #{tpu_custom_call.1} parent=1 // pred_region
      _
    $region57: #{tpu_custom_call.1} parent=1 // pred_fallthru
      _
    // Predicated region
    $region58: #{tpu_custom_call.1} parent=1 // pred_check
      _
    $region59: #{tpu_custom_call.1} parent=1 // pred_check_branch
      %145 = sbr.rel (0) target = $region61
    $region60: #{tpu_custom_call.1} parent=1 // pred_region
      _
    $region61: #{tpu_custom_call.1} parent=1 // pred_fallthru
      _
    // Predicated region
    $region62: #{tpu_custom_call.1} parent=1 // pred_check
      _
    $region63: #{tpu_custom_call.1} parent=1 // pred_check_branch
      %147 = sbr.rel (0) target = $region65
    $region64: #{tpu_custom_call.1} parent=1 // pred_region
      %s149 = ssub.s32 32, 32
      %150 = vsyncadd [#allocation19], %s149
      %s151 = sshll.u32 [#allocation18], 4
      %s152 = int_to_ptr.vmem [resolvable:$true] %s151
      %157 = dma.hbm_to_vmem [thread:$0]  %s15, 32, %s152, [#allocation19], 16, 16, 1
    $region65: #{tpu_custom_call.1} parent=1 // pred_fallthru
      _
    // Predicated region
    $region66: #{tpu_custom_call.1} parent=1 // pred_check
      _
    $region67: #{tpu_custom_call.1} parent=1 // pred_check_branch
      %159 = sbr.rel (0) target = $region69
    $region68: #{tpu_custom_call.1} parent=1 // pred_region
      %s161 = ssub.s32 32, 32
      %162 = vsyncadd [#allocation19], %s161
      %s163 = sshll.u32 [#allocation20], 4
      %s164 = int_to_ptr.vmem [resolvable:$true] %s163
      %169 = dma.hbm_to_vmem [thread:$0]  %s16, 32, %s164, [#allocation19], 16, 16, 1
    $region69: #{tpu_custom_call.1} parent=1 // pred_fallthru
      _
    // Predicated region
    $region70: #{tpu_custom_call.1} parent=1 // pred_check
      _
    $region71: #{tpu_custom_call.1} parent=1 // pred_check_branch
      %171 = sbr.rel (0) target = $region73
    $region72: #{tpu_custom_call.1} parent=1 // pred_region
      _
    $region73: #{tpu_custom_call.1} parent=1 // pred_fallthru
      _
    // Predicated region
    $region74: #{tpu_custom_call.1} parent=1 // pred_check
      _
    $region75: #{tpu_custom_call.1} parent=1 // pred_check_branch
      %173 = sbr.rel (0) target = $region77
    $region76: #{tpu_custom_call.1} parent=1 // pred_region
      %s175 = ssub.s32 32, 32
      %176 = vsyncadd [#allocation22], %s175
      %s177 = sshll.u32 [#allocation21], 4
      %s178 = int_to_ptr.vmem [resolvable:$true] %s177
      %183 = dma.hbm_to_vmem [thread:$0]  %s18, 32, %s178, [#allocation22], 16, 16, 1
    $region77: #{tpu_custom_call.1} parent=1 // pred_fallthru
      _
    // Predicated region
    $region78: #{tpu_custom_call.1} parent=1 // pred_check
      _
    $region79: #{tpu_custom_call.1} parent=1 // pred_check_branch
      %185 = sbr.rel (0) target = $region81
    $region80: #{tpu_custom_call.1} parent=1 // pred_region
      _
    $region81: #{tpu_custom_call.1} parent=1 // pred_fallthru
      _
    // Predicated region
    $region82: #{tpu_custom_call.1} parent=1 // pred_check
      _
    $region83: #{tpu_custom_call.1} parent=1 // pred_check_branch
      %187 = sbr.rel (0) target = $region85
    $region84: #{tpu_custom_call.1} parent=1 // pred_region
      _
    $region85: #{tpu_custom_call.1} parent=1 // pred_fallthru
      _
    // Predicated region
    $region86: #{tpu_custom_call.1} parent=1 // pred_check
      _
    $region87: #{tpu_custom_call.1} parent=1 // pred_check_branch
      %189 = sbr.rel (0) target = $region89
    $region88: #{tpu_custom_call.1} parent=1 // pred_region
      _
    $region89: #{tpu_custom_call.1} parent=1 // pred_fallthru
      _
    // Predicated region
    $region90: #{tpu_custom_call.1} parent=1 // pred_check
      _
    $region91: #{tpu_custom_call.1} parent=1 // pred_check_branch
      %191 = sbr.rel (0) target = $region93
    $region92: #{tpu_custom_call.1} parent=1 // pred_region
      _
    $region93: #{tpu_custom_call.1} parent=1 // pred_fallthru
      _
    // Predicated region
    $region94: #{tpu_custom_call.1} parent=1 // pred_check
      _
    $region95: #{tpu_custom_call.1} parent=1 // pred_check_branch
      %193 = sbr.rel (0) target = $region97
    $region96: #{tpu_custom_call.1} parent=1 // pred_region
      %194 = dma.done [#allocation4], 256
    $region97: #{tpu_custom_call.1} parent=1 // pred_fallthru
      _
    // Predicated region
    $region98: #{tpu_custom_call.1} parent=1 // pred_check
      _
    $region99: #{tpu_custom_call.1} parent=1 // pred_check_branch
      %196 = sbr.rel (0) target = $region101
    $region100: #{tpu_custom_call.1} parent=1 // pred_region
      %197 = dma.done [#allocation7], 16
    $region101: #{tpu_custom_call.1} parent=1 // pred_fallthru
      _
    // Predicated region
    $region102: #{tpu_custom_call.1} parent=1 // pred_check
      _
    $region103: #{tpu_custom_call.1} parent=1 // pred_check_branch
      %199 = sbr.rel (0) target = $region105
    $region104: #{tpu_custom_call.1} parent=1 // pred_region
      %200 = dma.done [#allocation7], 256
    $region105: #{tpu_custom_call.1} parent=1 // pred_fallthru
      _
    // Predicated region
    $region106: #{tpu_custom_call.1} parent=1 // pred_check
      _
    $region107: #{tpu_custom_call.1} parent=1 // pred_check_branch
      %202 = sbr.rel (0) target = $region109
    $region108: #{tpu_custom_call.1} parent=1 // pred_region
      %203 = dma.done [#allocation10], 16
    $region109: #{tpu_custom_call.1} parent=1 // pred_fallthru
      _
    // Predicated region
    $region110: #{tpu_custom_call.1} parent=1 // pred_check
      _
    $region111: #{tpu_custom_call.1} parent=1 // pred_check_branch
      %205 = sbr.rel (0) target = $region113
    $region112: #{tpu_custom_call.1} parent=1 // pred_region
      %206 = dma.done [#allocation10], 16
    $region113: #{tpu_custom_call.1} parent=1 // pred_fallthru
      _
    // Predicated region
    $region114: #{tpu_custom_call.1} parent=1 // pred_check
      _
    $region115: #{tpu_custom_call.1} parent=1 // pred_check_branch
      %208 = sbr.rel (0) target = $region117
    $region116: #{tpu_custom_call.1} parent=1 // pred_region
      %209 = dma.done [#allocation13], 16
    $region117: #{tpu_custom_call.1} parent=1 // pred_fallthru
      _
    // Predicated region
    $region118: #{tpu_custom_call.1} parent=1 // pred_check
      _
    $region119: #{tpu_custom_call.1} parent=1 // pred_check_branch
      %211 = sbr.rel (0) target = $region121
    $region120: #{tpu_custom_call.1} parent=1 // pred_region
      %212 = dma.done [#allocation13], 16
    $region121: #{tpu_custom_call.1} parent=1 // pred_fallthru
      _
    // Predicated region
    $region122: #{tpu_custom_call.1} parent=1 // pred_check
      _
    $region123: #{tpu_custom_call.1} parent=1 // pred_check_branch
      %214 = sbr.rel (0) target = $region125
    $region124: #{tpu_custom_call.1} parent=1 // pred_region
      %215 = dma.done [#allocation16], 256
    $region125: #{tpu_custom_call.1} parent=1 // pred_fallthru
      _
    // Predicated region
    $region126: #{tpu_custom_call.1} parent=1 // pred_check
      _
    $region127: #{tpu_custom_call.1} parent=1 // pred_check_branch
      %217 = sbr.rel (0) target = $region129
    $region128: #{tpu_custom_call.1} parent=1 // pred_region
      %218 = dma.done [#allocation16], 384
    $region129: #{tpu_custom_call.1} parent=1 // pred_fallthru
      _
    // Predicated region
    $region130: #{tpu_custom_call.1} parent=1 // pred_check
      _
    $region131: #{tpu_custom_call.1} parent=1 // pred_check_branch
      %220 = sbr.rel (0) target = $region133
    $region132: #{tpu_custom_call.1} parent=1 // pred_region
      %221 = dma.done [#allocation19], 32
    $region133: #{tpu_custom_call.1} parent=1 // pred_fallthru
      _
    // Predicated region
    $region134: #{tpu_custom_call.1} parent=1 // pred_check
      _
    $region135: #{tpu_custom_call.1} parent=1 // pred_check_branch
      %223 = sbr.rel (0) target = $region137
    $region136: #{tpu_custom_call.1} parent=1 // pred_region
      %224 = dma.done [#allocation19], 32
    $region137: #{tpu_custom_call.1} parent=1 // pred_fallthru
      _
    // Predicated region
    $region138: #{tpu_custom_call.1} parent=1 // pred_check
      _
    $region139: #{tpu_custom_call.1} parent=1 // pred_check_branch
      %226 = sbr.rel (0) target = $region141
    $region140: #{tpu_custom_call.1} parent=1 // pred_region
      %227 = dma.done [#allocation22], 32
    $region141: #{tpu_custom_call.1} parent=1 // pred_fallthru
      _
    %v228 = vld [vmem:[#allocation3] sm:$0xff]
    %v229 = vld [vmem:[#allocation3 + $0x8] sm:$0xff]
    %v230 = vld [vmem:[%s1] sm:$0x1]
    %v231 = vld [vmem:[#allocation6] sm:$0x1]
    %vm232 = vcmask 130048
    %v233 = vsel %vm232, %v228, 0.0
    %234 = vadd.xlane.f32.xlu0 %v233
    %v235 = vpop.xlane.xlu0 %234
    %v236 = vsel %vm232, %v229, 0.0
    %237 = vadd.xlane.f32.xlu0 %v236
    %v238 = vpop.xlane.xlu0 %237
    %v239 = vrcp.pop 16.0
    %v240 = vmul.f32 %v235, %v239
    %v241 = vmul.f32 %v238, %v239
    %v242 = vsub.f32 %v228, %v240
    %v243 = vsub.f32 %v229, %v241
    %v244 = vmul.f32 %v242, %v242
    %v245 = vmul.f32 %v243, %v243
    %v246 = vsel %vm232, %v244, 0.0
    %247 = vadd.xlane.f32.xlu0 %v246
    %v248 = vpop.xlane.xlu0 %247
    %v249 = vsel %vm232, %v245, 0.0
    %250 = vadd.xlane.f32.xlu0 %v249
    %v251 = vpop.xlane.xlu0 %250
    %v252 = vmul.f32 %v248, %v239
    %v253 = vmul.f32 %v251, %v239
    %v254 = vadd.f32 %v252, 1e-05
    %v255 = vadd.f32 %v253, 1e-05
    %v256 = vrsqrt.pop %v254
    %v257 = vrsqrt.pop %v255
    %v258 = vmul.f32 %v242, %v256
    %v259 = vmul.f32 %v243, %v257
    %v261 = vlaneseq
    %v262 = vshrl.u32 %v261, 7
    %v263 = vsub.s32 0, %v262
    %v264 = vrot.slane %v230, %v263
    %v266 = vmul.f32 %v258, %v264
    %v267 = vmul.f32 %v259, %v264
    %v269 = vlaneseq
    %v270 = vshrl.u32 %v269, 7
    %v271 = vsub.s32 0, %v270
    %v272 = vrot.slane %v231, %v271
    %v274 = vadd.f32 %v266, %v272
    %v275 = vadd.f32 %v267, %v272
    %v276 = vld [vmem:[#allocation8] sm:$0xff]
    %v277 = vld [vmem:[#allocation8 + $0x8] sm:$0xff]
    %v278 = vld [vmem:[#allocation9] sm:$0x1]
    %v280 = vlaneseq
    %v281 = vshrl.u32 %v280, 7
    %v282 = vsub.s32 0, %v281
    %v283 = vrot.slane %v278, %v282
    %v286 = vsel %vm232, %v274, 0
    %v289 = vsel %vm232, %v275, 0
    %291 = vmatprep.subr.mxu0 0.0
    %292 = vmatpush1.msra.mxu0 %v276
    %293 = vmatprep.subr.mxu0 0.0
    %294 = vmatpush1.msra.mxu0 %v277
    %295 = vmatprep.subr.mxu0 0.0
    %296 = vmatpush1.msra.mxu0 0.0
    %297 = vmatprep.subr.mxu0 0.0
    %298 = vmatpush1.msra.mxu0 0.0
    %299 = vmatprep.subr.mxu0 0.0
    %300 = vmatpush1.msra.mxu0 0.0
    %301 = vmatprep.subr.mxu0 0.0
    %302 = vmatpush1.msra.mxu0 0.0
    %303 = vmatprep.subr.mxu0 0.0
    %304 = vmatpush1.msra.mxu0 0.0
    %305 = vmatprep.subr.mxu0 0.0
    %306 = vmatpush1.msra.mxu0 0.0
    %307 = vmatprep.subr.mxu0 0.0
    %308 = vmatpush1.msra.mxu0 0.0
    %309 = vmatprep.subr.mxu0 0.0
    %310 = vmatpush1.msra.mxu0 0.0
    %311 = vmatprep.subr.mxu0 0.0
    %312 = vmatpush1.msra.mxu0 0.0
    %313 = vmatprep.subr.mxu0 0.0
    %314 = vmatpush1.msra.mxu0 0.0
    %315 = vmatprep.subr.mxu0 0.0
    %316 = vmatpush1.msra.mxu0 0.0
    %317 = vmatprep.subr.mxu0 0.0
    %318 = vmatpush1.msra.mxu0 0.0
    %319 = vmatprep.subr.mxu0 0.0
    %320 = vmatpush1.msra.mxu0 0.0
    %321 = vmatprep.subr.mxu0 0.0
    %322 = vmatpush1.msra.mxu0 0.0
    %323 = vmatprep.subr.mxu0 0.0
    %324 = vmatpush1.msra.mxu0 0.0
    %325 = vmatprep.subr.mxu0 0.0
    %326 = vmatpush1.msra.mxu0 0.0
    %327 = vmatprep.subr.mxu0 0.0
    %328 = vmatpush1.msra.mxu0 0.0
    %329 = vmatprep.subr.mxu0 0.0
    %330 = vmatpush1.msra.mxu0 0.0
    %331 = vmatprep.subr.mxu0 0.0
    %332 = vmatpush1.msra.mxu0 0.0
    %333 = vmatprep.subr.mxu0 0.0
    %334 = vmatpush1.msra.mxu0 0.0
    %335 = vmatprep.subr.mxu0 0.0
    %336 = vmatpush1.msra.mxu0 0.0
    %337 = vmatprep.subr.mxu0 0.0
    %338 = vmatpush1.msra.mxu0 0.0
    %339 = vmatprep.subr.mxu0 0.0
    %340 = vmatpush1.msra.mxu0 0.0
    %341 = vmatprep.subr.mxu0 0.0
    %342 = vmatpush1.msra.mxu0 0.0
    %343 = vmatprep.subr.mxu0 0.0
    %344 = vmatpush1.msra.mxu0 0.0
    %345 = vmatprep.subr.mxu0 0.0
    %346 = vmatpush1.msra.mxu0 0.0
    %347 = vmatprep.subr.mxu0 0.0
    %348 = vmatpush1.msra.mxu0 0.0
    %349 = vmatprep.subr.mxu0 0.0
    %350 = vmatpush1.msra.mxu0 0.0
    %351 = vmatprep.subr.mxu0 0.0
    %352 = vmatpush1.msra.mxu0 0.0
    %353 = vmatprep.subr.mxu0 0.0
    %354 = vmatpush1.msra.mxu0 0.0
    %355 = vmatprep.mubr.f32.mxu0 0.0
    %356 = vmatmul.mubr.f32.gmra.mrb[0].mxu0 %v286
    %v357 = vpop.f32.mrb[0].mxu0
    %v358 = vadd.f32 %v283, %v357
    %v359 = vpop.f32.mrb[0].mxu0
    %360 = vmatprep.mubr.f32.mxu0 0.0
    %361 = vmatmul.mubr.f32.gmra.mrb[0].mxu0 %v289
    %v362 = vpop.f32.mrb[0].mxu0
    %v363 = vadd.f32 %v283, %v362
    %v364 = vpop.f32.mrb[0].mxu0
    %365 = vdwg.mxu0
    %v366 = vld [vmem:[#allocation11] sm:$0x1]
    %v367 = vld [vmem:[#allocation12] sm:$0x1]
    %vm368 = vcmask 261120
    %v369 = vsel %vm368, %v358, 0.0
    %370 = vadd.xlane.f32.xlu0 %v369
    %v371 = vpop.xlane.xlu0 %370
    %v372 = vsel %vm368, %v363, 0.0
    %373 = vadd.xlane.f32.xlu0 %v372
    %v374 = vpop.xlane.xlu0 %373
    %v375 = vrcp.pop 32.0
    %v376 = vmul.f32 %v371, %v375
    %v377 = vmul.f32 %v374, %v375
    %v378 = vsub.f32 %v358, %v376
    %v379 = vsub.f32 %v363, %v377
    %v380 = vmul.f32 %v378, %v378
    %v381 = vmul.f32 %v379, %v379
    %v382 = vsel %vm368, %v380, 0.0
    %383 = vadd.xlane.f32.xlu0 %v382
    %v384 = vpop.xlane.xlu0 %383
    %v385 = vsel %vm368, %v381, 0.0
    %386 = vadd.xlane.f32.xlu0 %v385
    %v387 = vpop.xlane.xlu0 %386
    %v388 = vmul.f32 %v384, %v375
    %v389 = vmul.f32 %v387, %v375
    %v390 = vadd.f32 %v388, 1e-05
    %v391 = vadd.f32 %v389, 1e-05
    %v392 = vrsqrt.pop %v390
    %v393 = vrsqrt.pop %v391
    %v394 = vmul.f32 %v378, %v392
    %v395 = vmul.f32 %v379, %v393
    %v397 = vlaneseq
    %v398 = vshrl.u32 %v397, 7
    %v399 = vsub.s32 0, %v398
    %v400 = vrot.slane %v366, %v399
    %v402 = vmul.f32 %v394, %v400
    %v403 = vmul.f32 %v395, %v400
    %v405 = vlaneseq
    %v406 = vshrl.u32 %v405, 7
    %v407 = vsub.s32 0, %v406
    %v408 = vrot.slane %v367, %v407
    %v410 = vadd.f32 %v402, %v408
    %v411 = vadd.f32 %v403, %v408
    %v412 = vld [vmem:[#allocation15] sm:$0xff]
    %v413 = vld [vmem:[#allocation15 + $0x8] sm:$0x1]
    %v414 = vld [vmem:[#allocation14] sm:$0x1]
    %v415 = vadd.f32 %v414, %v412
    %vm416 = vcmask 253952
    %417 = vst.msk [vmem:[#allocation2] sm:$0x1] %vm416, %v415
    %vm420 = vcmask 1046528
    %v421 = vrot.slane %v412, 1
    %v422 = vrot.slane %v413, 1
    %v423 = vsel %vm420, %v421, %v422
    %v425 = vadd.f32 %v410, %v423
    %426 = vst.msk [vmem:[#allocation2 + $0x1] sm:$0xff] %vm368, %v425
    %427 = vst.msk [vmem:[#allocation2 + $0x9] sm:$0x1] %vm416, %v415
    %v428 = vadd.f32 %v411, %v423
    %429 = vst.msk [vmem:[#allocation2 + $0xa] sm:$0xff] %vm368, %v428
    %v430 = vld [vmem:[#allocation2] sm:$0xff]
    %v431 = vld [vmem:[#allocation2 + $0x8] sm:$0xff]
    %v432 = vld [vmem:[#allocation2 + $0x10] sm:$0x3]
    %v433 = vld [vmem:[#allocation17] sm:$0xff]
    %v434 = vld [vmem:[#allocation17 + $0x8] sm:$0xff]
    %v435 = vld [vmem:[#allocation17 + $0x10] sm:$0x3]
    %v436 = vld [vmem:[%s10] sm:$0x1]
    %v437 = vld [vmem:[%s11] sm:$0x1]
    %v438 = vsel %vm368, %v430, 0.0
    %439 = vadd.xlane.f32.xlu0 %v438
    %v440 = vpop.xlane.xlu0 %439
    %v441 = vsel %vm368, %v431, 0.0
    %442 = vadd.xlane.f32.xlu0 %v441
    %v443 = vpop.xlane.xlu0 %442
    %vm444 = vcmask 254976
    %v445 = vsel %vm444, %v432, 0.0
    %446 = vadd.xlane.f32.xlu0 %v445
    %v447 = vpop.xlane.xlu0 %446
    %v448 = vmul.f32 %v440, %v375
    %v449 = vmul.f32 %v443, %v375
    %v450 = vmul.f32 %v447, %v375
    %v451 = vsub.f32 %v430, %v448
    %v452 = vsub.f32 %v431, %v449
    %v453 = vsub.f32 %v432, %v450
    %v454 = vmul.f32 %v451, %v451
    %v455 = vmul.f32 %v452, %v452
    %v456 = vmul.f32 %v453, %v453
    %v457 = vsel %vm368, %v454, 0.0
    %458 = vadd.xlane.f32.xlu0 %v457
    %v459 = vpop.xlane.xlu0 %458
    %v460 = vsel %vm368, %v455, 0.0
    %461 = vadd.xlane.f32.xlu0 %v460
    %v462 = vpop.xlane.xlu0 %461
    %v463 = vsel %vm444, %v456, 0.0
    %464 = vadd.xlane.f32.xlu0 %v463
    %v465 = vpop.xlane.xlu0 %464
    %v466 = vmul.f32 %v459, %v375
    %v467 = vmul.f32 %v462, %v375
    %v468 = vmul.f32 %v465, %v375
    %v469 = vadd.f32 %v466, 1e-05
    %v470 = vadd.f32 %v467, 1e-05
    %v471 = vadd.f32 %v468, 1e-05
    %v472 = vrsqrt.pop %v469
    %v473 = vrsqrt.pop %v470
    %v474 = vrsqrt.pop %v471
    %v475 = vmul.f32 %v451, %v472
    %v476 = vmul.f32 %v452, %v473
    %v477 = vmul.f32 %v453, %v474
    %v479 = vlaneseq
    %v480 = vshrl.u32 %v479, 7
    %v481 = vsub.s32 0, %v480
    %v482 = vrot.slane %v436, %v481
    %v484 = vmul.f32 %v475, %v482
    %v485 = vmul.f32 %v476, %v482
    %v486 = vmul.f32 %v477, %v482
    %v488 = vlaneseq
    %v489 = vshrl.u32 %v488, 7
    %v490 = vsub.s32 0, %v489
    %v491 = vrot.slane %v437, %v490
    %v493 = vadd.f32 %v484, %v491
    %v494 = vadd.f32 %v485, %v491
    %v495 = vadd.f32 %v486, %v491
    %v496 = vld [vmem:[%s12] sm:$0xff]
    %v497 = vld [vmem:[%s12 + $0x8] sm:$0xff]
    %v498 = vld [vmem:[%s12 + $0x10] sm:$0xff]
    %v499 = vld [vmem:[%s12 + $0x18] sm:$0xff]
    %v501 = vsel %vm368, %v493, 0
    %v504 = vsel %vm368, %v494, 0
    %v507 = vsel %vm368, %v495, 0
    %509 = vmatprep.subr.mxu0 0.0
    %510 = vmatpush1.msra.mxu0 %v496
    %511 = vmatprep.subr.mxu0 0.0
    %512 = vmatpush1.msra.mxu0 %v497
    %513 = vmatprep.subr.mxu0 0.0
    %514 = vmatpush1.msra.mxu0 %v498
    %515 = vmatprep.subr.mxu0 0.0
    %516 = vmatpush1.msra.mxu0 %v499
    %517 = vmatprep.subr.mxu0 0.0
    %518 = vmatpush1.msra.mxu0 0.0
    %519 = vmatprep.subr.mxu0 0.0
    %520 = vmatpush1.msra.mxu0 0.0
    %521 = vmatprep.subr.mxu0 0.0
    %522 = vmatpush1.msra.mxu0 0.0
    %523 = vmatprep.subr.mxu0 0.0
    %524 = vmatpush1.msra.mxu0 0.0
    %525 = vmatprep.subr.mxu0 0.0
    %526 = vmatpush1.msra.mxu0 0.0
    %527 = vmatprep.subr.mxu0 0.0
    %528 = vmatpush1.msra.mxu0 0.0
    %529 = vmatprep.subr.mxu0 0.0
    %530 = vmatpush1.msra.mxu0 0.0
    %531 = vmatprep.subr.mxu0 0.0
    %532 = vmatpush1.msra.mxu0 0.0
    %533 = vmatprep.subr.mxu0 0.0
    %534 = vmatpush1.msra.mxu0 0.0
    %535 = vmatprep.subr.mxu0 0.0
    %536 = vmatpush1.msra.mxu0 0.0
    %537 = vmatprep.subr.mxu0 0.0
    %538 = vmatpush1.msra.mxu0 0.0
    %539 = vmatprep.subr.mxu0 0.0
    %540 = vmatpush1.msra.mxu0 0.0
    %541 = vmatprep.subr.mxu0 0.0
    %542 = vmatpush1.msra.mxu0 0.0
    %543 = vmatprep.subr.mxu0 0.0
    %544 = vmatpush1.msra.mxu0 0.0
    %545 = vmatprep.subr.mxu0 0.0
    %546 = vmatpush1.msra.mxu0 0.0
    %547 = vmatprep.subr.mxu0 0.0
    %548 = vmatpush1.msra.mxu0 0.0
    %549 = vmatprep.subr.mxu0 0.0
    %550 = vmatpush1.msra.mxu0 0.0
    %551 = vmatprep.subr.mxu0 0.0
    %552 = vmatpush1.msra.mxu0 0.0
    %553 = vmatprep.subr.mxu0 0.0
    %554 = vmatpush1.msra.mxu0 0.0
    %555 = vmatprep.subr.mxu0 0.0
    %556 = vmatpush1.msra.mxu0 0.0
    %557 = vmatprep.subr.mxu0 0.0
    %558 = vmatpush1.msra.mxu0 0.0
    %559 = vmatprep.subr.mxu0 0.0
    %560 = vmatpush1.msra.mxu0 0.0
    %561 = vmatprep.subr.mxu0 0.0
    %562 = vmatpush1.msra.mxu0 0.0
    %563 = vmatprep.subr.mxu0 0.0
    %564 = vmatpush1.msra.mxu0 0.0
    %565 = vmatprep.subr.mxu0 0.0
    %566 = vmatpush1.msra.mxu0 0.0
    %567 = vmatprep.subr.mxu0 0.0
    %568 = vmatpush1.msra.mxu0 0.0
    %569 = vmatprep.subr.mxu0 0.0
    %570 = vmatpush1.msra.mxu0 0.0
    %571 = vmatprep.subr.mxu0 0.0
    %572 = vmatpush1.msra.mxu0 0.0
    %573 = vmatprep.mubr.f32.mxu0 0.0
    %574 = vmatmul.mubr.f32.gmra.mrb[0].mxu0 %v501
    %v575 = vpop.f32.mrb[0].mxu0
    %v576 = vadd.f32 0.0, %v575
    %v577 = vpop.f32.mrb[0].mxu0
    %578 = vmatprep.mubr.f32.mxu0 0.0
    %579 = vmatmul.mubr.f32.gmra.mrb[0].mxu0 %v504
    %v580 = vpop.f32.mrb[0].mxu0
    %v581 = vadd.f32 0.0, %v580
    %v582 = vpop.f32.mrb[0].mxu0
    %583 = vmatprep.mubr.f32.mxu0 0.0
    %584 = vmatmul.mubr.f32.gmra.mrb[0].mxu0 %v507
    %v585 = vpop.f32.mrb[0].mxu0
    %v586 = vadd.f32 0.0, %v585
    %v587 = vpop.f32.mrb[0].mxu0
    %588 = vdwg.mxu0
    %v589 = vmul.f32 %v576, 0.35355338
    %v590 = vmul.f32 %v581, 0.35355338
    %v591 = vmul.f32 %v586, 0.35355338
    %595 = vrot.lane.b32.xlu0 %v576, 96
    %v596 = vpop.permute.xlu0 %595
    %597 = vrot.lane.b32.xlu0 %v581, 96
    %v598 = vpop.permute.xlu0 %597
    %599 = vrot.lane.b32.xlu0 %v586, 96
    %v600 = vpop.permute.xlu0 %599
    %vm601 = vcmask 64512
    %v603 = vsel %vm601, %v589, 0
    %v606 = vsel %vm601, %v590, 0
    %v609 = vsel %vm601, %v591, 0
    %v611 = vsel %vm601, %v596, 0
    %v613 = vsel %vm601, %v598, 0
    %v615 = vsel %vm601, %v600, 0
    %617 = vmatprep.subr.mxu0 0.0
    %618 = vmatpush1.xpose.msra.mxu0 %v611
    %619 = vmatprep.subr.mxu0 0.0
    %620 = vmatpush1.xpose.msra.mxu0 %v613
    %621 = vmatprep.subr.mxu0 0.0
    %622 = vmatpush1.xpose.msra.mxu0 %v615
    %623 = vmatprep.subr.mxu0 0.0
    %624 = vmatpush1.xpose.msra.mxu0 0.0
    %625 = vmatprep.subr.mxu0 0.0
    %626 = vmatpush1.xpose.msra.mxu0 0.0
    %627 = vmatprep.subr.mxu0 0.0
    %628 = vmatpush1.xpose.msra.mxu0 0.0
    %629 = vmatprep.subr.mxu0 0.0
    %630 = vmatpush1.xpose.msra.mxu0 0.0
    %631 = vmatprep.subr.mxu0 0.0
    %632 = vmatpush1.xpose.msra.mxu0 0.0
    %633 = vmatprep.subr.mxu0 0.0
    %634 = vmatpush1.xpose.msra.mxu0 0.0
    %635 = vmatprep.subr.mxu0 0.0
    %636 = vmatpush1.xpose.msra.mxu0 0.0
    %637 = vmatprep.subr.mxu0 0.0
    %638 = vmatpush1.xpose.msra.mxu0 0.0
    %639 = vmatprep.subr.mxu0 0.0
    %640 = vmatpush1.xpose.msra.mxu0 0.0
    %641 = vmatprep.subr.mxu0 0.0
    %642 = vmatpush1.xpose.msra.mxu0 0.0
    %643 = vmatprep.subr.mxu0 0.0
    %644 = vmatpush1.xpose.msra.mxu0 0.0
    %645 = vmatprep.subr.mxu0 0.0
    %646 = vmatpush1.xpose.msra.mxu0 0.0
    %647 = vmatprep.subr.mxu0 0.0
    %648 = vmatpush1.xpose.msra.mxu0 0.0
    %649 = vmatprep.subr.mxu0 0.0
    %650 = vmatpush1.xpose.msra.mxu0 0.0
    %651 = vmatprep.subr.mxu0 0.0
    %652 = vmatpush1.xpose.msra.mxu0 0.0
    %653 = vmatprep.subr.mxu0 0.0
    %654 = vmatpush1.xpose.msra.mxu0 0.0
    %655 = vmatprep.subr.mxu0 0.0
    %656 = vmatpush1.xpose.msra.mxu0 0.0
    %657 = vmatprep.subr.mxu0 0.0
    %658 = vmatpush1.xpose.msra.mxu0 0.0
    %659 = vmatprep.subr.mxu0 0.0
    %660 = vmatpush1.xpose.msra.mxu0 0.0
    %661 = vmatprep.subr.mxu0 0.0
    %662 = vmatpush1.xpose.msra.mxu0 0.0
    %663 = vmatprep.subr.mxu0 0.0
    %664 = vmatpush1.xpose.msra.mxu0 0.0
    %665 = vmatprep.subr.mxu0 0.0
    %666 = vmatpush1.xpose.msra.mxu0 0.0
    %667 = vmatprep.subr.mxu0 0.0
    %668 = vmatpush1.xpose.msra.mxu0 0.0
    %669 = vmatprep.subr.mxu0 0.0
    %670 = vmatpush1.xpose.msra.mxu0 0.0
    %671 = vmatprep.subr.mxu0 0.0
    %672 = vmatpush1.xpose.msra.mxu0 0.0
    %673 = vmatprep.subr.mxu0 0.0
    %674 = vmatpush1.xpose.msra.mxu0 0.0
    %675 = vmatprep.subr.mxu0 0.0
    %676 = vmatpush1.xpose.msra.mxu0 0.0
    %677 = vmatprep.subr.mxu0 0.0
    %678 = vmatpush1.xpose.msra.mxu0 0.0
    %679 = vmatprep.subr.mxu0 0.0
    %680 = vmatpush1.xpose.msra.mxu0 0.0
    %681 = vmatprep.mubr.f32.mxu0 0.0
    %682 = vmatmul.mubr.f32.gmra.mrb[0].mxu0 %v603
    %v683 = vpop.f32.mrb[0].mxu0
    %v684 = vadd.f32 %v433, %v683
    %v685 = vpop.f32.mrb[0].mxu0
    %686 = vmatprep.mubr.f32.mxu0 0.0
    %687 = vmatmul.mubr.f32.gmra.mrb[0].mxu0 %v606
    %v688 = vpop.f32.mrb[0].mxu0
    %v689 = vadd.f32 %v434, %v688
    %v690 = vpop.f32.mrb[0].mxu0
    %691 = vmatprep.mubr.f32.mxu0 0.0
    %692 = vmatmul.mubr.f32.gmra.mrb[0].mxu0 %v609
    %v693 = vpop.f32.mrb[0].mxu0
    %v694 = vadd.f32 %v435, %v693
    %v695 = vpop.f32.mrb[0].mxu0
    %696 = vdwg.mxu0
    %vm697 = vcmask 146432
    %v698 = vsel %vm697, %v684, -inf
    %699 = vmax.xlane.f32.xlu0 %v698
    %v700 = vpop.xlane.xlu0 %699
    %v701 = vsel %vm697, %v689, -inf
    %702 = vmax.xlane.f32.xlu0 %v701
    %v703 = vpop.xlane.xlu0 %702
    %vm704 = vcmask 140288
    %v705 = vsel %vm704, %v694, -inf
    %706 = vmax.xlane.f32.xlu0 %v705
    %v707 = vpop.xlane.xlu0 %706
    %v708 = vsub.f32 %v684, %v700
    %v709 = vsub.f32 %v689, %v703
    %v710 = vsub.f32 %v694, %v707
    %v711 = vmul.f32 %v708, 1.442695
    %v712 = vpow.pop %v711
    %v713 = vmul.f32 %v709, 1.442695
    %v714 = vpow.pop %v713
    %v715 = vmul.f32 %v710, 1.442695
    %v716 = vpow.pop %v715
    %v717 = vsel %vm697, %v712, 0.0
    %718 = vadd.xlane.f32.xlu0 %v717
    %v719 = vpop.xlane.xlu0 %718
    %v720 = vsel %vm697, %v714, 0.0
    %721 = vadd.xlane.f32.xlu0 %v720
    %v722 = vpop.xlane.xlu0 %721
    %v723 = vsel %vm704, %v716, 0.0
    %724 = vadd.xlane.f32.xlu0 %v723
    %v725 = vpop.xlane.xlu0 %724
    %v726 = vrcp.pop %v719
    %v727 = vrcp.pop %v722
    %v728 = vrcp.pop %v725
    %v729 = vmul.f32 %v712, %v726
    %v730 = vmul.f32 %v714, %v727
    %v731 = vmul.f32 %v716, %v728
    %732 = vrot.lane.b32.xlu0 %v576, 64
    %v733 = vpop.permute.xlu0 %732
    %734 = vrot.lane.b32.xlu0 %v581, 64
    %v735 = vpop.permute.xlu0 %734
    %736 = vrot.lane.b32.xlu0 %v586, 64
    %v737 = vpop.permute.xlu0 %736
    %v741 = vsel %vm697, %v729, 0
    %v744 = vsel %vm697, %v730, 0
    %v747 = vsel %vm697, %v731, 0
    %vm749 = vcmask 1041408
    %v750 = vsel %vm749, %v737, 0
    %752 = vmatprep.subr.mxu0 0.0
    %753 = vmatpush1.msra.mxu0 %v733
    %754 = vmatprep.subr.mxu0 0.0
    %755 = vmatpush1.msra.mxu0 %v735
    %756 = vmatprep.subr.mxu0 0.0
    %757 = vmatpush1.msra.mxu0 %v750
    %758 = vmatprep.subr.mxu0 0.0
    %759 = vmatpush1.msra.mxu0 0.0
    %760 = vmatprep.subr.mxu0 0.0
    %761 = vmatpush1.msra.mxu0 0.0
    %762 = vmatprep.subr.mxu0 0.0
    %763 = vmatpush1.msra.mxu0 0.0
    %764 = vmatprep.subr.mxu0 0.0
    %765 = vmatpush1.msra.mxu0 0.0
    %766 = vmatprep.subr.mxu0 0.0
    %767 = vmatpush1.msra.mxu0 0.0
    %768 = vmatprep.subr.mxu0 0.0
    %769 = vmatpush1.msra.mxu0 0.0
    %770 = vmatprep.subr.mxu0 0.0
    %771 = vmatpush1.msra.mxu0 0.0
    %772 = vmatprep.subr.mxu0 0.0
    %773 = vmatpush1.msra.mxu0 0.0
    %774 = vmatprep.subr.mxu0 0.0
    %775 = vmatpush1.msra.mxu0 0.0
    %776 = vmatprep.subr.mxu0 0.0
    %777 = vmatpush1.msra.mxu0 0.0
    %778 = vmatprep.subr.mxu0 0.0
    %779 = vmatpush1.msra.mxu0 0.0
    %780 = vmatprep.subr.mxu0 0.0
    %781 = vmatpush1.msra.mxu0 0.0
    %782 = vmatprep.subr.mxu0 0.0
    %783 = vmatpush1.msra.mxu0 0.0
    %784 = vmatprep.subr.mxu0 0.0
    %785 = vmatpush1.msra.mxu0 0.0
    %786 = vmatprep.subr.mxu0 0.0
    %787 = vmatpush1.msra.mxu0 0.0
    %788 = vmatprep.subr.mxu0 0.0
    %789 = vmatpush1.msra.mxu0 0.0
    %790 = vmatprep.subr.mxu0 0.0
    %791 = vmatpush1.msra.mxu0 0.0
    %792 = vmatprep.subr.mxu0 0.0
    %793 = vmatpush1.msra.mxu0 0.0
    %794 = vmatprep.subr.mxu0 0.0
    %795 = vmatpush1.msra.mxu0 0.0
    %796 = vmatprep.subr.mxu0 0.0
    %797 = vmatpush1.msra.mxu0 0.0
    %798 = vmatprep.subr.mxu0 0.0
    %799 = vmatpush1.msra.mxu0 0.0
    %800 = vmatprep.subr.mxu0 0.0
    %801 = vmatpush1.msra.mxu0 0.0
    %802 = vmatprep.subr.mxu0 0.0
    %803 = vmatpush1.msra.mxu0 0.0
    %804 = vmatprep.subr.mxu0 0.0
    %805 = vmatpush1.msra.mxu0 0.0
    %806 = vmatprep.subr.mxu0 0.0
    %807 = vmatpush1.msra.mxu0 0.0
    %808 = vmatprep.subr.mxu0 0.0
    %809 = vmatpush1.msra.mxu0 0.0
    %810 = vmatprep.subr.mxu0 0.0
    %811 = vmatpush1.msra.mxu0 0.0
    %812 = vmatprep.subr.mxu0 0.0
    %813 = vmatpush1.msra.mxu0 0.0
    %814 = vmatprep.subr.mxu0 0.0
    %815 = vmatpush1.msra.mxu0 0.0
    %816 = vmatprep.mubr.f32.mxu0 0.0
    %817 = vmatmul.mubr.f32.gmra.mrb[0].mxu0 %v741
    %v818 = vpop.f32.mrb[0].mxu0
    %v819 = vadd.f32 0.0, %v818
    %v820 = vpop.f32.mrb[0].mxu0
    %821 = vmatprep.mubr.f32.mxu0 0.0
    %822 = vmatmul.mubr.f32.gmra.mrb[0].mxu0 %v744
    %v823 = vpop.f32.mrb[0].mxu0
    %v824 = vadd.f32 0.0, %v823
    %v825 = vpop.f32.mrb[0].mxu0
    %826 = vmatprep.mubr.f32.mxu0 0.0
    %827 = vmatmul.mubr.f32.gmra.mrb[0].mxu0 %v747
    %v828 = vpop.f32.mrb[0].mxu0
    %v829 = vadd.f32 0.0, %v828
    %v830 = vpop.f32.mrb[0].mxu0
    %831 = vdwg.mxu0
    %832 = vrot.lane.b32.xlu0 %v589, 120
    %v833 = vpop.permute.xlu0 %832
    %834 = vrot.lane.b32.xlu0 %v590, 120
    %v835 = vpop.permute.xlu0 %834
    %836 = vrot.lane.b32.xlu0 %v591, 120
    %v837 = vpop.permute.xlu0 %836
    %838 = vrot.lane.b32.xlu0 %v576, 88
    %v839 = vpop.permute.xlu0 %838
    %840 = vrot.lane.b32.xlu0 %v581, 88
    %v841 = vpop.permute.xlu0 %840
    %842 = vrot.lane.b32.xlu0 %v586, 88
    %v843 = vpop.permute.xlu0 %842
    %v844 = vsel %vm601, %v833, 0
    %v846 = vsel %vm601, %v835, 0
    %v848 = vsel %vm601, %v837, 0
    %v850 = vsel %vm601, %v839, 0
    %v852 = vsel %vm601, %v841, 0
    %v854 = vsel %vm601, %v843, 0
    %856 = vmatprep.subr.mxu0 0.0
    %857 = vmatpush1.xpose.msra.mxu0 %v850
    %858 = vmatprep.subr.mxu0 0.0
    %859 = vmatpush1.xpose.msra.mxu0 %v852
    %860 = vmatprep.subr.mxu0 0.0
    %861 = vmatpush1.xpose.msra.mxu0 %v854
    %862 = vmatprep.subr.mxu0 0.0
    %863 = vmatpush1.xpose.msra.mxu0 0.0
    %864 = vmatprep.subr.mxu0 0.0
    %865 = vmatpush1.xpose.msra.mxu0 0.0
    %866 = vmatprep.subr.mxu0 0.0
    %867 = vmatpush1.xpose.msra.mxu0 0.0
    %868 = vmatprep.subr.mxu0 0.0
    %869 = vmatpush1.xpose.msra.mxu0 0.0
    %870 = vmatprep.subr.mxu0 0.0
    %871 = vmatpush1.xpose.msra.mxu0 0.0
    %872 = vmatprep.subr.mxu0 0.0
    %873 = vmatpush1.xpose.msra.mxu0 0.0
    %874 = vmatprep.subr.mxu0 0.0
    %875 = vmatpush1.xpose.msra.mxu0 0.0
    %876 = vmatprep.subr.mxu0 0.0
    %877 = vmatpush1.xpose.msra.mxu0 0.0
    %878 = vmatprep.subr.mxu0 0.0
    %879 = vmatpush1.xpose.msra.mxu0 0.0
    %880 = vmatprep.subr.mxu0 0.0
    %881 = vmatpush1.xpose.msra.mxu0 0.0
    %882 = vmatprep.subr.mxu0 0.0
    %883 = vmatpush1.xpose.msra.mxu0 0.0
    %884 = vmatprep.subr.mxu0 0.0
    %885 = vmatpush1.xpose.msra.mxu0 0.0
    %886 = vmatprep.subr.mxu0 0.0
    %887 = vmatpush1.xpose.msra.mxu0 0.0
    %888 = vmatprep.subr.mxu0 0.0
    %889 = vmatpush1.xpose.msra.mxu0 0.0
    %890 = vmatprep.subr.mxu0 0.0
    %891 = vmatpush1.xpose.msra.mxu0 0.0
    %892 = vmatprep.subr.mxu0 0.0
    %893 = vmatpush1.xpose.msra.mxu0 0.0
    %894 = vmatprep.subr.mxu0 0.0
    %895 = vmatpush1.xpose.msra.mxu0 0.0
    %896 = vmatprep.subr.mxu0 0.0
    %897 = vmatpush1.xpose.msra.mxu0 0.0
    %898 = vmatprep.subr.mxu0 0.0
    %899 = vmatpush1.xpose.msra.mxu0 0.0
    %900 = vmatprep.subr.mxu0 0.0
    %901 = vmatpush1.xpose.msra.mxu0 0.0
    %902 = vmatprep.subr.mxu0 0.0
    %903 = vmatpush1.xpose.msra.mxu0 0.0
    %904 = vmatprep.subr.mxu0 0.0
    %905 = vmatpush1.xpose.msra.mxu0 0.0
    %906 = vmatprep.subr.mxu0 0.0
    %907 = vmatpush1.xpose.msra.mxu0 0.0
    %908 = vmatprep.subr.mxu0 0.0
    %909 = vmatpush1.xpose.msra.mxu0 0.0
    %910 = vmatprep.subr.mxu0 0.0
    %911 = vmatpush1.xpose.msra.mxu0 0.0
    %912 = vmatprep.subr.mxu0 0.0
    %913 = vmatpush1.xpose.msra.mxu0 0.0
    %914 = vmatprep.subr.mxu0 0.0
    %915 = vmatpush1.xpose.msra.mxu0 0.0
    %916 = vmatprep.subr.mxu0 0.0
    %917 = vmatpush1.xpose.msra.mxu0 0.0
    %918 = vmatprep.subr.mxu0 0.0
    %919 = vmatpush1.xpose.msra.mxu0 0.0
    %920 = vmatprep.mubr.f32.mxu0 0.0
    %921 = vmatmul.mubr.f32.gmra.mrb[0].mxu0 %v844
    %v922 = vpop.f32.mrb[0].mxu0
    %v923 = vadd.f32 %v433, %v922
    %v924 = vpop.f32.mrb[0].mxu0
    %925 = vmatprep.mubr.f32.mxu0 0.0
    %926 = vmatmul.mubr.f32.gmra.mrb[0].mxu0 %v846
    %v927 = vpop.f32.mrb[0].mxu0
    %v928 = vadd.f32 %v434, %v927
    %v929 = vpop.f32.mrb[0].mxu0
    %930 = vmatprep.mubr.f32.mxu0 0.0
    %931 = vmatmul.mubr.f32.gmra.mrb[0].mxu0 %v848
    %v932 = vpop.f32.mrb[0].mxu0
    %v933 = vadd.f32 %v435, %v932
    %v934 = vpop.f32.mrb[0].mxu0
    %935 = vdwg.mxu0
    %v936 = vsel %vm697, %v923, -inf
    %937 = vmax.xlane.f32.xlu0 %v936
    %v938 = vpop.xlane.xlu0 %937
    %v939 = vsel %vm697, %v928, -inf
    %940 = vmax.xlane.f32.xlu0 %v939
    %v941 = vpop.xlane.xlu0 %940
    %v942 = vsel %vm704, %v933, -inf
    %943 = vmax.xlane.f32.xlu0 %v942
    %v944 = vpop.xlane.xlu0 %943
    %v945 = vsub.f32 %v923, %v938
    %v946 = vsub.f32 %v928, %v941
    %v947 = vsub.f32 %v933, %v944
    %v948 = vmul.f32 %v945, 1.442695
    %v949 = vpow.pop %v948
    %v950 = vmul.f32 %v946, 1.442695
    %v951 = vpow.pop %v950
    %v952 = vmul.f32 %v947, 1.442695
    %v953 = vpow.pop %v952
    %v954 = vsel %vm697, %v949, 0.0
    %955 = vadd.xlane.f32.xlu0 %v954
    %v956 = vpop.xlane.xlu0 %955
    %v957 = vsel %vm697, %v951, 0.0
    %958 = vadd.xlane.f32.xlu0 %v957
    %v959 = vpop.xlane.xlu0 %958
    %v960 = vsel %vm704, %v953, 0.0
    %961 = vadd.xlane.f32.xlu0 %v960
    %v962 = vpop.xlane.xlu0 %961
    %v963 = vrcp.pop %v956
    %v964 = vrcp.pop %v959
    %v965 = vrcp.pop %v962
    %v966 = vmul.f32 %v949, %v963
    %v967 = vmul.f32 %v951, %v964
    %v968 = vmul.f32 %v953, %v965
    %969 = vrot.lane.b32.xlu0 %v576, 56
    %v970 = vpop.permute.xlu0 %969
    %971 = vrot.lane.b32.xlu0 %v581, 56
    %v972 = vpop.permute.xlu0 %971
    %973 = vrot.lane.b32.xlu0 %v586, 56
    %v974 = vpop.permute.xlu0 %973
    %v978 = vsel %vm697, %v966, 0
    %v981 = vsel %vm697, %v967, 0
    %v984 = vsel %vm697, %v968, 0
    %v986 = vsel %vm749, %v974, 0
    %988 = vmatprep.subr.mxu0 0.0
    %989 = vmatpush1.msra.mxu0 %v970
    %990 = vmatprep.subr.mxu0 0.0
    %991 = vmatpush1.msra.mxu0 %v972
    %992 = vmatprep.subr.mxu0 0.0
    %993 = vmatpush1.msra.mxu0 %v986
    %994 = vmatprep.subr.mxu0 0.0
    %995 = vmatpush1.msra.mxu0 0.0
    %996 = vmatprep.subr.mxu0 0.0
    %997 = vmatpush1.msra.mxu0 0.0
    %998 = vmatprep.subr.mxu0 0.0
    %999 = vmatpush1.msra.mxu0 0.0
    %1000 = vmatprep.subr.mxu0 0.0
    %1001 = vmatpush1.msra.mxu0 0.0
    %1002 = vmatprep.subr.mxu0 0.0
    %1003 = vmatpush1.msra.mxu0 0.0
    %1004 = vmatprep.subr.mxu0 0.0
    %1005 = vmatpush1.msra.mxu0 0.0
    %1006 = vmatprep.subr.mxu0 0.0
    %1007 = vmatpush1.msra.mxu0 0.0
    %1008 = vmatprep.subr.mxu0 0.0
    %1009 = vmatpush1.msra.mxu0 0.0
    %1010 = vmatprep.subr.mxu0 0.0
    %1011 = vmatpush1.msra.mxu0 0.0
    %1012 = vmatprep.subr.mxu0 0.0
    %1013 = vmatpush1.msra.mxu0 0.0
    %1014 = vmatprep.subr.mxu0 0.0
    %1015 = vmatpush1.msra.mxu0 0.0
    %1016 = vmatprep.subr.mxu0 0.0
    %1017 = vmatpush1.msra.mxu0 0.0
    %1018 = vmatprep.subr.mxu0 0.0
    %1019 = vmatpush1.msra.mxu0 0.0
    %1020 = vmatprep.subr.mxu0 0.0
    %1021 = vmatpush1.msra.mxu0 0.0
    %1022 = vmatprep.subr.mxu0 0.0
    %1023 = vmatpush1.msra.mxu0 0.0
    %1024 = vmatprep.subr.mxu0 0.0
    %1025 = vmatpush1.msra.mxu0 0.0
    %1026 = vmatprep.subr.mxu0 0.0
    %1027 = vmatpush1.msra.mxu0 0.0
    %1028 = vmatprep.subr.mxu0 0.0
    %1029 = vmatpush1.msra.mxu0 0.0
    %1030 = vmatprep.subr.mxu0 0.0
    %1031 = vmatpush1.msra.mxu0 0.0
    %1032 = vmatprep.subr.mxu0 0.0
    %1033 = vmatpush1.msra.mxu0 0.0
    %1034 = vmatprep.subr.mxu0 0.0
    %1035 = vmatpush1.msra.mxu0 0.0
    %1036 = vmatprep.subr.mxu0 0.0
    %1037 = vmatpush1.msra.mxu0 0.0
    %1038 = vmatprep.subr.mxu0 0.0
    %1039 = vmatpush1.msra.mxu0 0.0
    %1040 = vmatprep.subr.mxu0 0.0
    %1041 = vmatpush1.msra.mxu0 0.0
    %1042 = vmatprep.subr.mxu0 0.0
    %1043 = vmatpush1.msra.mxu0 0.0
    %1044 = vmatprep.subr.mxu0 0.0
    %1045 = vmatpush1.msra.mxu0 0.0
    %1046 = vmatprep.subr.mxu0 0.0
    %1047 = vmatpush1.msra.mxu0 0.0
    %1048 = vmatprep.subr.mxu0 0.0
    %1049 = vmatpush1.msra.mxu0 0.0
    %1050 = vmatprep.subr.mxu0 0.0
    %1051 = vmatpush1.msra.mxu0 0.0
    %1052 = vmatprep.mubr.f32.mxu0 0.0
    %1053 = vmatmul.mubr.f32.gmra.mrb[0].mxu0 %v978
    %v1054 = vpop.f32.mrb[0].mxu0
    %v1055 = vadd.f32 0.0, %v1054
    %v1056 = vpop.f32.mrb[0].mxu0
    %1057 = vmatprep.mubr.f32.mxu0 0.0
    %1058 = vmatmul.mubr.f32.gmra.mrb[0].mxu0 %v981
    %v1059 = vpop.f32.mrb[0].mxu0
    %v1060 = vadd.f32 0.0, %v1059
    %v1061 = vpop.f32.mrb[0].mxu0
    %1062 = vmatprep.mubr.f32.mxu0 0.0
    %1063 = vmatmul.mubr.f32.gmra.mrb[0].mxu0 %v984
    %v1064 = vpop.f32.mrb[0].mxu0
    %v1065 = vadd.f32 0.0, %v1064
    %v1066 = vpop.f32.mrb[0].mxu0
    %1067 = vdwg.mxu0
    %1068 = vrot.lane.b32.xlu0 %v589, 112
    %v1069 = vpop.permute.xlu0 %1068
    %1070 = vrot.lane.b32.xlu0 %v590, 112
    %v1071 = vpop.permute.xlu0 %1070
    %1072 = vrot.lane.b32.xlu0 %v591, 112
    %v1073 = vpop.permute.xlu0 %1072
    %1074 = vrot.lane.b32.xlu0 %v576, 80
    %v1075 = vpop.permute.xlu0 %1074
    %1076 = vrot.lane.b32.xlu0 %v581, 80
    %v1077 = vpop.permute.xlu0 %1076
    %1078 = vrot.lane.b32.xlu0 %v586, 80
    %v1079 = vpop.permute.xlu0 %1078
    %v1080 = vsel %vm601, %v1069, 0
    %v1082 = vsel %vm601, %v1071, 0
    %v1084 = vsel %vm601, %v1073, 0
    %v1086 = vsel %vm601, %v1075, 0
    %v1088 = vsel %vm601, %v1077, 0
    %v1090 = vsel %vm601, %v1079, 0
    %1092 = vmatprep.subr.mxu0 0.0
    %1093 = vmatpush1.xpose.msra.mxu0 %v1086
    %1094 = vmatprep.subr.mxu0 0.0
    %1095 = vmatpush1.xpose.msra.mxu0 %v1088
    %1096 = vmatprep.subr.mxu0 0.0
    %1097 = vmatpush1.xpose.msra.mxu0 %v1090
    %1098 = vmatprep.subr.mxu0 0.0
    %1099 = vmatpush1.xpose.msra.mxu0 0.0
    %1100 = vmatprep.subr.mxu0 0.0
    %1101 = vmatpush1.xpose.msra.mxu0 0.0
    %1102 = vmatprep.subr.mxu0 0.0
    %1103 = vmatpush1.xpose.msra.mxu0 0.0
    %1104 = vmatprep.subr.mxu0 0.0
    %1105 = vmatpush1.xpose.msra.mxu0 0.0
    %1106 = vmatprep.subr.mxu0 0.0
    %1107 = vmatpush1.xpose.msra.mxu0 0.0
    %1108 = vmatprep.subr.mxu0 0.0
    %1109 = vmatpush1.xpose.msra.mxu0 0.0
    %1110 = vmatprep.subr.mxu0 0.0
    %1111 = vmatpush1.xpose.msra.mxu0 0.0
    %1112 = vmatprep.subr.mxu0 0.0
    %1113 = vmatpush1.xpose.msra.mxu0 0.0
    %1114 = vmatprep.subr.mxu0 0.0
    %1115 = vmatpush1.xpose.msra.mxu0 0.0
    %1116 = vmatprep.subr.mxu0 0.0
    %1117 = vmatpush1.xpose.msra.mxu0 0.0
    %1118 = vmatprep.subr.mxu0 0.0
    %1119 = vmatpush1.xpose.msra.mxu0 0.0
    %1120 = vmatprep.subr.mxu0 0.0
    %1121 = vmatpush1.xpose.msra.mxu0 0.0
    %1122 = vmatprep.subr.mxu0 0.0
    %1123 = vmatpush1.xpose.msra.mxu0 0.0
    %1124 = vmatprep.subr.mxu0 0.0
    %1125 = vmatpush1.xpose.msra.mxu0 0.0
    %1126 = vmatprep.subr.mxu0 0.0
    %1127 = vmatpush1.xpose.msra.mxu0 0.0
    %1128 = vmatprep.subr.mxu0 0.0
    %1129 = vmatpush1.xpose.msra.mxu0 0.0
    %1130 = vmatprep.subr.mxu0 0.0
    %1131 = vmatpush1.xpose.msra.mxu0 0.0
    %1132 = vmatprep.subr.mxu0 0.0
    %1133 = vmatpush1.xpose.msra.mxu0 0.0
    %1134 = vmatprep.subr.mxu0 0.0
    %1135 = vmatpush1.xpose.msra.mxu0 0.0
    %1136 = vmatprep.subr.mxu0 0.0
    %1137 = vmatpush1.xpose.msra.mxu0 0.0
    %1138 = vmatprep.subr.mxu0 0.0
    %1139 = vmatpush1.xpose.msra.mxu0 0.0
    %1140 = vmatprep.subr.mxu0 0.0
    %1141 = vmatpush1.xpose.msra.mxu0 0.0
    %1142 = vmatprep.subr.mxu0 0.0
    %1143 = vmatpush1.xpose.msra.mxu0 0.0
    %1144 = vmatprep.subr.mxu0 0.0
    %1145 = vmatpush1.xpose.msra.mxu0 0.0
    %1146 = vmatprep.subr.mxu0 0.0
    %1147 = vmatpush1.xpose.msra.mxu0 0.0
    %1148 = vmatprep.subr.mxu0 0.0
    %1149 = vmatpush1.xpose.msra.mxu0 0.0
    %1150 = vmatprep.subr.mxu0 0.0
    %1151 = vmatpush1.xpose.msra.mxu0 0.0
    %1152 = vmatprep.subr.mxu0 0.0
    %1153 = vmatpush1.xpose.msra.mxu0 0.0
    %1154 = vmatprep.subr.mxu0 0.0
    %1155 = vmatpush1.xpose.msra.mxu0 0.0
    %1156 = vmatprep.mubr.f32.mxu0 0.0
    %1157 = vmatmul.mubr.f32.gmra.mrb[0].mxu0 %v1080
    %v1158 = vpop.f32.mrb[0].mxu0
    %v1159 = vadd.f32 %v433, %v1158
    %v1160 = vpop.f32.mrb[0].mxu0
    %1161 = vmatprep.mubr.f32.mxu0 0.0
    %1162 = vmatmul.mubr.f32.gmra.mrb[0].mxu0 %v1082
    %v1163 = vpop.f32.mrb[0].mxu0
    %v1164 = vadd.f32 %v434, %v1163
    %v1165 = vpop.f32.mrb[0].mxu0
    %1166 = vmatprep.mubr.f32.mxu0 0.0
    %1167 = vmatmul.mubr.f32.gmra.mrb[0].mxu0 %v1084
    %v1168 = vpop.f32.mrb[0].mxu0
    %v1169 = vadd.f32 %v435, %v1168
    %v1170 = vpop.f32.mrb[0].mxu0
    %1171 = vdwg.mxu0
    %v1172 = vsel %vm697, %v1159, -inf
    %1173 = vmax.xlane.f32.xlu0 %v1172
    %v1174 = vpop.xlane.xlu0 %1173
    %v1175 = vsel %vm697, %v1164, -inf
    %1176 = vmax.xlane.f32.xlu0 %v1175
    %v1177 = vpop.xlane.xlu0 %1176
    %v1178 = vsel %vm704, %v1169, -inf
    %1179 = vmax.xlane.f32.xlu0 %v1178
    %v1180 = vpop.xlane.xlu0 %1179
    %v1181 = vsub.f32 %v1159, %v1174
    %v1182 = vsub.f32 %v1164, %v1177
    %v1183 = vsub.f32 %v1169, %v1180
    %v1184 = vmul.f32 %v1181, 1.442695
    %v1185 = vpow.pop %v1184
    %v1186 = vmul.f32 %v1182, 1.442695
    %v1187 = vpow.pop %v1186
    %v1188 = vmul.f32 %v1183, 1.442695
    %v1189 = vpow.pop %v1188
    %v1190 = vsel %vm697, %v1185, 0.0
    %1191 = vadd.xlane.f32.xlu0 %v1190
    %v1192 = vpop.xlane.xlu0 %1191
    %v1193 = vsel %vm697, %v1187, 0.0
    %1194 = vadd.xlane.f32.xlu0 %v1193
    %v1195 = vpop.xlane.xlu0 %1194
    %v1196 = vsel %vm704, %v1189, 0.0
    %1197 = vadd.xlane.f32.xlu0 %v1196
    %v1198 = vpop.xlane.xlu0 %1197
    %v1199 = vrcp.pop %v1192
    %v1200 = vrcp.pop %v1195
    %v1201 = vrcp.pop %v1198
    %v1202 = vmul.f32 %v1185, %v1199
    %v1203 = vmul.f32 %v1187, %v1200
    %v1204 = vmul.f32 %v1189, %v1201
    %1205 = vrot.lane.b32.xlu0 %v576, 48
    %v1206 = vpop.permute.xlu0 %1205
    %1207 = vrot.lane.b32.xlu0 %v581, 48
    %v1208 = vpop.permute.xlu0 %1207
    %1209 = vrot.lane.b32.xlu0 %v586, 48
    %v1210 = vpop.permute.xlu0 %1209
    %v1214 = vsel %vm697, %v1202, 0
    %v1217 = vsel %vm697, %v1203, 0
    %v1220 = vsel %vm697, %v1204, 0
    %v1222 = vsel %vm749, %v1210, 0
    %1224 = vmatprep.subr.mxu0 0.0
    %1225 = vmatpush1.msra.mxu0 %v1206
    %1226 = vmatprep.subr.mxu0 0.0
    %1227 = vmatpush1.msra.mxu0 %v1208
    %1228 = vmatprep.subr.mxu0 0.0
    %1229 = vmatpush1.msra.mxu0 %v1222
    %1230 = vmatprep.subr.mxu0 0.0
    %1231 = vmatpush1.msra.mxu0 0.0
    %1232 = vmatprep.subr.mxu0 0.0
    %1233 = vmatpush1.msra.mxu0 0.0
    %1234 = vmatprep.subr.mxu0 0.0
    %1235 = vmatpush1.msra.mxu0 0.0
    %1236 = vmatprep.subr.mxu0 0.0
    %1237 = vmatpush1.msra.mxu0 0.0
    %1238 = vmatprep.subr.mxu0 0.0
    %1239 = vmatpush1.msra.mxu0 0.0
    %1240 = vmatprep.subr.mxu0 0.0
    %1241 = vmatpush1.msra.mxu0 0.0
    %1242 = vmatprep.subr.mxu0 0.0
    %1243 = vmatpush1.msra.mxu0 0.0
    %1244 = vmatprep.subr.mxu0 0.0
    %1245 = vmatpush1.msra.mxu0 0.0
    %1246 = vmatprep.subr.mxu0 0.0
    %1247 = vmatpush1.msra.mxu0 0.0
    %1248 = vmatprep.subr.mxu0 0.0
    %1249 = vmatpush1.msra.mxu0 0.0
    %1250 = vmatprep.subr.mxu0 0.0
    %1251 = vmatpush1.msra.mxu0 0.0
    %1252 = vmatprep.subr.mxu0 0.0
    %1253 = vmatpush1.msra.mxu0 0.0
    %1254 = vmatprep.subr.mxu0 0.0
    %1255 = vmatpush1.msra.mxu0 0.0
    %1256 = vmatprep.subr.mxu0 0.0
    %1257 = vmatpush1.msra.mxu0 0.0
    %1258 = vmatprep.subr.mxu0 0.0
    %1259 = vmatpush1.msra.mxu0 0.0
    %1260 = vmatprep.subr.mxu0 0.0
    %1261 = vmatpush1.msra.mxu0 0.0
    %1262 = vmatprep.subr.mxu0 0.0
    %1263 = vmatpush1.msra.mxu0 0.0
    %1264 = vmatprep.subr.mxu0 0.0
    %1265 = vmatpush1.msra.mxu0 0.0
    %1266 = vmatprep.subr.mxu0 0.0
    %1267 = vmatpush1.msra.mxu0 0.0
    %1268 = vmatprep.subr.mxu0 0.0
    %1269 = vmatpush1.msra.mxu0 0.0
    %1270 = vmatprep.subr.mxu0 0.0
    %1271 = vmatpush1.msra.mxu0 0.0
    %1272 = vmatprep.subr.mxu0 0.0
    %1273 = vmatpush1.msra.mxu0 0.0
    %1274 = vmatprep.subr.mxu0 0.0
    %1275 = vmatpush1.msra.mxu0 0.0
    %1276 = vmatprep.subr.mxu0 0.0
    %1277 = vmatpush1.msra.mxu0 0.0
    %1278 = vmatprep.subr.mxu0 0.0
    %1279 = vmatpush1.msra.mxu0 0.0
    %1280 = vmatprep.subr.mxu0 0.0
    %1281 = vmatpush1.msra.mxu0 0.0
    %1282 = vmatprep.subr.mxu0 0.0
    %1283 = vmatpush1.msra.mxu0 0.0
    %1284 = vmatprep.subr.mxu0 0.0
    %1285 = vmatpush1.msra.mxu0 0.0
    %1286 = vmatprep.subr.mxu0 0.0
    %1287 = vmatpush1.msra.mxu0 0.0
    %1288 = vmatprep.mubr.f32.mxu0 0.0
    %1289 = vmatmul.mubr.f32.gmra.mrb[0].mxu0 %v1214
    %v1290 = vpop.f32.mrb[0].mxu0
    %v1291 = vadd.f32 0.0, %v1290
    %v1292 = vpop.f32.mrb[0].mxu0
    %1293 = vmatprep.mubr.f32.mxu0 0.0
    %1294 = vmatmul.mubr.f32.gmra.mrb[0].mxu0 %v1217
    %v1295 = vpop.f32.mrb[0].mxu0
    %v1296 = vadd.f32 0.0, %v1295
    %v1297 = vpop.f32.mrb[0].mxu0
    %1298 = vmatprep.mubr.f32.mxu0 0.0
    %1299 = vmatmul.mubr.f32.gmra.mrb[0].mxu0 %v1220
    %v1300 = vpop.f32.mrb[0].mxu0
    %v1301 = vadd.f32 0.0, %v1300
    %v1302 = vpop.f32.mrb[0].mxu0
    %1303 = vdwg.mxu0
    %1304 = vrot.lane.b32.xlu0 %v589, 104
    %v1305 = vpop.permute.xlu0 %1304
    %1306 = vrot.lane.b32.xlu0 %v590, 104
    %v1307 = vpop.permute.xlu0 %1306
    %1308 = vrot.lane.b32.xlu0 %v591, 104
    %v1309 = vpop.permute.xlu0 %1308
    %1310 = vrot.lane.b32.xlu0 %v576, 72
    %v1311 = vpop.permute.xlu0 %1310
    %1312 = vrot.lane.b32.xlu0 %v581, 72
    %v1313 = vpop.permute.xlu0 %1312
    %1314 = vrot.lane.b32.xlu0 %v586, 72
    %v1315 = vpop.permute.xlu0 %1314
    %v1316 = vsel %vm601, %v1305, 0
    %v1318 = vsel %vm601, %v1307, 0
    %v1320 = vsel %vm601, %v1309, 0
    %v1322 = vsel %vm601, %v1311, 0
    %v1324 = vsel %vm601, %v1313, 0
    %v1326 = vsel %vm601, %v1315, 0
    %1328 = vmatprep.subr.mxu0 0.0
    %1329 = vmatpush1.xpose.msra.mxu0 %v1322
    %1330 = vmatprep.subr.mxu0 0.0
    %1331 = vmatpush1.xpose.msra.mxu0 %v1324
    %1332 = vmatprep.subr.mxu0 0.0
    %1333 = vmatpush1.xpose.msra.mxu0 %v1326
    %1334 = vmatprep.subr.mxu0 0.0
    %1335 = vmatpush1.xpose.msra.mxu0 0.0
    %1336 = vmatprep.subr.mxu0 0.0
    %1337 = vmatpush1.xpose.msra.mxu0 0.0
    %1338 = vmatprep.subr.mxu0 0.0
    %1339 = vmatpush1.xpose.msra.mxu0 0.0
    %1340 = vmatprep.subr.mxu0 0.0
    %1341 = vmatpush1.xpose.msra.mxu0 0.0
    %1342 = vmatprep.subr.mxu0 0.0
    %1343 = vmatpush1.xpose.msra.mxu0 0.0
    %1344 = vmatprep.subr.mxu0 0.0
    %1345 = vmatpush1.xpose.msra.mxu0 0.0
    %1346 = vmatprep.subr.mxu0 0.0
    %1347 = vmatpush1.xpose.msra.mxu0 0.0
    %1348 = vmatprep.subr.mxu0 0.0
    %1349 = vmatpush1.xpose.msra.mxu0 0.0
    %1350 = vmatprep.subr.mxu0 0.0
    %1351 = vmatpush1.xpose.msra.mxu0 0.0
    %1352 = vmatprep.subr.mxu0 0.0
    %1353 = vmatpush1.xpose.msra.mxu0 0.0
    %1354 = vmatprep.subr.mxu0 0.0
    %1355 = vmatpush1.xpose.msra.mxu0 0.0
    %1356 = vmatprep.subr.mxu0 0.0
    %1357 = vmatpush1.xpose.msra.mxu0 0.0
    %1358 = vmatprep.subr.mxu0 0.0
    %1359 = vmatpush1.xpose.msra.mxu0 0.0
    %1360 = vmatprep.subr.mxu0 0.0
    %1361 = vmatpush1.xpose.msra.mxu0 0.0
    %1362 = vmatprep.subr.mxu0 0.0
    %1363 = vmatpush1.xpose.msra.mxu0 0.0
    %1364 = vmatprep.subr.mxu0 0.0
    %1365 = vmatpush1.xpose.msra.mxu0 0.0
    %1366 = vmatprep.subr.mxu0 0.0
    %1367 = vmatpush1.xpose.msra.mxu0 0.0
    %1368 = vmatprep.subr.mxu0 0.0
    %1369 = vmatpush1.xpose.msra.mxu0 0.0
    %1370 = vmatprep.subr.mxu0 0.0
    %1371 = vmatpush1.xpose.msra.mxu0 0.0
    %1372 = vmatprep.subr.mxu0 0.0
    %1373 = vmatpush1.xpose.msra.mxu0 0.0
    %1374 = vmatprep.subr.mxu0 0.0
    %1375 = vmatpush1.xpose.msra.mxu0 0.0
    %1376 = vmatprep.subr.mxu0 0.0
    %1377 = vmatpush1.xpose.msra.mxu0 0.0
    %1378 = vmatprep.subr.mxu0 0.0
    %1379 = vmatpush1.xpose.msra.mxu0 0.0
    %1380 = vmatprep.subr.mxu0 0.0
    %1381 = vmatpush1.xpose.msra.mxu0 0.0
    %1382 = vmatprep.subr.mxu0 0.0
    %1383 = vmatpush1.xpose.msra.mxu0 0.0
    %1384 = vmatprep.subr.mxu0 0.0
    %1385 = vmatpush1.xpose.msra.mxu0 0.0
    %1386 = vmatprep.subr.mxu0 0.0
    %1387 = vmatpush1.xpose.msra.mxu0 0.0
    %1388 = vmatprep.subr.mxu0 0.0
    %1389 = vmatpush1.xpose.msra.mxu0 0.0
    %1390 = vmatprep.subr.mxu0 0.0
    %1391 = vmatpush1.xpose.msra.mxu0 0.0
    %1392 = vmatprep.mubr.f32.mxu0 0.0
    %1393 = vmatmul.mubr.f32.gmra.mrb[0].mxu0 %v1316
    %v1394 = vpop.f32.mrb[0].mxu0
    %v1395 = vadd.f32 %v433, %v1394
    %v1396 = vpop.f32.mrb[0].mxu0
    %1397 = vmatprep.mubr.f32.mxu0 0.0
    %1398 = vmatmul.mubr.f32.gmra.mrb[0].mxu0 %v1318
    %v1399 = vpop.f32.mrb[0].mxu0
    %v1400 = vadd.f32 %v434, %v1399
    %v1401 = vpop.f32.mrb[0].mxu0
    %1402 = vmatprep.mubr.f32.mxu0 0.0
    %1403 = vmatmul.mubr.f32.gmra.mrb[0].mxu0 %v1320
    %v1404 = vpop.f32.mrb[0].mxu0
    %v1405 = vadd.f32 %v435, %v1404
    %v1406 = vpop.f32.mrb[0].mxu0
    %1407 = vdwg.mxu0
    %v1408 = vsel %vm697, %v1395, -inf
    %1409 = vmax.xlane.f32.xlu0 %v1408
    %v1410 = vpop.xlane.xlu0 %1409
    %v1411 = vsel %vm697, %v1400, -inf
    %1412 = vmax.xlane.f32.xlu0 %v1411
    %v1413 = vpop.xlane.xlu0 %1412
    %v1414 = vsel %vm704, %v1405, -inf
    %1415 = vmax.xlane.f32.xlu0 %v1414
    %v1416 = vpop.xlane.xlu0 %1415
    %v1417 = vsub.f32 %v1395, %v1410
    %v1418 = vsub.f32 %v1400, %v1413
    %v1419 = vsub.f32 %v1405, %v1416
    %v1420 = vmul.f32 %v1417, 1.442695
    %v1421 = vpow.pop %v1420
    %v1422 = vmul.f32 %v1418, 1.442695
    %v1423 = vpow.pop %v1422
    %v1424 = vmul.f32 %v1419, 1.442695
    %v1425 = vpow.pop %v1424
    %v1426 = vsel %vm697, %v1421, 0.0
    %1427 = vadd.xlane.f32.xlu0 %v1426
    %v1428 = vpop.xlane.xlu0 %1427
    %v1429 = vsel %vm697, %v1423, 0.0
    %1430 = vadd.xlane.f32.xlu0 %v1429
    %v1431 = vpop.xlane.xlu0 %1430
    %v1432 = vsel %vm704, %v1425, 0.0
    %1433 = vadd.xlane.f32.xlu0 %v1432
    %v1434 = vpop.xlane.xlu0 %1433
    %v1435 = vrcp.pop %v1428
    %v1436 = vrcp.pop %v1431
    %v1437 = vrcp.pop %v1434
    %v1438 = vmul.f32 %v1421, %v1435
    %v1439 = vmul.f32 %v1423, %v1436
    %v1440 = vmul.f32 %v1425, %v1437
    %1441 = vrot.lane.b32.xlu0 %v576, 40
    %v1442 = vpop.permute.xlu0 %1441
    %1443 = vrot.lane.b32.xlu0 %v581, 40
    %v1444 = vpop.permute.xlu0 %1443
    %1445 = vrot.lane.b32.xlu0 %v586, 40
    %v1446 = vpop.permute.xlu0 %1445
    %v1450 = vsel %vm697, %v1438, 0
    %v1453 = vsel %vm697, %v1439, 0
    %v1456 = vsel %vm697, %v1440, 0
    %v1458 = vsel %vm749, %v1446, 0
    %1460 = vmatprep.subr.mxu0 0.0
    %1461 = vmatpush1.msra.mxu0 %v1442
    %1462 = vmatprep.subr.mxu0 0.0
    %1463 = vmatpush1.msra.mxu0 %v1444
    %1464 = vmatprep.subr.mxu0 0.0
    %1465 = vmatpush1.msra.mxu0 %v1458
    %1466 = vmatprep.subr.mxu0 0.0
    %1467 = vmatpush1.msra.mxu0 0.0
    %1468 = vmatprep.subr.mxu0 0.0
    %1469 = vmatpush1.msra.mxu0 0.0
    %1470 = vmatprep.subr.mxu0 0.0
    %1471 = vmatpush1.msra.mxu0 0.0
    %1472 = vmatprep.subr.mxu0 0.0
    %1473 = vmatpush1.msra.mxu0 0.0
    %1474 = vmatprep.subr.mxu0 0.0
    %1475 = vmatpush1.msra.mxu0 0.0
    %1476 = vmatprep.subr.mxu0 0.0
    %1477 = vmatpush1.msra.mxu0 0.0
    %1478 = vmatprep.subr.mxu0 0.0
    %1479 = vmatpush1.msra.mxu0 0.0
    %1480 = vmatprep.subr.mxu0 0.0
    %1481 = vmatpush1.msra.mxu0 0.0
    %1482 = vmatprep.subr.mxu0 0.0
    %1483 = vmatpush1.msra.mxu0 0.0
    %1484 = vmatprep.subr.mxu0 0.0
    %1485 = vmatpush1.msra.mxu0 0.0
    %1486 = vmatprep.subr.mxu0 0.0
    %1487 = vmatpush1.msra.mxu0 0.0
    %1488 = vmatprep.subr.mxu0 0.0
    %1489 = vmatpush1.msra.mxu0 0.0
    %1490 = vmatprep.subr.mxu0 0.0
    %1491 = vmatpush1.msra.mxu0 0.0
    %1492 = vmatprep.subr.mxu0 0.0
    %1493 = vmatpush1.msra.mxu0 0.0
    %1494 = vmatprep.subr.mxu0 0.0
    %1495 = vmatpush1.msra.mxu0 0.0
    %1496 = vmatprep.subr.mxu0 0.0
    %1497 = vmatpush1.msra.mxu0 0.0
    %1498 = vmatprep.subr.mxu0 0.0
    %1499 = vmatpush1.msra.mxu0 0.0
    %1500 = vmatprep.subr.mxu0 0.0
    %1501 = vmatpush1.msra.mxu0 0.0
    %1502 = vmatprep.subr.mxu0 0.0
    %1503 = vmatpush1.msra.mxu0 0.0
    %1504 = vmatprep.subr.mxu0 0.0
    %1505 = vmatpush1.msra.mxu0 0.0
    %1506 = vmatprep.subr.mxu0 0.0
    %1507 = vmatpush1.msra.mxu0 0.0
    %1508 = vmatprep.subr.mxu0 0.0
    %1509 = vmatpush1.msra.mxu0 0.0
    %1510 = vmatprep.subr.mxu0 0.0
    %1511 = vmatpush1.msra.mxu0 0.0
    %1512 = vmatprep.subr.mxu0 0.0
    %1513 = vmatpush1.msra.mxu0 0.0
    %1514 = vmatprep.subr.mxu0 0.0
    %1515 = vmatpush1.msra.mxu0 0.0
    %1516 = vmatprep.subr.mxu0 0.0
    %1517 = vmatpush1.msra.mxu0 0.0
    %1518 = vmatprep.subr.mxu0 0.0
    %1519 = vmatpush1.msra.mxu0 0.0
    %1520 = vmatprep.subr.mxu0 0.0
    %1521 = vmatpush1.msra.mxu0 0.0
    %1522 = vmatprep.subr.mxu0 0.0
    %1523 = vmatpush1.msra.mxu0 0.0
    %1524 = vmatprep.mubr.f32.mxu0 0.0
    %1525 = vmatmul.mubr.f32.gmra.mrb[0].mxu0 %v1450
    %v1526 = vpop.f32.mrb[0].mxu0
    %v1527 = vadd.f32 0.0, %v1526
    %v1528 = vpop.f32.mrb[0].mxu0
    %1529 = vmatprep.mubr.f32.mxu0 0.0
    %1530 = vmatmul.mubr.f32.gmra.mrb[0].mxu0 %v1453
    %v1531 = vpop.f32.mrb[0].mxu0
    %v1532 = vadd.f32 0.0, %v1531
    %v1533 = vpop.f32.mrb[0].mxu0
    %1534 = vmatprep.mubr.f32.mxu0 0.0
    %1535 = vmatmul.mubr.f32.gmra.mrb[0].mxu0 %v1456
    %v1536 = vpop.f32.mrb[0].mxu0
    %v1537 = vadd.f32 0.0, %v1536
    %v1538 = vpop.f32.mrb[0].mxu0
    %1539 = vdwg.mxu0
    %1543 = vrot.lane.b32.xlu0 %v1055, 8
    %v1544 = vpop.permute.xlu0 %1543
    %1545 = vrot.lane.b32.xlu0 %v1060, 8
    %v1546 = vpop.permute.xlu0 %1545
    %1547 = vrot.lane.b32.xlu0 %v1065, 8
    %v1548 = vpop.permute.xlu0 %1547
    %1555 = vrot.lane.b32.xlu0 %v1291, 16
    %v1556 = vpop.permute.xlu0 %1555
    %1557 = vrot.lane.b32.xlu0 %v1296, 16
    %v1558 = vpop.permute.xlu0 %1557
    %1559 = vrot.lane.b32.xlu0 %v1301, 16
    %v1560 = vpop.permute.xlu0 %1559
    %1567 = vrot.lane.b32.xlu0 %v1527, 24
    %v1568 = vpop.permute.xlu0 %1567
    %1569 = vrot.lane.b32.xlu0 %v1532, 24
    %v1570 = vpop.permute.xlu0 %1569
    %1571 = vrot.lane.b32.xlu0 %v1537, 24
    %v1572 = vpop.permute.xlu0 %1571
    %v1576 = vsel %vm601, %v819, %v1544
    %v1577 = vsel %vm601, %v824, %v1546
    %v1578 = vsel %vm601, %v829, %v1548
    %v1579 = vsel %vm232, %v1576, %v1556
    %v1580 = vsel %vm232, %v1577, %v1558
    %v1581 = vsel %vm232, %v1578, %v1560
    %vm1582 = vcmask 195584
    %v1583 = vsel %vm1582, %v1579, %v1568
    %v1584 = vsel %vm1582, %v1580, %v1570
    %v1585 = vsel %vm1582, %v1581, %v1572
    %v1586 = vld [vmem:[%s13] sm:$0xff]
    %v1587 = vld [vmem:[%s13 + $0x8] sm:$0xff]
    %v1588 = vld [vmem:[%s13 + $0x10] sm:$0xff]
    %v1589 = vld [vmem:[%s13 + $0x18] sm:$0xff]
    %v1591 = vsel %vm368, %v1583, 0
    %v1594 = vsel %vm368, %v1584, 0
    %v1597 = vsel %vm368, %v1585, 0
    %1599 = vmatprep.subr.mxu0 0.0
    %1600 = vmatpush1.msra.mxu0 %v1586
    %1601 = vmatprep.subr.mxu0 0.0
    %1602 = vmatpush1.msra.mxu0 %v1587
    %1603 = vmatprep.subr.mxu0 0.0
    %1604 = vmatpush1.msra.mxu0 %v1588
    %1605 = vmatprep.subr.mxu0 0.0
    %1606 = vmatpush1.msra.mxu0 %v1589
    %1607 = vmatprep.subr.mxu0 0.0
    %1608 = vmatpush1.msra.mxu0 0.0
    %1609 = vmatprep.subr.mxu0 0.0
    %1610 = vmatpush1.msra.mxu0 0.0
    %1611 = vmatprep.subr.mxu0 0.0
    %1612 = vmatpush1.msra.mxu0 0.0
    %1613 = vmatprep.subr.mxu0 0.0
    %1614 = vmatpush1.msra.mxu0 0.0
    %1615 = vmatprep.subr.mxu0 0.0
    %1616 = vmatpush1.msra.mxu0 0.0
    %1617 = vmatprep.subr.mxu0 0.0
    %1618 = vmatpush1.msra.mxu0 0.0
    %1619 = vmatprep.subr.mxu0 0.0
    %1620 = vmatpush1.msra.mxu0 0.0
    %1621 = vmatprep.subr.mxu0 0.0
    %1622 = vmatpush1.msra.mxu0 0.0
    %1623 = vmatprep.subr.mxu0 0.0
    %1624 = vmatpush1.msra.mxu0 0.0
    %1625 = vmatprep.subr.mxu0 0.0
    %1626 = vmatpush1.msra.mxu0 0.0
    %1627 = vmatprep.subr.mxu0 0.0
    %1628 = vmatpush1.msra.mxu0 0.0
    %1629 = vmatprep.subr.mxu0 0.0
    %1630 = vmatpush1.msra.mxu0 0.0
    %1631 = vmatprep.subr.mxu0 0.0
    %1632 = vmatpush1.msra.mxu0 0.0
    %1633 = vmatprep.subr.mxu0 0.0
    %1634 = vmatpush1.msra.mxu0 0.0
    %1635 = vmatprep.subr.mxu0 0.0
    %1636 = vmatpush1.msra.mxu0 0.0
    %1637 = vmatprep.subr.mxu0 0.0
    %1638 = vmatpush1.msra.mxu0 0.0
    %1639 = vmatprep.subr.mxu0 0.0
    %1640 = vmatpush1.msra.mxu0 0.0
    %1641 = vmatprep.subr.mxu0 0.0
    %1642 = vmatpush1.msra.mxu0 0.0
    %1643 = vmatprep.subr.mxu0 0.0
    %1644 = vmatpush1.msra.mxu0 0.0
    %1645 = vmatprep.subr.mxu0 0.0
    %1646 = vmatpush1.msra.mxu0 0.0
    %1647 = vmatprep.subr.mxu0 0.0
    %1648 = vmatpush1.msra.mxu0 0.0
    %1649 = vmatprep.subr.mxu0 0.0
    %1650 = vmatpush1.msra.mxu0 0.0
    %1651 = vmatprep.subr.mxu0 0.0
    %1652 = vmatpush1.msra.mxu0 0.0
    %1653 = vmatprep.subr.mxu0 0.0
    %1654 = vmatpush1.msra.mxu0 0.0
    %1655 = vmatprep.subr.mxu0 0.0
    %1656 = vmatpush1.msra.mxu0 0.0
    %1657 = vmatprep.subr.mxu0 0.0
    %1658 = vmatpush1.msra.mxu0 0.0
    %1659 = vmatprep.subr.mxu0 0.0
    %1660 = vmatpush1.msra.mxu0 0.0
    %1661 = vmatprep.subr.mxu0 0.0
    %1662 = vmatpush1.msra.mxu0 0.0
    %1663 = vmatprep.mubr.f32.mxu0 0.0
    %1664 = vmatmul.mubr.f32.gmra.mrb[0].mxu0 %v1591
    %v1665 = vpop.f32.mrb[0].mxu0
    %v1666 = vadd.f32 0.0, %v1665
    %v1667 = vpop.f32.mrb[0].mxu0
    %1668 = vmatprep.mubr.f32.mxu0 0.0
    %1669 = vmatmul.mubr.f32.gmra.mrb[0].mxu0 %v1594
    %v1670 = vpop.f32.mrb[0].mxu0
    %v1671 = vadd.f32 0.0, %v1670
    %v1672 = vpop.f32.mrb[0].mxu0
    %1673 = vmatprep.mubr.f32.mxu0 0.0
    %1674 = vmatmul.mubr.f32.gmra.mrb[0].mxu0 %v1597
    %v1675 = vpop.f32.mrb[0].mxu0
    %v1676 = vadd.f32 0.0, %v1675
    %v1677 = vpop.f32.mrb[0].mxu0
    %1678 = vdwg.mxu0
    %v1679 = vadd.f32 %v430, %v1666
    %v1680 = vadd.f32 %v431, %v1671
    %v1681 = vadd.f32 %v432, %v1676
    %v1682 = vld [vmem:[%s14] sm:$0x1]
    %v1684 = vlaneseq
    %v1685 = vshrl.u32 %v1684, 7
    %v1686 = vsub.s32 0, %v1685
    %v1687 = vrot.slane %v1682, %v1686
    %v1689 = vadd.f32 %v1679, %v1687
    %v1690 = vadd.f32 %v1680, %v1687
    %v1691 = vadd.f32 %v1681, %v1687
    %v1692 = vld [vmem:[#allocation18] sm:$0x1]
    %v1693 = vld [vmem:[#allocation20] sm:$0x1]
    %v1694 = vsel %vm368, %v1689, 0.0
    %1695 = vadd.xlane.f32.xlu0 %v1694
    %v1696 = vpop.xlane.xlu0 %1695
    %v1697 = vsel %vm368, %v1690, 0.0
    %1698 = vadd.xlane.f32.xlu0 %v1697
    %v1699 = vpop.xlane.xlu0 %1698
    %v1700 = vsel %vm444, %v1691, 0.0
    %1701 = vadd.xlane.f32.xlu0 %v1700
    %v1702 = vpop.xlane.xlu0 %1701
    %v1703 = vmul.f32 %v1696, %v375
    %v1704 = vmul.f32 %v1699, %v375
    %v1705 = vmul.f32 %v1702, %v375
    %v1706 = vsub.f32 %v1689, %v1703
    %v1707 = vsub.f32 %v1690, %v1704
    %v1708 = vsub.f32 %v1691, %v1705
    %v1709 = vmul.f32 %v1706, %v1706
    %v1710 = vmul.f32 %v1707, %v1707
    %v1711 = vmul.f32 %v1708, %v1708
    %v1712 = vsel %vm368, %v1709, 0.0
    %1713 = vadd.xlane.f32.xlu0 %v1712
    %v1714 = vpop.xlane.xlu0 %1713
    %v1715 = vsel %vm368, %v1710, 0.0
    %1716 = vadd.xlane.f32.xlu0 %v1715
    %v1717 = vpop.xlane.xlu0 %1716
    %v1718 = vsel %vm444, %v1711, 0.0
    %1719 = vadd.xlane.f32.xlu0 %v1718
    %v1720 = vpop.xlane.xlu0 %1719
    %v1721 = vmul.f32 %v1714, %v375
    %v1722 = vmul.f32 %v1717, %v375
    %v1723 = vmul.f32 %v1720, %v375
    %v1724 = vadd.f32 %v1721, 1e-05
    %v1725 = vadd.f32 %v1722, 1e-05
    %v1726 = vadd.f32 %v1723, 1e-05
    %v1727 = vrsqrt.pop %v1724
    %v1728 = vrsqrt.pop %v1725
    %v1729 = vrsqrt.pop %v1726
    %v1730 = vmul.f32 %v1706, %v1727
    %v1731 = vmul.f32 %v1707, %v1728
    %v1732 = vmul.f32 %v1708, %v1729
    %v1734 = vlaneseq
    %v1735 = vshrl.u32 %v1734, 7
    %v1736 = vsub.s32 0, %v1735
    %v1737 = vrot.slane %v1692, %v1736
    %v1739 = vmul.f32 %v1730, %v1737
    %v1740 = vmul.f32 %v1731, %v1737
    %v1741 = vmul.f32 %v1732, %v1737
    %v1743 = vlaneseq
    %v1744 = vshrl.u32 %v1743, 7
    %v1745 = vsub.s32 0, %v1744
    %v1746 = vrot.slane %v1693, %v1745
    %v1748 = vadd.f32 %v1739, %v1746
    %v1749 = vadd.f32 %v1740, %v1746
    %v1750 = vadd.f32 %v1741, %v1746
    %v1751 = vld [vmem:[%s17] sm:$0xff]
    %v1752 = vld [vmem:[%s17 + $0x8] sm:$0xff]
    %v1753 = vld [vmem:[%s17 + $0x10] sm:$0xff]
    %v1754 = vld [vmem:[%s17 + $0x18] sm:$0xff]
    %v1755 = vld [vmem:[#allocation21] sm:$0x1]
    %v1757 = vlaneseq
    %v1758 = vshrl.u32 %v1757, 7
    %v1759 = vsub.s32 0, %v1758
    %v1760 = vrot.slane %v1755, %v1759
    %v1763 = vsel %vm368, %v1748, 0
    %v1766 = vsel %vm368, %v1749, 0
    %v1769 = vsel %vm368, %v1750, 0
    %1771 = vmatprep.subr.mxu0 0.0
    %1772 = vmatpush1.msra.mxu0 %v1751
    %1773 = vmatprep.subr.mxu0 0.0
    %1774 = vmatpush1.msra.mxu0 %v1752
    %1775 = vmatprep.subr.mxu0 0.0
    %1776 = vmatpush1.msra.mxu0 %v1753
    %1777 = vmatprep.subr.mxu0 0.0
    %1778 = vmatpush1.msra.mxu0 %v1754
    %1779 = vmatprep.subr.mxu0 0.0
    %1780 = vmatpush1.msra.mxu0 0.0
    %1781 = vmatprep.subr.mxu0 0.0
    %1782 = vmatpush1.msra.mxu0 0.0
    %1783 = vmatprep.subr.mxu0 0.0
    %1784 = vmatpush1.msra.mxu0 0.0
    %1785 = vmatprep.subr.mxu0 0.0
    %1786 = vmatpush1.msra.mxu0 0.0
    %1787 = vmatprep.subr.mxu0 0.0
    %1788 = vmatpush1.msra.mxu0 0.0
    %1789 = vmatprep.subr.mxu0 0.0
    %1790 = vmatpush1.msra.mxu0 0.0
    %1791 = vmatprep.subr.mxu0 0.0
    %1792 = vmatpush1.msra.mxu0 0.0
    %1793 = vmatprep.subr.mxu0 0.0
    %1794 = vmatpush1.msra.mxu0 0.0
    %1795 = vmatprep.subr.mxu0 0.0
    %1796 = vmatpush1.msra.mxu0 0.0
    %1797 = vmatprep.subr.mxu0 0.0
    %1798 = vmatpush1.msra.mxu0 0.0
    %1799 = vmatprep.subr.mxu0 0.0
    %1800 = vmatpush1.msra.mxu0 0.0
    %1801 = vmatprep.subr.mxu0 0.0
    %1802 = vmatpush1.msra.mxu0 0.0
    %1803 = vmatprep.subr.mxu0 0.0
    %1804 = vmatpush1.msra.mxu0 0.0
    %1805 = vmatprep.subr.mxu0 0.0
    %1806 = vmatpush1.msra.mxu0 0.0
    %1807 = vmatprep.subr.mxu0 0.0
    %1808 = vmatpush1.msra.mxu0 0.0
    %1809 = vmatprep.subr.mxu0 0.0
    %1810 = vmatpush1.msra.mxu0 0.0
    %1811 = vmatprep.subr.mxu0 0.0
    %1812 = vmatpush1.msra.mxu0 0.0
    %1813 = vmatprep.subr.mxu0 0.0
    %1814 = vmatpush1.msra.mxu0 0.0
    %1815 = vmatprep.subr.mxu0 0.0
    %1816 = vmatpush1.msra.mxu0 0.0
    %1817 = vmatprep.subr.mxu0 0.0
    %1818 = vmatpush1.msra.mxu0 0.0
    %1819 = vmatprep.subr.mxu0 0.0
    %1820 = vmatpush1.msra.mxu0 0.0
    %1821 = vmatprep.subr.mxu0 0.0
    %1822 = vmatpush1.msra.mxu0 0.0
    %1823 = vmatprep.subr.mxu0 0.0
    %1824 = vmatpush1.msra.mxu0 0.0
    %1825 = vmatprep.subr.mxu0 0.0
    %1826 = vmatpush1.msra.mxu0 0.0
    %1827 = vmatprep.subr.mxu0 0.0
    %1828 = vmatpush1.msra.mxu0 0.0
    %1829 = vmatprep.subr.mxu0 0.0
    %1830 = vmatpush1.msra.mxu0 0.0
    %1831 = vmatprep.subr.mxu0 0.0
    %1832 = vmatpush1.msra.mxu0 0.0
    %1833 = vmatprep.subr.mxu0 0.0
    %1834 = vmatpush1.msra.mxu0 0.0
    %1835 = vmatprep.mubr.f32.mxu0 0.0
    %1836 = vmatmul.mubr.f32.gmra.mrb[0].mxu0 %v1763
    %v1837 = vpop.f32.mrb[0].mxu0
    %v1838 = vadd.f32 %v1760, %v1837
    %v1839 = vpop.f32.mrb[0].mxu0
    %1840 = vmatprep.mubr.f32.mxu0 0.0
    %1841 = vmatmul.mubr.f32.gmra.mrb[0].mxu0 %v1766
    %v1842 = vpop.f32.mrb[0].mxu0
    %v1843 = vadd.f32 %v1760, %v1842
    %v1844 = vpop.f32.mrb[0].mxu0
    %1845 = vmatprep.mubr.f32.mxu0 0.0
    %1846 = vmatmul.mubr.f32.gmra.mrb[0].mxu0 %v1769
    %v1847 = vpop.f32.mrb[0].mxu0
    %v1848 = vadd.f32 %v1760, %v1847
    %v1849 = vpop.f32.mrb[0].mxu0
    %1850 = vdwg.mxu0
    %v1851 = vmul.f32 %v1838, 0.5
    %v1852 = vmul.f32 %v1843, 0.5
    %v1853 = vmul.f32 %v1848, 0.5
    %v1854 = vmul.f32 %v1838, 0.70710677
    %v1855 = vmul.f32 %v1843, 0.70710677
    %v1856 = vmul.f32 %v1848, 0.70710677
    %vm1857 = vcmp.ge.f32.partialorder %v1854, 0.0
    %vm1858 = vcmp.ge.f32.partialorder %v1855, 0.0
    %vm1859 = vcmp.ge.f32.partialorder %v1856, 0.0
    %v1860 = vsel %vm1857, 1.0, -1.0
    %v1861 = vsel %vm1858, 1.0, -1.0
    %v1862 = vsel %vm1859, 1.0, -1.0
    %v1863 = vand.u32 2147483647, %v1854
    %v1864 = vand.u32 2147483647, %v1855
    %v1865 = vand.u32 2147483647, %v1856
    %v1866 = vmul.f32 %v1863, 0.3275911
    %v1867 = vmul.f32 %v1864, 0.3275911
    %v1868 = vmul.f32 %v1865, 0.3275911
    %v1869 = vadd.f32 %v1866, 1.0
    %v1870 = vadd.f32 %v1867, 1.0
    %v1871 = vadd.f32 %v1868, 1.0
    %v1872 = vrcp.pop %v1869
    %v1873 = vmul.f32 1.0, %v1872
    %v1874 = vrcp.pop %v1870
    %v1875 = vmul.f32 1.0, %v1874
    %v1876 = vrcp.pop %v1871
    %v1877 = vmul.f32 1.0, %v1876
    %v1878 = vmul.f32 %v1873, 1.0614054
    %v1879 = vmul.f32 %v1875, 1.0614054
    %v1880 = vmul.f32 %v1877, 1.0614054
    %v1881 = vadd.f32 %v1878, -1.4531521
    %v1882 = vadd.f32 %v1879, -1.4531521
    %v1883 = vadd.f32 %v1880, -1.4531521
    %v1884 = vmul.f32 %v1881, %v1873
    %v1885 = vmul.f32 %v1882, %v1875
    %v1886 = vmul.f32 %v1883, %v1877
    %v1887 = vadd.f32 %v1884, 1.4214138
    %v1888 = vadd.f32 %v1885, 1.4214138
    %v1889 = vadd.f32 %v1886, 1.4214138
    %v1890 = vmul.f32 %v1887, %v1873
    %v1891 = vmul.f32 %v1888, %v1875
    %v1892 = vmul.f32 %v1889, %v1877
    %v1893 = vadd.f32 %v1890, -0.28449672
    %v1894 = vadd.f32 %v1891, -0.28449672
    %v1895 = vadd.f32 %v1892, -0.28449672
    %v1896 = vmul.f32 %v1893, %v1873
    %v1897 = vmul.f32 %v1894, %v1875
    %v1898 = vmul.f32 %v1895, %v1877
    %v1899 = vadd.f32 %v1896, 0.2548296
    %v1900 = vadd.f32 %v1897, 0.2548296
    %v1901 = vadd.f32 %v1898, 0.2548296
    %v1902 = vmul.f32 %v1899, %v1873
    %v1903 = vmul.f32 %v1900, %v1875
    %v1904 = vmul.f32 %v1901, %v1877
    %v1905 = vsub.f32 0.0, %v1863
    %v1906 = vsub.f32 0.0, %v1864
    %v1907 = vsub.f32 0.0, %v1865
    %v1908 = vmul.f32 %v1905, %v1863
    %v1909 = vmul.f32 %v1906, %v1864
    %v1910 = vmul.f32 %v1907, %v1865
    %v1911 = vmul.f32 %v1908, 1.442695
    %v1912 = vpow.pop %v1911
    %v1913 = vmul.f32 %v1909, 1.442695
    %v1914 = vpow.pop %v1913
    %v1915 = vmul.f32 %v1910, 1.442695
    %v1916 = vpow.pop %v1915
    %v1917 = vmul.f32 %v1902, %v1912
    %v1918 = vmul.f32 %v1903, %v1914
    %v1919 = vmul.f32 %v1904, %v1916
    %v1920 = vsub.f32 1.0, %v1917
    %v1921 = vsub.f32 1.0, %v1918
    %v1922 = vsub.f32 1.0, %v1919
    %v1923 = vmul.f32 %v1860, %v1920
    %v1924 = vmul.f32 %v1861, %v1921
    %v1925 = vmul.f32 %v1862, %v1922
    %v1926 = vadd.f32 %v1923, 1.0
    %v1927 = vadd.f32 %v1924, 1.0
    %v1928 = vadd.f32 %v1925, 1.0
    %v1929 = vmul.f32 %v1851, %v1926
    %v1930 = vmul.f32 %v1852, %v1927
    %v1931 = vmul.f32 %v1853, %v1928
    %v1932 = vld [vmem:[%s19] sm:$0xff]
    %v1933 = vld [vmem:[%s19 + $0x8] sm:$0xff]
    %v1934 = vld [vmem:[%s19 + $0x10] sm:$0xff]
    %v1935 = vld [vmem:[%s19 + $0x18] sm:$0xff]
    %v1936 = vld [vmem:[%s19 + $0x20] sm:$0xff]
    %v1937 = vld [vmem:[%s19 + $0x28] sm:$0xff]
    %v1938 = vld [vmem:[%s19 + $0x30] sm:$0xff]
    %v1939 = vld [vmem:[%s19 + $0x38] sm:$0xff]
    %vm1940 = vcmask 523264
    %v1942 = vsel %vm1940, %v1929, 0
    %v1945 = vsel %vm1940, %v1930, 0
    %v1948 = vsel %vm1940, %v1931, 0
    %1950 = vmatprep.subr.mxu0 0.0
    %1951 = vmatpush1.msra.mxu0 %v1932
    %1952 = vmatprep.subr.mxu0 0.0
    %1953 = vmatpush1.msra.mxu0 %v1933
    %1954 = vmatprep.subr.mxu0 0.0
    %1955 = vmatpush1.msra.mxu0 %v1934
    %1956 = vmatprep.subr.mxu0 0.0
    %1957 = vmatpush1.msra.mxu0 %v1935
    %1958 = vmatprep.subr.mxu0 0.0
    %1959 = vmatpush1.msra.mxu0 %v1936
    %1960 = vmatprep.subr.mxu0 0.0
    %1961 = vmatpush1.msra.mxu0 %v1937
    %1962 = vmatprep.subr.mxu0 0.0
    %1963 = vmatpush1.msra.mxu0 %v1938
    %1964 = vmatprep.subr.mxu0 0.0
    %1965 = vmatpush1.msra.mxu0 %v1939
    %1966 = vmatprep.subr.mxu0 0.0
    %1967 = vmatpush1.msra.mxu0 0.0
    %1968 = vmatprep.subr.mxu0 0.0
    %1969 = vmatpush1.msra.mxu0 0.0
    %1970 = vmatprep.subr.mxu0 0.0
    %1971 = vmatpush1.msra.mxu0 0.0
    %1972 = vmatprep.subr.mxu0 0.0
    %1973 = vmatpush1.msra.mxu0 0.0
    %1974 = vmatprep.subr.mxu0 0.0
    %1975 = vmatpush1.msra.mxu0 0.0
    %1976 = vmatprep.subr.mxu0 0.0
    %1977 = vmatpush1.msra.mxu0 0.0
    %1978 = vmatprep.subr.mxu0 0.0
    %1979 = vmatpush1.msra.mxu0 0.0
    %1980 = vmatprep.subr.mxu0 0.0
    %1981 = vmatpush1.msra.mxu0 0.0
    %1982 = vmatprep.subr.mxu0 0.0
    %1983 = vmatpush1.msra.mxu0 0.0
    %1984 = vmatprep.subr.mxu0 0.0
    %1985 = vmatpush1.msra.mxu0 0.0
    %1986 = vmatprep.subr.mxu0 0.0
    %1987 = vmatpush1.msra.mxu0 0.0
    %1988 = vmatprep.subr.mxu0 0.0
    %1989 = vmatpush1.msra.mxu0 0.0
    %1990 = vmatprep.subr.mxu0 0.0
    %1991 = vmatpush1.msra.mxu0 0.0
    %1992 = vmatprep.subr.mxu0 0.0
    %1993 = vmatpush1.msra.mxu0 0.0
    %1994 = vmatprep.subr.mxu0 0.0
    %1995 = vmatpush1.msra.mxu0 0.0
    %1996 = vmatprep.subr.mxu0 0.0
    %1997 = vmatpush1.msra.mxu0 0.0
    %1998 = vmatprep.subr.mxu0 0.0
    %1999 = vmatpush1.msra.mxu0 0.0
    %2000 = vmatprep.subr.mxu0 0.0
    %2001 = vmatpush1.msra.mxu0 0.0
    %2002 = vmatprep.subr.mxu0 0.0
    %2003 = vmatpush1.msra.mxu0 0.0
    %2004 = vmatprep.subr.mxu0 0.0
    %2005 = vmatpush1.msra.mxu0 0.0
    %2006 = vmatprep.subr.mxu0 0.0
    %2007 = vmatpush1.msra.mxu0 0.0
    %2008 = vmatprep.subr.mxu0 0.0
    %2009 = vmatpush1.msra.mxu0 0.0
    %2010 = vmatprep.subr.mxu0 0.0
    %2011 = vmatpush1.msra.mxu0 0.0
    %2012 = vmatprep.subr.mxu0 0.0
    %2013 = vmatpush1.msra.mxu0 0.0
    %2014 = vmatprep.mubr.f32.mxu0 0.0
    %2015 = vmatmul.mubr.f32.gmra.mrb[0].mxu0 %v1942
    %v2016 = vpop.f32.mrb[0].mxu0
    %v2017 = vadd.f32 0.0, %v2016
    %v2018 = vpop.f32.mrb[0].mxu0
    %2019 = vmatprep.mubr.f32.mxu0 0.0
    %2020 = vmatmul.mubr.f32.gmra.mrb[0].mxu0 %v1945
    %v2021 = vpop.f32.mrb[0].mxu0
    %v2022 = vadd.f32 0.0, %v2021
    %v2023 = vpop.f32.mrb[0].mxu0
    %2024 = vmatprep.mubr.f32.mxu0 0.0
    %2025 = vmatmul.mubr.f32.gmra.mrb[0].mxu0 %v1948
    %v2026 = vpop.f32.mrb[0].mxu0
    %v2027 = vadd.f32 0.0, %v2026
    %v2028 = vpop.f32.mrb[0].mxu0
    %2029 = vdwg.mxu0
    %v2030 = vadd.f32 %v1689, %v2017
    %v2031 = vadd.f32 %v1690, %v2022
    %v2032 = vadd.f32 %v1691, %v2027
    %v2033 = vld [vmem:[%s20] sm:$0x1]
    %v2035 = vlaneseq
    %v2036 = vshrl.u32 %v2035, 7
    %v2037 = vsub.s32 0, %v2036
    %v2038 = vrot.slane %v2033, %v2037
    %v2040 = vadd.f32 %v2030, %v2038
    %v2041 = vadd.f32 %v2031, %v2038
    %v2042 = vadd.f32 %v2032, %v2038
    %s2043 = scalar_lea.vmem %s10, 1
    %v2044 = vld [vmem:[%s2043] sm:$0x1]
    %s2045 = scalar_lea.vmem %s11, 1
    %v2046 = vld [vmem:[%s2045] sm:$0x1]
    %v2047 = vsel %vm368, %v2040, 0.0
    %2048 = vadd.xlane.f32.xlu0 %v2047
    %v2049 = vpop.xlane.xlu0 %2048
    %v2050 = vsel %vm368, %v2041, 0.0
    %2051 = vadd.xlane.f32.xlu0 %v2050
    %v2052 = vpop.xlane.xlu0 %2051
    %v2053 = vsel %vm444, %v2042, 0.0
    %2054 = vadd.xlane.f32.xlu0 %v2053
    %v2055 = vpop.xlane.xlu0 %2054
    %v2056 = vmul.f32 %v2049, %v375
    %v2057 = vmul.f32 %v2052, %v375
    %v2058 = vmul.f32 %v2055, %v375
    %v2059 = vsub.f32 %v2040, %v2056
    %v2060 = vsub.f32 %v2041, %v2057
    %v2061 = vsub.f32 %v2042, %v2058
    %v2062 = vmul.f32 %v2059, %v2059
    %v2063 = vmul.f32 %v2060, %v2060
    %v2064 = vmul.f32 %v2061, %v2061
    %v2065 = vsel %vm368, %v2062, 0.0
    %2066 = vadd.xlane.f32.xlu0 %v2065
    %v2067 = vpop.xlane.xlu0 %2066
    %v2068 = vsel %vm368, %v2063, 0.0
    %2069 = vadd.xlane.f32.xlu0 %v2068
    %v2070 = vpop.xlane.xlu0 %2069
    %v2071 = vsel %vm444, %v2064, 0.0
    %2072 = vadd.xlane.f32.xlu0 %v2071
    %v2073 = vpop.xlane.xlu0 %2072
    %v2074 = vmul.f32 %v2067, %v375
    %v2075 = vmul.f32 %v2070, %v375
    %v2076 = vmul.f32 %v2073, %v375
    %v2077 = vadd.f32 %v2074, 1e-05
    %v2078 = vadd.f32 %v2075, 1e-05
    %v2079 = vadd.f32 %v2076, 1e-05
    %v2080 = vrsqrt.pop %v2077
    %v2081 = vrsqrt.pop %v2078
    %v2082 = vrsqrt.pop %v2079
    %v2083 = vmul.f32 %v2059, %v2080
    %v2084 = vmul.f32 %v2060, %v2081
    %v2085 = vmul.f32 %v2061, %v2082
    %v2087 = vlaneseq
    %v2088 = vshrl.u32 %v2087, 7
    %v2089 = vsub.s32 0, %v2088
    %v2090 = vrot.slane %v2044, %v2089
    %v2092 = vmul.f32 %v2083, %v2090
    %v2093 = vmul.f32 %v2084, %v2090
    %v2094 = vmul.f32 %v2085, %v2090
    %v2096 = vlaneseq
    %v2097 = vshrl.u32 %v2096, 7
    %v2098 = vsub.s32 0, %v2097
    %v2099 = vrot.slane %v2046, %v2098
    %v2101 = vadd.f32 %v2092, %v2099
    %v2102 = vadd.f32 %v2093, %v2099
    %v2103 = vadd.f32 %v2094, %v2099
    %s2104 = scalar_lea.vmem %s12, 32
    %v2105 = vld [vmem:[%s2104] sm:$0xff]
    %v2106 = vld [vmem:[%s2104 + $0x8] sm:$0xff]
    %v2107 = vld [vmem:[%s2104 + $0x10] sm:$0xff]
    %v2108 = vld [vmem:[%s2104 + $0x18] sm:$0xff]
    %v2110 = vsel %vm368, %v2101, 0
    %v2113 = vsel %vm368, %v2102, 0
    %v2116 = vsel %vm368, %v2103, 0
    %2118 = vmatprep.subr.mxu0 0.0
    %2119 = vmatpush1.msra.mxu0 %v2105
    %2120 = vmatprep.subr.mxu0 0.0
    %2121 = vmatpush1.msra.mxu0 %v2106
    %2122 = vmatprep.subr.mxu0 0.0
    %2123 = vmatpush1.msra.mxu0 %v2107
    %2124 = vmatprep.subr.mxu0 0.0
    %2125 = vmatpush1.msra.mxu0 %v2108
    %2126 = vmatprep.subr.mxu0 0.0
    %2127 = vmatpush1.msra.mxu0 0.0
    %2128 = vmatprep.subr.mxu0 0.0
    %2129 = vmatpush1.msra.mxu0 0.0
    %2130 = vmatprep.subr.mxu0 0.0
    %2131 = vmatpush1.msra.mxu0 0.0
    %2132 = vmatprep.subr.mxu0 0.0
    %2133 = vmatpush1.msra.mxu0 0.0
    %2134 = vmatprep.subr.mxu0 0.0
    %2135 = vmatpush1.msra.mxu0 0.0
    %2136 = vmatprep.subr.mxu0 0.0
    %2137 = vmatpush1.msra.mxu0 0.0
    %2138 = vmatprep.subr.mxu0 0.0
    %2139 = vmatpush1.msra.mxu0 0.0
    %2140 = vmatprep.subr.mxu0 0.0
    %2141 = vmatpush1.msra.mxu0 0.0
    %2142 = vmatprep.subr.mxu0 0.0
    %2143 = vmatpush1.msra.mxu0 0.0
    %2144 = vmatprep.subr.mxu0 0.0
    %2145 = vmatpush1.msra.mxu0 0.0
    %2146 = vmatprep.subr.mxu0 0.0
    %2147 = vmatpush1.msra.mxu0 0.0
    %2148 = vmatprep.subr.mxu0 0.0
    %2149 = vmatpush1.msra.mxu0 0.0
    %2150 = vmatprep.subr.mxu0 0.0
    %2151 = vmatpush1.msra.mxu0 0.0
    %2152 = vmatprep.subr.mxu0 0.0
    %2153 = vmatpush1.msra.mxu0 0.0
    %2154 = vmatprep.subr.mxu0 0.0
    %2155 = vmatpush1.msra.mxu0 0.0
    %2156 = vmatprep.subr.mxu0 0.0
    %2157 = vmatpush1.msra.mxu0 0.0
    %2158 = vmatprep.subr.mxu0 0.0
    %2159 = vmatpush1.msra.mxu0 0.0
    %2160 = vmatprep.subr.mxu0 0.0
    %2161 = vmatpush1.msra.mxu0 0.0
    %2162 = vmatprep.subr.mxu0 0.0
    %2163 = vmatpush1.msra.mxu0 0.0
    %2164 = vmatprep.subr.mxu0 0.0
    %2165 = vmatpush1.msra.mxu0 0.0
    %2166 = vmatprep.subr.mxu0 0.0
    %2167 = vmatpush1.msra.mxu0 0.0
    %2168 = vmatprep.subr.mxu0 0.0
    %2169 = vmatpush1.msra.mxu0 0.0
    %2170 = vmatprep.subr.mxu0 0.0
    %2171 = vmatpush1.msra.mxu0 0.0
    %2172 = vmatprep.subr.mxu0 0.0
    %2173 = vmatpush1.msra.mxu0 0.0
    %2174 = vmatprep.subr.mxu0 0.0
    %2175 = vmatpush1.msra.mxu0 0.0
    %2176 = vmatprep.subr.mxu0 0.0
    %2177 = vmatpush1.msra.mxu0 0.0
    %2178 = vmatprep.subr.mxu0 0.0
    %2179 = vmatpush1.msra.mxu0 0.0
    %2180 = vmatprep.subr.mxu0 0.0
    %2181 = vmatpush1.msra.mxu0 0.0
    %2182 = vmatprep.mubr.f32.mxu0 0.0
    %2183 = vmatmul.mubr.f32.gmra.mrb[0].mxu0 %v2110
    %v2184 = vpop.f32.mrb[0].mxu0
    %v2185 = vadd.f32 0.0, %v2184
    %v2186 = vpop.f32.mrb[0].mxu0
    %2187 = vmatprep.mubr.f32.mxu0 0.0
    %2188 = vmatmul.mubr.f32.gmra.mrb[0].mxu0 %v2113
    %v2189 = vpop.f32.mrb[0].mxu0
    %v2190 = vadd.f32 0.0, %v2189
    %v2191 = vpop.f32.mrb[0].mxu0
    %2192 = vmatprep.mubr.f32.mxu0 0.0
    %2193 = vmatmul.mubr.f32.gmra.mrb[0].mxu0 %v2116
    %v2194 = vpop.f32.mrb[0].mxu0
    %v2195 = vadd.f32 0.0, %v2194
    %v2196 = vpop.f32.mrb[0].mxu0
    %2197 = vdwg.mxu0
    %v2198 = vmul.f32 %v2185, 0.35355338
    %v2199 = vmul.f32 %v2190, 0.35355338
    %v2200 = vmul.f32 %v2195, 0.35355338
    %2204 = vrot.lane.b32.xlu0 %v2185, 96
    %v2205 = vpop.permute.xlu0 %2204
    %2206 = vrot.lane.b32.xlu0 %v2190, 96
    %v2207 = vpop.permute.xlu0 %2206
    %2208 = vrot.lane.b32.xlu0 %v2195, 96
    %v2209 = vpop.permute.xlu0 %2208
    %v2211 = vsel %vm601, %v2198, 0
    %v2214 = vsel %vm601, %v2199, 0
    %v2217 = vsel %vm601, %v2200, 0
    %v2219 = vsel %vm601, %v2205, 0
    %v2221 = vsel %vm601, %v2207, 0
    %v2223 = vsel %vm601, %v2209, 0
    %2225 = vmatprep.subr.mxu0 0.0
    %2226 = vmatpush1.xpose.msra.mxu0 %v2219
    %2227 = vmatprep.subr.mxu0 0.0
    %2228 = vmatpush1.xpose.msra.mxu0 %v2221
    %2229 = vmatprep.subr.mxu0 0.0
    %2230 = vmatpush1.xpose.msra.mxu0 %v2223
    %2231 = vmatprep.subr.mxu0 0.0
    %2232 = vmatpush1.xpose.msra.mxu0 0.0
    %2233 = vmatprep.subr.mxu0 0.0
    %2234 = vmatpush1.xpose.msra.mxu0 0.0
    %2235 = vmatprep.subr.mxu0 0.0
    %2236 = vmatpush1.xpose.msra.mxu0 0.0
    %2237 = vmatprep.subr.mxu0 0.0
    %2238 = vmatpush1.xpose.msra.mxu0 0.0
    %2239 = vmatprep.subr.mxu0 0.0
    %2240 = vmatpush1.xpose.msra.mxu0 0.0
    %2241 = vmatprep.subr.mxu0 0.0
    %2242 = vmatpush1.xpose.msra.mxu0 0.0
    %2243 = vmatprep.subr.mxu0 0.0
    %2244 = vmatpush1.xpose.msra.mxu0 0.0
    %2245 = vmatprep.subr.mxu0 0.0
    %2246 = vmatpush1.xpose.msra.mxu0 0.0
    %2247 = vmatprep.subr.mxu0 0.0
    %2248 = vmatpush1.xpose.msra.mxu0 0.0
    %2249 = vmatprep.subr.mxu0 0.0
    %2250 = vmatpush1.xpose.msra.mxu0 0.0
    %2251 = vmatprep.subr.mxu0 0.0
    %2252 = vmatpush1.xpose.msra.mxu0 0.0
    %2253 = vmatprep.subr.mxu0 0.0
    %2254 = vmatpush1.xpose.msra.mxu0 0.0
    %2255 = vmatprep.subr.mxu0 0.0
    %2256 = vmatpush1.xpose.msra.mxu0 0.0
    %2257 = vmatprep.subr.mxu0 0.0
    %2258 = vmatpush1.xpose.msra.mxu0 0.0
    %2259 = vmatprep.subr.mxu0 0.0
    %2260 = vmatpush1.xpose.msra.mxu0 0.0
    %2261 = vmatprep.subr.mxu0 0.0
    %2262 = vmatpush1.xpose.msra.mxu0 0.0
    %2263 = vmatprep.subr.mxu0 0.0
    %2264 = vmatpush1.xpose.msra.mxu0 0.0
    %2265 = vmatprep.subr.mxu0 0.0
    %2266 = vmatpush1.xpose.msra.mxu0 0.0
    %2267 = vmatprep.subr.mxu0 0.0
    %2268 = vmatpush1.xpose.msra.mxu0 0.0
    %2269 = vmatprep.subr.mxu0 0.0
    %2270 = vmatpush1.xpose.msra.mxu0 0.0
    %2271 = vmatprep.subr.mxu0 0.0
    %2272 = vmatpush1.xpose.msra.mxu0 0.0
    %2273 = vmatprep.subr.mxu0 0.0
    %2274 = vmatpush1.xpose.msra.mxu0 0.0
    %2275 = vmatprep.subr.mxu0 0.0
    %2276 = vmatpush1.xpose.msra.mxu0 0.0
    %2277 = vmatprep.subr.mxu0 0.0
    %2278 = vmatpush1.xpose.msra.mxu0 0.0
    %2279 = vmatprep.subr.mxu0 0.0
    %2280 = vmatpush1.xpose.msra.mxu0 0.0
    %2281 = vmatprep.subr.mxu0 0.0
    %2282 = vmatpush1.xpose.msra.mxu0 0.0
    %2283 = vmatprep.subr.mxu0 0.0
    %2284 = vmatpush1.xpose.msra.mxu0 0.0
    %2285 = vmatprep.subr.mxu0 0.0
    %2286 = vmatpush1.xpose.msra.mxu0 0.0
    %2287 = vmatprep.subr.mxu0 0.0
    %2288 = vmatpush1.xpose.msra.mxu0 0.0
    %2289 = vmatprep.mubr.f32.mxu0 0.0
    %2290 = vmatmul.mubr.f32.gmra.mrb[0].mxu0 %v2211
    %v2291 = vpop.f32.mrb[0].mxu0
    %v2292 = vadd.f32 %v433, %v2291
    %v2293 = vpop.f32.mrb[0].mxu0
    %2294 = vmatprep.mubr.f32.mxu0 0.0
    %2295 = vmatmul.mubr.f32.gmra.mrb[0].mxu0 %v2214
    %v2296 = vpop.f32.mrb[0].mxu0
    %v2297 = vadd.f32 %v434, %v2296
    %v2298 = vpop.f32.mrb[0].mxu0
    %2299 = vmatprep.mubr.f32.mxu0 0.0
    %2300 = vmatmul.mubr.f32.gmra.mrb[0].mxu0 %v2217
    %v2301 = vpop.f32.mrb[0].mxu0
    %v2302 = vadd.f32 %v435, %v2301
    %v2303 = vpop.f32.mrb[0].mxu0
    %2304 = vdwg.mxu0
    %v2305 = vsel %vm697, %v2292, -inf
    %2306 = vmax.xlane.f32.xlu0 %v2305
    %v2307 = vpop.xlane.xlu0 %2306
    %v2308 = vsel %vm697, %v2297, -inf
    %2309 = vmax.xlane.f32.xlu0 %v2308
    %v2310 = vpop.xlane.xlu0 %2309
    %v2311 = vsel %vm704, %v2302, -inf
    %2312 = vmax.xlane.f32.xlu0 %v2311
    %v2313 = vpop.xlane.xlu0 %2312
    %v2314 = vsub.f32 %v2292, %v2307
    %v2315 = vsub.f32 %v2297, %v2310
    %v2316 = vsub.f32 %v2302, %v2313
    %v2317 = vmul.f32 %v2314, 1.442695
    %v2318 = vpow.pop %v2317
    %v2319 = vmul.f32 %v2315, 1.442695
    %v2320 = vpow.pop %v2319
    %v2321 = vmul.f32 %v2316, 1.442695
    %v2322 = vpow.pop %v2321
    %v2323 = vsel %vm697, %v2318, 0.0
    %2324 = vadd.xlane.f32.xlu0 %v2323
    %v2325 = vpop.xlane.xlu0 %2324
    %v2326 = vsel %vm697, %v2320, 0.0
    %2327 = vadd.xlane.f32.xlu0 %v2326
    %v2328 = vpop.xlane.xlu0 %2327
    %v2329 = vsel %vm704, %v2322, 0.0
    %2330 = vadd.xlane.f32.xlu0 %v2329
    %v2331 = vpop.xlane.xlu0 %2330
    %v2332 = vrcp.pop %v2325
    %v2333 = vrcp.pop %v2328
    %v2334 = vrcp.pop %v2331
    %v2335 = vmul.f32 %v2318, %v2332
    %v2336 = vmul.f32 %v2320, %v2333
    %v2337 = vmul.f32 %v2322, %v2334
    %2338 = vrot.lane.b32.xlu0 %v2185, 64
    %v2339 = vpop.permute.xlu0 %2338
    %2340 = vrot.lane.b32.xlu0 %v2190, 64
    %v2341 = vpop.permute.xlu0 %2340
    %2342 = vrot.lane.b32.xlu0 %v2195, 64
    %v2343 = vpop.permute.xlu0 %2342
    %v2347 = vsel %vm697, %v2335, 0
    %v2350 = vsel %vm697, %v2336, 0
    %v2353 = vsel %vm697, %v2337, 0
    %v2355 = vsel %vm749, %v2343, 0
    %2357 = vmatprep.subr.mxu0 0.0
    %2358 = vmatpush1.msra.mxu0 %v2339
    %2359 = vmatprep.subr.mxu0 0.0
    %2360 = vmatpush1.msra.mxu0 %v2341
    %2361 = vmatprep.subr.mxu0 0.0
    %2362 = vmatpush1.msra.mxu0 %v2355
    %2363 = vmatprep.subr.mxu0 0.0
    %2364 = vmatpush1.msra.mxu0 0.0
    %2365 = vmatprep.subr.mxu0 0.0
    %2366 = vmatpush1.msra.mxu0 0.0
    %2367 = vmatprep.subr.mxu0 0.0
    %2368 = vmatpush1.msra.mxu0 0.0
    %2369 = vmatprep.subr.mxu0 0.0
    %2370 = vmatpush1.msra.mxu0 0.0
    %2371 = vmatprep.subr.mxu0 0.0
    %2372 = vmatpush1.msra.mxu0 0.0
    %2373 = vmatprep.subr.mxu0 0.0
    %2374 = vmatpush1.msra.mxu0 0.0
    %2375 = vmatprep.subr.mxu0 0.0
    %2376 = vmatpush1.msra.mxu0 0.0
    %2377 = vmatprep.subr.mxu0 0.0
    %2378 = vmatpush1.msra.mxu0 0.0
    %2379 = vmatprep.subr.mxu0 0.0
    %2380 = vmatpush1.msra.mxu0 0.0
    %2381 = vmatprep.subr.mxu0 0.0
    %2382 = vmatpush1.msra.mxu0 0.0
    %2383 = vmatprep.subr.mxu0 0.0
    %2384 = vmatpush1.msra.mxu0 0.0
    %2385 = vmatprep.subr.mxu0 0.0
    %2386 = vmatpush1.msra.mxu0 0.0
    %2387 = vmatprep.subr.mxu0 0.0
    %2388 = vmatpush1.msra.mxu0 0.0
    %2389 = vmatprep.subr.mxu0 0.0
    %2390 = vmatpush1.msra.mxu0 0.0
    %2391 = vmatprep.subr.mxu0 0.0
    %2392 = vmatpush1.msra.mxu0 0.0
    %2393 = vmatprep.subr.mxu0 0.0
    %2394 = vmatpush1.msra.mxu0 0.0
    %2395 = vmatprep.subr.mxu0 0.0
    %2396 = vmatpush1.msra.mxu0 0.0
    %2397 = vmatprep.subr.mxu0 0.0
    %2398 = vmatpush1.msra.mxu0 0.0
    %2399 = vmatprep.subr.mxu0 0.0
    %2400 = vmatpush1.msra.mxu0 0.0
    %2401 = vmatprep.subr.mxu0 0.0
    %2402 = vmatpush1.msra.mxu0 0.0
    %2403 = vmatprep.subr.mxu0 0.0
    %2404 = vmatpush1.msra.mxu0 0.0
    %2405 = vmatprep.subr.mxu0 0.0
    %2406 = vmatpush1.msra.mxu0 0.0
    %2407 = vmatprep.subr.mxu0 0.0
    %2408 = vmatpush1.msra.mxu0 0.0
    %2409 = vmatprep.subr.mxu0 0.0
    %2410 = vmatpush1.msra.mxu0 0.0
    %2411 = vmatprep.subr.mxu0 0.0
    %2412 = vmatpush1.msra.mxu0 0.0
    %2413 = vmatprep.subr.mxu0 0.0
    %2414 = vmatpush1.msra.mxu0 0.0
    %2415 = vmatprep.subr.mxu0 0.0
    %2416 = vmatpush1.msra.mxu0 0.0
    %2417 = vmatprep.subr.mxu0 0.0
    %2418 = vmatpush1.msra.mxu0 0.0
    %2419 = vmatprep.subr.mxu0 0.0
    %2420 = vmatpush1.msra.mxu0 0.0
    %2421 = vmatprep.mubr.f32.mxu0 0.0
    %2422 = vmatmul.mubr.f32.gmra.mrb[0].mxu0 %v2347
    %v2423 = vpop.f32.mrb[0].mxu0
    %v2424 = vadd.f32 0.0, %v2423
    %v2425 = vpop.f32.mrb[0].mxu0
    %2426 = vmatprep.mubr.f32.mxu0 0.0
    %2427 = vmatmul.mubr.f32.gmra.mrb[0].mxu0 %v2350
    %v2428 = vpop.f32.mrb[0].mxu0
    %v2429 = vadd.f32 0.0, %v2428
    %v2430 = vpop.f32.mrb[0].mxu0
    %2431 = vmatprep.mubr.f32.mxu0 0.0
    %2432 = vmatmul.mubr.f32.gmra.mrb[0].mxu0 %v2353
    %v2433 = vpop.f32.mrb[0].mxu0
    %v2434 = vadd.f32 0.0, %v2433
    %v2435 = vpop.f32.mrb[0].mxu0
    %2436 = vdwg.mxu0
    %2437 = vrot.lane.b32.xlu0 %v2198, 120
    %v2438 = vpop.permute.xlu0 %2437
    %2439 = vrot.lane.b32.xlu0 %v2199, 120
    %v2440 = vpop.permute.xlu0 %2439
    %2441 = vrot.lane.b32.xlu0 %v2200, 120
    %v2442 = vpop.permute.xlu0 %2441
    %2443 = vrot.lane.b32.xlu0 %v2185, 88
    %v2444 = vpop.permute.xlu0 %2443
    %2445 = vrot.lane.b32.xlu0 %v2190, 88
    %v2446 = vpop.permute.xlu0 %2445
    %2447 = vrot.lane.b32.xlu0 %v2195, 88
    %v2448 = vpop.permute.xlu0 %2447
    %v2449 = vsel %vm601, %v2438, 0
    %v2451 = vsel %vm601, %v2440, 0
    %v2453 = vsel %vm601, %v2442, 0
    %v2455 = vsel %vm601, %v2444, 0
    %v2457 = vsel %vm601, %v2446, 0
    %v2459 = vsel %vm601, %v2448, 0
    %2461 = vmatprep.subr.mxu0 0.0
    %2462 = vmatpush1.xpose.msra.mxu0 %v2455
    %2463 = vmatprep.subr.mxu0 0.0
    %2464 = vmatpush1.xpose.msra.mxu0 %v2457
    %2465 = vmatprep.subr.mxu0 0.0
    %2466 = vmatpush1.xpose.msra.mxu0 %v2459
    %2467 = vmatprep.subr.mxu0 0.0
    %2468 = vmatpush1.xpose.msra.mxu0 0.0
    %2469 = vmatprep.subr.mxu0 0.0
    %2470 = vmatpush1.xpose.msra.mxu0 0.0
    %2471 = vmatprep.subr.mxu0 0.0
    %2472 = vmatpush1.xpose.msra.mxu0 0.0
    %2473 = vmatprep.subr.mxu0 0.0
    %2474 = vmatpush1.xpose.msra.mxu0 0.0
    %2475 = vmatprep.subr.mxu0 0.0
    %2476 = vmatpush1.xpose.msra.mxu0 0.0
    %2477 = vmatprep.subr.mxu0 0.0
    %2478 = vmatpush1.xpose.msra.mxu0 0.0
    %2479 = vmatprep.subr.mxu0 0.0
    %2480 = vmatpush1.xpose.msra.mxu0 0.0
    %2481 = vmatprep.subr.mxu0 0.0
    %2482 = vmatpush1.xpose.msra.mxu0 0.0
    %2483 = vmatprep.subr.mxu0 0.0
    %2484 = vmatpush1.xpose.msra.mxu0 0.0
    %2485 = vmatprep.subr.mxu0 0.0
    %2486 = vmatpush1.xpose.msra.mxu0 0.0
    %2487 = vmatprep.subr.mxu0 0.0
    %2488 = vmatpush1.xpose.msra.mxu0 0.0
    %2489 = vmatprep.subr.mxu0 0.0
    %2490 = vmatpush1.xpose.msra.mxu0 0.0
    %2491 = vmatprep.subr.mxu0 0.0
    %2492 = vmatpush1.xpose.msra.mxu0 0.0
    %2493 = vmatprep.subr.mxu0 0.0
    %2494 = vmatpush1.xpose.msra.mxu0 0.0
    %2495 = vmatprep.subr.mxu0 0.0
    %2496 = vmatpush1.xpose.msra.mxu0 0.0
    %2497 = vmatprep.subr.mxu0 0.0
    %2498 = vmatpush1.xpose.msra.mxu0 0.0
    %2499 = vmatprep.subr.mxu0 0.0
    %2500 = vmatpush1.xpose.msra.mxu0 0.0
    %2501 = vmatprep.subr.mxu0 0.0
    %2502 = vmatpush1.xpose.msra.mxu0 0.0
    %2503 = vmatprep.subr.mxu0 0.0
    %2504 = vmatpush1.xpose.msra.mxu0 0.0
    %2505 = vmatprep.subr.mxu0 0.0
    %2506 = vmatpush1.xpose.msra.mxu0 0.0
    %2507 = vmatprep.subr.mxu0 0.0
    %2508 = vmatpush1.xpose.msra.mxu0 0.0
    %2509 = vmatprep.subr.mxu0 0.0
    %2510 = vmatpush1.xpose.msra.mxu0 0.0
    %2511 = vmatprep.subr.mxu0 0.0
    %2512 = vmatpush1.xpose.msra.mxu0 0.0
    %2513 = vmatprep.subr.mxu0 0.0
    %2514 = vmatpush1.xpose.msra.mxu0 0.0
    %2515 = vmatprep.subr.mxu0 0.0
    %2516 = vmatpush1.xpose.msra.mxu0 0.0
    %2517 = vmatprep.subr.mxu0 0.0
    %2518 = vmatpush1.xpose.msra.mxu0 0.0
    %2519 = vmatprep.subr.mxu0 0.0
    %2520 = vmatpush1.xpose.msra.mxu0 0.0
    %2521 = vmatprep.subr.mxu0 0.0
    %2522 = vmatpush1.xpose.msra.mxu0 0.0
    %2523 = vmatprep.subr.mxu0 0.0
    %2524 = vmatpush1.xpose.msra.mxu0 0.0
    %2525 = vmatprep.mubr.f32.mxu0 0.0
    %2526 = vmatmul.mubr.f32.gmra.mrb[0].mxu0 %v2449
    %v2527 = vpop.f32.mrb[0].mxu0
    %v2528 = vadd.f32 %v433, %v2527
    %v2529 = vpop.f32.mrb[0].mxu0
    %2530 = vmatprep.mubr.f32.mxu0 0.0
    %2531 = vmatmul.mubr.f32.gmra.mrb[0].mxu0 %v2451
    %v2532 = vpop.f32.mrb[0].mxu0
    %v2533 = vadd.f32 %v434, %v2532
    %v2534 = vpop.f32.mrb[0].mxu0
    %2535 = vmatprep.mubr.f32.mxu0 0.0
    %2536 = vmatmul.mubr.f32.gmra.mrb[0].mxu0 %v2453
    %v2537 = vpop.f32.mrb[0].mxu0
    %v2538 = vadd.f32 %v435, %v2537
    %v2539 = vpop.f32.mrb[0].mxu0
    %2540 = vdwg.mxu0
    %v2541 = vsel %vm697, %v2528, -inf
    %2542 = vmax.xlane.f32.xlu0 %v2541
    %v2543 = vpop.xlane.xlu0 %2542
    %v2544 = vsel %vm697, %v2533, -inf
    %2545 = vmax.xlane.f32.xlu0 %v2544
    %v2546 = vpop.xlane.xlu0 %2545
    %v2547 = vsel %vm704, %v2538, -inf
    %2548 = vmax.xlane.f32.xlu0 %v2547
    %v2549 = vpop.xlane.xlu0 %2548
    %v2550 = vsub.f32 %v2528, %v2543
    %v2551 = vsub.f32 %v2533, %v2546
    %v2552 = vsub.f32 %v2538, %v2549
    %v2553 = vmul.f32 %v2550, 1.442695
    %v2554 = vpow.pop %v2553
    %v2555 = vmul.f32 %v2551, 1.442695
    %v2556 = vpow.pop %v2555
    %v2557 = vmul.f32 %v2552, 1.442695
    %v2558 = vpow.pop %v2557
    %v2559 = vsel %vm697, %v2554, 0.0
    %2560 = vadd.xlane.f32.xlu0 %v2559
    %v2561 = vpop.xlane.xlu0 %2560
    %v2562 = vsel %vm697, %v2556, 0.0
    %2563 = vadd.xlane.f32.xlu0 %v2562
    %v2564 = vpop.xlane.xlu0 %2563
    %v2565 = vsel %vm704, %v2558, 0.0
    %2566 = vadd.xlane.f32.xlu0 %v2565
    %v2567 = vpop.xlane.xlu0 %2566
    %v2568 = vrcp.pop %v2561
    %v2569 = vrcp.pop %v2564
    %v2570 = vrcp.pop %v2567
    %v2571 = vmul.f32 %v2554, %v2568
    %v2572 = vmul.f32 %v2556, %v2569
    %v2573 = vmul.f32 %v2558, %v2570
    %2574 = vrot.lane.b32.xlu0 %v2185, 56
    %v2575 = vpop.permute.xlu0 %2574
    %2576 = vrot.lane.b32.xlu0 %v2190, 56
    %v2577 = vpop.permute.xlu0 %2576
    %2578 = vrot.lane.b32.xlu0 %v2195, 56
    %v2579 = vpop.permute.xlu0 %2578
    %v2583 = vsel %vm697, %v2571, 0
    %v2586 = vsel %vm697, %v2572, 0
    %v2589 = vsel %vm697, %v2573, 0
    %v2591 = vsel %vm749, %v2579, 0
    %2593 = vmatprep.subr.mxu0 0.0
    %2594 = vmatpush1.msra.mxu0 %v2575
    %2595 = vmatprep.subr.mxu0 0.0
    %2596 = vmatpush1.msra.mxu0 %v2577
    %2597 = vmatprep.subr.mxu0 0.0
    %2598 = vmatpush1.msra.mxu0 %v2591
    %2599 = vmatprep.subr.mxu0 0.0
    %2600 = vmatpush1.msra.mxu0 0.0
    %2601 = vmatprep.subr.mxu0 0.0
    %2602 = vmatpush1.msra.mxu0 0.0
    %2603 = vmatprep.subr.mxu0 0.0
    %2604 = vmatpush1.msra.mxu0 0.0
    %2605 = vmatprep.subr.mxu0 0.0
    %2606 = vmatpush1.msra.mxu0 0.0
    %2607 = vmatprep.subr.mxu0 0.0
    %2608 = vmatpush1.msra.mxu0 0.0
    %2609 = vmatprep.subr.mxu0 0.0
    %2610 = vmatpush1.msra.mxu0 0.0
    %2611 = vmatprep.subr.mxu0 0.0
    %2612 = vmatpush1.msra.mxu0 0.0
    %2613 = vmatprep.subr.mxu0 0.0
    %2614 = vmatpush1.msra.mxu0 0.0
    %2615 = vmatprep.subr.mxu0 0.0
    %2616 = vmatpush1.msra.mxu0 0.0
    %2617 = vmatprep.subr.mxu0 0.0
    %2618 = vmatpush1.msra.mxu0 0.0
    %2619 = vmatprep.subr.mxu0 0.0
    %2620 = vmatpush1.msra.mxu0 0.0
    %2621 = vmatprep.subr.mxu0 0.0
    %2622 = vmatpush1.msra.mxu0 0.0
    %2623 = vmatprep.subr.mxu0 0.0
    %2624 = vmatpush1.msra.mxu0 0.0
    %2625 = vmatprep.subr.mxu0 0.0
    %2626 = vmatpush1.msra.mxu0 0.0
    %2627 = vmatprep.subr.mxu0 0.0
    %2628 = vmatpush1.msra.mxu0 0.0
    %2629 = vmatprep.subr.mxu0 0.0
    %2630 = vmatpush1.msra.mxu0 0.0
    %2631 = vmatprep.subr.mxu0 0.0
    %2632 = vmatpush1.msra.mxu0 0.0
    %2633 = vmatprep.subr.mxu0 0.0
    %2634 = vmatpush1.msra.mxu0 0.0
    %2635 = vmatprep.subr.mxu0 0.0
    %2636 = vmatpush1.msra.mxu0 0.0
    %2637 = vmatprep.subr.mxu0 0.0
    %2638 = vmatpush1.msra.mxu0 0.0
    %2639 = vmatprep.subr.mxu0 0.0
    %2640 = vmatpush1.msra.mxu0 0.0
    %2641 = vmatprep.subr.mxu0 0.0
    %2642 = vmatpush1.msra.mxu0 0.0
    %2643 = vmatprep.subr.mxu0 0.0
    %2644 = vmatpush1.msra.mxu0 0.0
    %2645 = vmatprep.subr.mxu0 0.0
    %2646 = vmatpush1.msra.mxu0 0.0
    %2647 = vmatprep.subr.mxu0 0.0
    %2648 = vmatpush1.msra.mxu0 0.0
    %2649 = vmatprep.subr.mxu0 0.0
    %2650 = vmatpush1.msra.mxu0 0.0
    %2651 = vmatprep.subr.mxu0 0.0
    %2652 = vmatpush1.msra.mxu0 0.0
    %2653 = vmatprep.subr.mxu0 0.0
    %2654 = vmatpush1.msra.mxu0 0.0
    %2655 = vmatprep.subr.mxu0 0.0
    %2656 = vmatpush1.msra.mxu0 0.0
    %2657 = vmatprep.mubr.f32.mxu0 0.0
    %2658 = vmatmul.mubr.f32.gmra.mrb[0].mxu0 %v2583
    %v2659 = vpop.f32.mrb[0].mxu0
    %v2660 = vadd.f32 0.0, %v2659
    %v2661 = vpop.f32.mrb[0].mxu0
    %2662 = vmatprep.mubr.f32.mxu0 0.0
    %2663 = vmatmul.mubr.f32.gmra.mrb[0].mxu0 %v2586
    %v2664 = vpop.f32.mrb[0].mxu0
    %v2665 = vadd.f32 0.0, %v2664
    %v2666 = vpop.f32.mrb[0].mxu0
    %2667 = vmatprep.mubr.f32.mxu0 0.0
    %2668 = vmatmul.mubr.f32.gmra.mrb[0].mxu0 %v2589
    %v2669 = vpop.f32.mrb[0].mxu0
    %v2670 = vadd.f32 0.0, %v2669
    %v2671 = vpop.f32.mrb[0].mxu0
    %2672 = vdwg.mxu0
    %2673 = vrot.lane.b32.xlu0 %v2198, 112
    %v2674 = vpop.permute.xlu0 %2673
    %2675 = vrot.lane.b32.xlu0 %v2199, 112
    %v2676 = vpop.permute.xlu0 %2675
    %2677 = vrot.lane.b32.xlu0 %v2200, 112
    %v2678 = vpop.permute.xlu0 %2677
    %2679 = vrot.lane.b32.xlu0 %v2185, 80
    %v2680 = vpop.permute.xlu0 %2679
    %2681 = vrot.lane.b32.xlu0 %v2190, 80
    %v2682 = vpop.permute.xlu0 %2681
    %2683 = vrot.lane.b32.xlu0 %v2195, 80
    %v2684 = vpop.permute.xlu0 %2683
    %v2685 = vsel %vm601, %v2674, 0
    %v2687 = vsel %vm601, %v2676, 0
    %v2689 = vsel %vm601, %v2678, 0
    %v2691 = vsel %vm601, %v2680, 0
    %v2693 = vsel %vm601, %v2682, 0
    %v2695 = vsel %vm601, %v2684, 0
    %2697 = vmatprep.subr.mxu0 0.0
    %2698 = vmatpush1.xpose.msra.mxu0 %v2691
    %2699 = vmatprep.subr.mxu0 0.0
    %2700 = vmatpush1.xpose.msra.mxu0 %v2693
    %2701 = vmatprep.subr.mxu0 0.0
    %2702 = vmatpush1.xpose.msra.mxu0 %v2695
    %2703 = vmatprep.subr.mxu0 0.0
    %2704 = vmatpush1.xpose.msra.mxu0 0.0
    %2705 = vmatprep.subr.mxu0 0.0
    %2706 = vmatpush1.xpose.msra.mxu0 0.0
    %2707 = vmatprep.subr.mxu0 0.0
    %2708 = vmatpush1.xpose.msra.mxu0 0.0
    %2709 = vmatprep.subr.mxu0 0.0
    %2710 = vmatpush1.xpose.msra.mxu0 0.0
    %2711 = vmatprep.subr.mxu0 0.0
    %2712 = vmatpush1.xpose.msra.mxu0 0.0
    %2713 = vmatprep.subr.mxu0 0.0
    %2714 = vmatpush1.xpose.msra.mxu0 0.0
    %2715 = vmatprep.subr.mxu0 0.0
    %2716 = vmatpush1.xpose.msra.mxu0 0.0
    %2717 = vmatprep.subr.mxu0 0.0
    %2718 = vmatpush1.xpose.msra.mxu0 0.0
    %2719 = vmatprep.subr.mxu0 0.0
    %2720 = vmatpush1.xpose.msra.mxu0 0.0
    %2721 = vmatprep.subr.mxu0 0.0
    %2722 = vmatpush1.xpose.msra.mxu0 0.0
    %2723 = vmatprep.subr.mxu0 0.0
    %2724 = vmatpush1.xpose.msra.mxu0 0.0
    %2725 = vmatprep.subr.mxu0 0.0
    %2726 = vmatpush1.xpose.msra.mxu0 0.0
    %2727 = vmatprep.subr.mxu0 0.0
    %2728 = vmatpush1.xpose.msra.mxu0 0.0
    %2729 = vmatprep.subr.mxu0 0.0
    %2730 = vmatpush1.xpose.msra.mxu0 0.0
    %2731 = vmatprep.subr.mxu0 0.0
    %2732 = vmatpush1.xpose.msra.mxu0 0.0
    %2733 = vmatprep.subr.mxu0 0.0
    %2734 = vmatpush1.xpose.msra.mxu0 0.0
    %2735 = vmatprep.subr.mxu0 0.0
    %2736 = vmatpush1.xpose.msra.mxu0 0.0
    %2737 = vmatprep.subr.mxu0 0.0
    %2738 = vmatpush1.xpose.msra.mxu0 0.0
    %2739 = vmatprep.subr.mxu0 0.0
    %2740 = vmatpush1.xpose.msra.mxu0 0.0
    %2741 = vmatprep.subr.mxu0 0.0
    %2742 = vmatpush1.xpose.msra.mxu0 0.0
    %2743 = vmatprep.subr.mxu0 0.0
    %2744 = vmatpush1.xpose.msra.mxu0 0.0
    %2745 = vmatprep.subr.mxu0 0.0
    %2746 = vmatpush1.xpose.msra.mxu0 0.0
    %2747 = vmatprep.subr.mxu0 0.0
    %2748 = vmatpush1.xpose.msra.mxu0 0.0
    %2749 = vmatprep.subr.mxu0 0.0
    %2750 = vmatpush1.xpose.msra.mxu0 0.0
    %2751 = vmatprep.subr.mxu0 0.0
    %2752 = vmatpush1.xpose.msra.mxu0 0.0
    %2753 = vmatprep.subr.mxu0 0.0
    %2754 = vmatpush1.xpose.msra.mxu0 0.0
    %2755 = vmatprep.subr.mxu0 0.0
    %2756 = vmatpush1.xpose.msra.mxu0 0.0
    %2757 = vmatprep.subr.mxu0 0.0
    %2758 = vmatpush1.xpose.msra.mxu0 0.0
    %2759 = vmatprep.subr.mxu0 0.0
    %2760 = vmatpush1.xpose.msra.mxu0 0.0
    %2761 = vmatprep.mubr.f32.mxu0 0.0
    %2762 = vmatmul.mubr.f32.gmra.mrb[0].mxu0 %v2685
    %v2763 = vpop.f32.mrb[0].mxu0
    %v2764 = vadd.f32 %v433, %v2763
    %v2765 = vpop.f32.mrb[0].mxu0
    %2766 = vmatprep.mubr.f32.mxu0 0.0
    %2767 = vmatmul.mubr.f32.gmra.mrb[0].mxu0 %v2687
    %v2768 = vpop.f32.mrb[0].mxu0
    %v2769 = vadd.f32 %v434, %v2768
    %v2770 = vpop.f32.mrb[0].mxu0
    %2771 = vmatprep.mubr.f32.mxu0 0.0
    %2772 = vmatmul.mubr.f32.gmra.mrb[0].mxu0 %v2689
    %v2773 = vpop.f32.mrb[0].mxu0
    %v2774 = vadd.f32 %v435, %v2773
    %v2775 = vpop.f32.mrb[0].mxu0
    %2776 = vdwg.mxu0
    %v2777 = vsel %vm697, %v2764, -inf
    %2778 = vmax.xlane.f32.xlu0 %v2777
    %v2779 = vpop.xlane.xlu0 %2778
    %v2780 = vsel %vm697, %v2769, -inf
    %2781 = vmax.xlane.f32.xlu0 %v2780
    %v2782 = vpop.xlane.xlu0 %2781
    %v2783 = vsel %vm704, %v2774, -inf
    %2784 = vmax.xlane.f32.xlu0 %v2783
    %v2785 = vpop.xlane.xlu0 %2784
    %v2786 = vsub.f32 %v2764, %v2779
    %v2787 = vsub.f32 %v2769, %v2782
    %v2788 = vsub.f32 %v2774, %v2785
    %v2789 = vmul.f32 %v2786, 1.442695
    %v2790 = vpow.pop %v2789
    %v2791 = vmul.f32 %v2787, 1.442695
    %v2792 = vpow.pop %v2791
    %v2793 = vmul.f32 %v2788, 1.442695
    %v2794 = vpow.pop %v2793
    %v2795 = vsel %vm697, %v2790, 0.0
    %2796 = vadd.xlane.f32.xlu0 %v2795
    %v2797 = vpop.xlane.xlu0 %2796
    %v2798 = vsel %vm697, %v2792, 0.0
    %2799 = vadd.xlane.f32.xlu0 %v2798
    %v2800 = vpop.xlane.xlu0 %2799
    %v2801 = vsel %vm704, %v2794, 0.0
    %2802 = vadd.xlane.f32.xlu0 %v2801
    %v2803 = vpop.xlane.xlu0 %2802
    %v2804 = vrcp.pop %v2797
    %v2805 = vrcp.pop %v2800
    %v2806 = vrcp.pop %v2803
    %v2807 = vmul.f32 %v2790, %v2804
    %v2808 = vmul.f32 %v2792, %v2805
    %v2809 = vmul.f32 %v2794, %v2806
    %2810 = vrot.lane.b32.xlu0 %v2185, 48
    %v2811 = vpop.permute.xlu0 %2810
    %2812 = vrot.lane.b32.xlu0 %v2190, 48
    %v2813 = vpop.permute.xlu0 %2812
    %2814 = vrot.lane.b32.xlu0 %v2195, 48
    %v2815 = vpop.permute.xlu0 %2814
    %v2819 = vsel %vm697, %v2807, 0
    %v2822 = vsel %vm697, %v2808, 0
    %v2825 = vsel %vm697, %v2809, 0
    %v2827 = vsel %vm749, %v2815, 0
    %2829 = vmatprep.subr.mxu0 0.0
    %2830 = vmatpush1.msra.mxu0 %v2811
    %2831 = vmatprep.subr.mxu0 0.0
    %2832 = vmatpush1.msra.mxu0 %v2813
    %2833 = vmatprep.subr.mxu0 0.0
    %2834 = vmatpush1.msra.mxu0 %v2827
    %2835 = vmatprep.subr.mxu0 0.0
    %2836 = vmatpush1.msra.mxu0 0.0
    %2837 = vmatprep.subr.mxu0 0.0
    %2838 = vmatpush1.msra.mxu0 0.0
    %2839 = vmatprep.subr.mxu0 0.0
    %2840 = vmatpush1.msra.mxu0 0.0
    %2841 = vmatprep.subr.mxu0 0.0
    %2842 = vmatpush1.msra.mxu0 0.0
    %2843 = vmatprep.subr.mxu0 0.0
    %2844 = vmatpush1.msra.mxu0 0.0
    %2845 = vmatprep.subr.mxu0 0.0
    %2846 = vmatpush1.msra.mxu0 0.0
    %2847 = vmatprep.subr.mxu0 0.0
    %2848 = vmatpush1.msra.mxu0 0.0
    %2849 = vmatprep.subr.mxu0 0.0
    %2850 = vmatpush1.msra.mxu0 0.0
    %2851 = vmatprep.subr.mxu0 0.0
    %2852 = vmatpush1.msra.mxu0 0.0
    %2853 = vmatprep.subr.mxu0 0.0
    %2854 = vmatpush1.msra.mxu0 0.0
    %2855 = vmatprep.subr.mxu0 0.0
    %2856 = vmatpush1.msra.mxu0 0.0
    %2857 = vmatprep.subr.mxu0 0.0
    %2858 = vmatpush1.msra.mxu0 0.0
    %2859 = vmatprep.subr.mxu0 0.0
    %2860 = vmatpush1.msra.mxu0 0.0
    %2861 = vmatprep.subr.mxu0 0.0
    %2862 = vmatpush1.msra.mxu0 0.0
    %2863 = vmatprep.subr.mxu0 0.0
    %2864 = vmatpush1.msra.mxu0 0.0
    %2865 = vmatprep.subr.mxu0 0.0
    %2866 = vmatpush1.msra.mxu0 0.0
    %2867 = vmatprep.subr.mxu0 0.0
    %2868 = vmatpush1.msra.mxu0 0.0
    %2869 = vmatprep.subr.mxu0 0.0
    %2870 = vmatpush1.msra.mxu0 0.0
    %2871 = vmatprep.subr.mxu0 0.0
    %2872 = vmatpush1.msra.mxu0 0.0
    %2873 = vmatprep.subr.mxu0 0.0
    %2874 = vmatpush1.msra.mxu0 0.0
    %2875 = vmatprep.subr.mxu0 0.0
    %2876 = vmatpush1.msra.mxu0 0.0
    %2877 = vmatprep.subr.mxu0 0.0
    %2878 = vmatpush1.msra.mxu0 0.0
    %2879 = vmatprep.subr.mxu0 0.0
    %2880 = vmatpush1.msra.mxu0 0.0
    %2881 = vmatprep.subr.mxu0 0.0
    %2882 = vmatpush1.msra.mxu0 0.0
    %2883 = vmatprep.subr.mxu0 0.0
    %2884 = vmatpush1.msra.mxu0 0.0
    %2885 = vmatprep.subr.mxu0 0.0
    %2886 = vmatpush1.msra.mxu0 0.0
    %2887 = vmatprep.subr.mxu0 0.0
    %2888 = vmatpush1.msra.mxu0 0.0
    %2889 = vmatprep.subr.mxu0 0.0
    %2890 = vmatpush1.msra.mxu0 0.0
    %2891 = vmatprep.subr.mxu0 0.0
    %2892 = vmatpush1.msra.mxu0 0.0
    %2893 = vmatprep.mubr.f32.mxu0 0.0
    %2894 = vmatmul.mubr.f32.gmra.mrb[0].mxu0 %v2819
    %v2895 = vpop.f32.mrb[0].mxu0
    %v2896 = vadd.f32 0.0, %v2895
    %v2897 = vpop.f32.mrb[0].mxu0
    %2898 = vmatprep.mubr.f32.mxu0 0.0
    %2899 = vmatmul.mubr.f32.gmra.mrb[0].mxu0 %v2822
    %v2900 = vpop.f32.mrb[0].mxu0
    %v2901 = vadd.f32 0.0, %v2900
    %v2902 = vpop.f32.mrb[0].mxu0
    %2903 = vmatprep.mubr.f32.mxu0 0.0
    %2904 = vmatmul.mubr.f32.gmra.mrb[0].mxu0 %v2825
    %v2905 = vpop.f32.mrb[0].mxu0
    %v2906 = vadd.f32 0.0, %v2905
    %v2907 = vpop.f32.mrb[0].mxu0
    %2908 = vdwg.mxu0
    %2909 = vrot.lane.b32.xlu0 %v2198, 104
    %v2910 = vpop.permute.xlu0 %2909
    %2911 = vrot.lane.b32.xlu0 %v2199, 104
    %v2912 = vpop.permute.xlu0 %2911
    %2913 = vrot.lane.b32.xlu0 %v2200, 104
    %v2914 = vpop.permute.xlu0 %2913
    %2915 = vrot.lane.b32.xlu0 %v2185, 72
    %v2916 = vpop.permute.xlu0 %2915
    %2917 = vrot.lane.b32.xlu0 %v2190, 72
    %v2918 = vpop.permute.xlu0 %2917
    %2919 = vrot.lane.b32.xlu0 %v2195, 72
    %v2920 = vpop.permute.xlu0 %2919
    %v2921 = vsel %vm601, %v2910, 0
    %v2923 = vsel %vm601, %v2912, 0
    %v2925 = vsel %vm601, %v2914, 0
    %v2927 = vsel %vm601, %v2916, 0
    %v2929 = vsel %vm601, %v2918, 0
    %v2931 = vsel %vm601, %v2920, 0
    %2933 = vmatprep.subr.mxu0 0.0
    %2934 = vmatpush1.xpose.msra.mxu0 %v2927
    %2935 = vmatprep.subr.mxu0 0.0
    %2936 = vmatpush1.xpose.msra.mxu0 %v2929
    %2937 = vmatprep.subr.mxu0 0.0
    %2938 = vmatpush1.xpose.msra.mxu0 %v2931
    %2939 = vmatprep.subr.mxu0 0.0
    %2940 = vmatpush1.xpose.msra.mxu0 0.0
    %2941 = vmatprep.subr.mxu0 0.0
    %2942 = vmatpush1.xpose.msra.mxu0 0.0
    %2943 = vmatprep.subr.mxu0 0.0
    %2944 = vmatpush1.xpose.msra.mxu0 0.0
    %2945 = vmatprep.subr.mxu0 0.0
    %2946 = vmatpush1.xpose.msra.mxu0 0.0
    %2947 = vmatprep.subr.mxu0 0.0
    %2948 = vmatpush1.xpose.msra.mxu0 0.0
    %2949 = vmatprep.subr.mxu0 0.0
    %2950 = vmatpush1.xpose.msra.mxu0 0.0
    %2951 = vmatprep.subr.mxu0 0.0
    %2952 = vmatpush1.xpose.msra.mxu0 0.0
    %2953 = vmatprep.subr.mxu0 0.0
    %2954 = vmatpush1.xpose.msra.mxu0 0.0
    %2955 = vmatprep.subr.mxu0 0.0
    %2956 = vmatpush1.xpose.msra.mxu0 0.0
    %2957 = vmatprep.subr.mxu0 0.0
    %2958 = vmatpush1.xpose.msra.mxu0 0.0
    %2959 = vmatprep.subr.mxu0 0.0
    %2960 = vmatpush1.xpose.msra.mxu0 0.0
    %2961 = vmatprep.subr.mxu0 0.0
    %2962 = vmatpush1.xpose.msra.mxu0 0.0
    %2963 = vmatprep.subr.mxu0 0.0
    %2964 = vmatpush1.xpose.msra.mxu0 0.0
    %2965 = vmatprep.subr.mxu0 0.0
    %2966 = vmatpush1.xpose.msra.mxu0 0.0
    %2967 = vmatprep.subr.mxu0 0.0
    %2968 = vmatpush1.xpose.msra.mxu0 0.0
    %2969 = vmatprep.subr.mxu0 0.0
    %2970 = vmatpush1.xpose.msra.mxu0 0.0
    %2971 = vmatprep.subr.mxu0 0.0
    %2972 = vmatpush1.xpose.msra.mxu0 0.0
    %2973 = vmatprep.subr.mxu0 0.0
    %2974 = vmatpush1.xpose.msra.mxu0 0.0
    %2975 = vmatprep.subr.mxu0 0.0
    %2976 = vmatpush1.xpose.msra.mxu0 0.0
    %2977 = vmatprep.subr.mxu0 0.0
    %2978 = vmatpush1.xpose.msra.mxu0 0.0
    %2979 = vmatprep.subr.mxu0 0.0
    %2980 = vmatpush1.xpose.msra.mxu0 0.0
    %2981 = vmatprep.subr.mxu0 0.0
    %2982 = vmatpush1.xpose.msra.mxu0 0.0
    %2983 = vmatprep.subr.mxu0 0.0
    %2984 = vmatpush1.xpose.msra.mxu0 0.0
    %2985 = vmatprep.subr.mxu0 0.0
    %2986 = vmatpush1.xpose.msra.mxu0 0.0
    %2987 = vmatprep.subr.mxu0 0.0
    %2988 = vmatpush1.xpose.msra.mxu0 0.0
    %2989 = vmatprep.subr.mxu0 0.0
    %2990 = vmatpush1.xpose.msra.mxu0 0.0
    %2991 = vmatprep.subr.mxu0 0.0
    %2992 = vmatpush1.xpose.msra.mxu0 0.0
    %2993 = vmatprep.subr.mxu0 0.0
    %2994 = vmatpush1.xpose.msra.mxu0 0.0
    %2995 = vmatprep.subr.mxu0 0.0
    %2996 = vmatpush1.xpose.msra.mxu0 0.0
    %2997 = vmatprep.mubr.f32.mxu0 0.0
    %2998 = vmatmul.mubr.f32.gmra.mrb[0].mxu0 %v2921
    %v2999 = vpop.f32.mrb[0].mxu0
    %v3000 = vadd.f32 %v433, %v2999
    %v3001 = vpop.f32.mrb[0].mxu0
    %3002 = vmatprep.mubr.f32.mxu0 0.0
    %3003 = vmatmul.mubr.f32.gmra.mrb[0].mxu0 %v2923
    %v3004 = vpop.f32.mrb[0].mxu0
    %v3005 = vadd.f32 %v434, %v3004
    %v3006 = vpop.f32.mrb[0].mxu0
    %3007 = vmatprep.mubr.f32.mxu0 0.0
    %3008 = vmatmul.mubr.f32.gmra.mrb[0].mxu0 %v2925
    %v3009 = vpop.f32.mrb[0].mxu0
    %v3010 = vadd.f32 %v435, %v3009
    %v3011 = vpop.f32.mrb[0].mxu0
    %3012 = vdwg.mxu0
    %v3013 = vsel %vm697, %v3000, -inf
    %3014 = vmax.xlane.f32.xlu0 %v3013
    %v3015 = vpop.xlane.xlu0 %3014
    %v3016 = vsel %vm697, %v3005, -inf
    %3017 = vmax.xlane.f32.xlu0 %v3016
    %v3018 = vpop.xlane.xlu0 %3017
    %v3019 = vsel %vm704, %v3010, -inf
    %3020 = vmax.xlane.f32.xlu0 %v3019
    %v3021 = vpop.xlane.xlu0 %3020
    %v3022 = vsub.f32 %v3000, %v3015
    %v3023 = vsub.f32 %v3005, %v3018
    %v3024 = vsub.f32 %v3010, %v3021
    %v3025 = vmul.f32 %v3022, 1.442695
    %v3026 = vpow.pop %v3025
    %v3027 = vmul.f32 %v3023, 1.442695
    %v3028 = vpow.pop %v3027
    %v3029 = vmul.f32 %v3024, 1.442695
    %v3030 = vpow.pop %v3029
    %v3031 = vsel %vm697, %v3026, 0.0
    %3032 = vadd.xlane.f32.xlu0 %v3031
    %v3033 = vpop.xlane.xlu0 %3032
    %v3034 = vsel %vm697, %v3028, 0.0
    %3035 = vadd.xlane.f32.xlu0 %v3034
    %v3036 = vpop.xlane.xlu0 %3035
    %v3037 = vsel %vm704, %v3030, 0.0
    %3038 = vadd.xlane.f32.xlu0 %v3037
    %v3039 = vpop.xlane.xlu0 %3038
    %v3040 = vrcp.pop %v3033
    %v3041 = vrcp.pop %v3036
    %v3042 = vrcp.pop %v3039
    %v3043 = vmul.f32 %v3026, %v3040
    %v3044 = vmul.f32 %v3028, %v3041
    %v3045 = vmul.f32 %v3030, %v3042
    %3046 = vrot.lane.b32.xlu0 %v2185, 40
    %v3047 = vpop.permute.xlu0 %3046
    %3048 = vrot.lane.b32.xlu0 %v2190, 40
    %v3049 = vpop.permute.xlu0 %3048
    %3050 = vrot.lane.b32.xlu0 %v2195, 40
    %v3051 = vpop.permute.xlu0 %3050
    %v3055 = vsel %vm697, %v3043, 0
    %v3058 = vsel %vm697, %v3044, 0
    %v3061 = vsel %vm697, %v3045, 0
    %v3063 = vsel %vm749, %v3051, 0
    %3065 = vmatprep.subr.mxu0 0.0
    %3066 = vmatpush1.msra.mxu0 %v3047
    %3067 = vmatprep.subr.mxu0 0.0
    %3068 = vmatpush1.msra.mxu0 %v3049
    %3069 = vmatprep.subr.mxu0 0.0
    %3070 = vmatpush1.msra.mxu0 %v3063
    %3071 = vmatprep.subr.mxu0 0.0
    %3072 = vmatpush1.msra.mxu0 0.0
    %3073 = vmatprep.subr.mxu0 0.0
    %3074 = vmatpush1.msra.mxu0 0.0
    %3075 = vmatprep.subr.mxu0 0.0
    %3076 = vmatpush1.msra.mxu0 0.0
    %3077 = vmatprep.subr.mxu0 0.0
    %3078 = vmatpush1.msra.mxu0 0.0
    %3079 = vmatprep.subr.mxu0 0.0
    %3080 = vmatpush1.msra.mxu0 0.0
    %3081 = vmatprep.subr.mxu0 0.0
    %3082 = vmatpush1.msra.mxu0 0.0
    %3083 = vmatprep.subr.mxu0 0.0
    %3084 = vmatpush1.msra.mxu0 0.0
    %3085 = vmatprep.subr.mxu0 0.0
    %3086 = vmatpush1.msra.mxu0 0.0
    %3087 = vmatprep.subr.mxu0 0.0
    %3088 = vmatpush1.msra.mxu0 0.0
    %3089 = vmatprep.subr.mxu0 0.0
    %3090 = vmatpush1.msra.mxu0 0.0
    %3091 = vmatprep.subr.mxu0 0.0
    %3092 = vmatpush1.msra.mxu0 0.0
    %3093 = vmatprep.subr.mxu0 0.0
    %3094 = vmatpush1.msra.mxu0 0.0
    %3095 = vmatprep.subr.mxu0 0.0
    %3096 = vmatpush1.msra.mxu0 0.0
    %3097 = vmatprep.subr.mxu0 0.0
    %3098 = vmatpush1.msra.mxu0 0.0
    %3099 = vmatprep.subr.mxu0 0.0
    %3100 = vmatpush1.msra.mxu0 0.0
    %3101 = vmatprep.subr.mxu0 0.0
    %3102 = vmatpush1.msra.mxu0 0.0
    %3103 = vmatprep.subr.mxu0 0.0
    %3104 = vmatpush1.msra.mxu0 0.0
    %3105 = vmatprep.subr.mxu0 0.0
    %3106 = vmatpush1.msra.mxu0 0.0
    %3107 = vmatprep.subr.mxu0 0.0
    %3108 = vmatpush1.msra.mxu0 0.0
    %3109 = vmatprep.subr.mxu0 0.0
    %3110 = vmatpush1.msra.mxu0 0.0
    %3111 = vmatprep.subr.mxu0 0.0
    %3112 = vmatpush1.msra.mxu0 0.0
    %3113 = vmatprep.subr.mxu0 0.0
    %3114 = vmatpush1.msra.mxu0 0.0
    %3115 = vmatprep.subr.mxu0 0.0
    %3116 = vmatpush1.msra.mxu0 0.0
    %3117 = vmatprep.subr.mxu0 0.0
    %3118 = vmatpush1.msra.mxu0 0.0
    %3119 = vmatprep.subr.mxu0 0.0
    %3120 = vmatpush1.msra.mxu0 0.0
    %3121 = vmatprep.subr.mxu0 0.0
    %3122 = vmatpush1.msra.mxu0 0.0
    %3123 = vmatprep.subr.mxu0 0.0
    %3124 = vmatpush1.msra.mxu0 0.0
    %3125 = vmatprep.subr.mxu0 0.0
    %3126 = vmatpush1.msra.mxu0 0.0
    %3127 = vmatprep.subr.mxu0 0.0
    %3128 = vmatpush1.msra.mxu0 0.0
    %3129 = vmatprep.mubr.f32.mxu0 0.0
    %3130 = vmatmul.mubr.f32.gmra.mrb[0].mxu0 %v3055
    %v3131 = vpop.f32.mrb[0].mxu0
    %v3132 = vadd.f32 0.0, %v3131
    %v3133 = vpop.f32.mrb[0].mxu0
    %3134 = vmatprep.mubr.f32.mxu0 0.0
    %3135 = vmatmul.mubr.f32.gmra.mrb[0].mxu0 %v3058
    %v3136 = vpop.f32.mrb[0].mxu0
    %v3137 = vadd.f32 0.0, %v3136
    %v3138 = vpop.f32.mrb[0].mxu0
    %3139 = vmatprep.mubr.f32.mxu0 0.0
    %3140 = vmatmul.mubr.f32.gmra.mrb[0].mxu0 %v3061
    %v3141 = vpop.f32.mrb[0].mxu0
    %v3142 = vadd.f32 0.0, %v3141
    %v3143 = vpop.f32.mrb[0].mxu0
    %3144 = vdwg.mxu0
    %3148 = vrot.lane.b32.xlu0 %v2660, 8
    %v3149 = vpop.permute.xlu0 %3148
    %3150 = vrot.lane.b32.xlu0 %v2665, 8
    %v3151 = vpop.permute.xlu0 %3150
    %3152 = vrot.lane.b32.xlu0 %v2670, 8
    %v3153 = vpop.permute.xlu0 %3152
    %3160 = vrot.lane.b32.xlu0 %v2896, 16
    %v3161 = vpop.permute.xlu0 %3160
    %3162 = vrot.lane.b32.xlu0 %v2901, 16
    %v3163 = vpop.permute.xlu0 %3162
    %3164 = vrot.lane.b32.xlu0 %v2906, 16
    %v3165 = vpop.permute.xlu0 %3164
    %3172 = vrot.lane.b32.xlu0 %v3132, 24
    %v3173 = vpop.permute.xlu0 %3172
    %3174 = vrot.lane.b32.xlu0 %v3137, 24
    %v3175 = vpop.permute.xlu0 %3174
    %3176 = vrot.lane.b32.xlu0 %v3142, 24
    %v3177 = vpop.permute.xlu0 %3176
    %v3181 = vsel %vm601, %v2424, %v3149
    %v3182 = vsel %vm601, %v2429, %v3151
    %v3183 = vsel %vm601, %v2434, %v3153
    %v3184 = vsel %vm232, %v3181, %v3161
    %v3185 = vsel %vm232, %v3182, %v3163
    %v3186 = vsel %vm232, %v3183, %v3165
    %v3187 = vsel %vm1582, %v3184, %v3173
    %v3188 = vsel %vm1582, %v3185, %v3175
    %v3189 = vsel %vm1582, %v3186, %v3177
    %s3190 = scalar_lea.vmem %s13, 32
    %v3191 = vld [vmem:[%s3190] sm:$0xff]
    %v3192 = vld [vmem:[%s3190 + $0x8] sm:$0xff]
    %v3193 = vld [vmem:[%s3190 + $0x10] sm:$0xff]
    %v3194 = vld [vmem:[%s3190 + $0x18] sm:$0xff]
    %v3196 = vsel %vm368, %v3187, 0
    %v3199 = vsel %vm368, %v3188, 0
    %v3202 = vsel %vm368, %v3189, 0
    %3204 = vmatprep.subr.mxu0 0.0
    %3205 = vmatpush1.msra.mxu0 %v3191
    %3206 = vmatprep.subr.mxu0 0.0
    %3207 = vmatpush1.msra.mxu0 %v3192
    %3208 = vmatprep.subr.mxu0 0.0
    %3209 = vmatpush1.msra.mxu0 %v3193
    %3210 = vmatprep.subr.mxu0 0.0
    %3211 = vmatpush1.msra.mxu0 %v3194
    %3212 = vmatprep.subr.mxu0 0.0
    %3213 = vmatpush1.msra.mxu0 0.0
    %3214 = vmatprep.subr.mxu0 0.0
    %3215 = vmatpush1.msra.mxu0 0.0
    %3216 = vmatprep.subr.mxu0 0.0
    %3217 = vmatpush1.msra.mxu0 0.0
    %3218 = vmatprep.subr.mxu0 0.0
    %3219 = vmatpush1.msra.mxu0 0.0
    %3220 = vmatprep.subr.mxu0 0.0
    %3221 = vmatpush1.msra.mxu0 0.0
    %3222 = vmatprep.subr.mxu0 0.0
    %3223 = vmatpush1.msra.mxu0 0.0
    %3224 = vmatprep.subr.mxu0 0.0
    %3225 = vmatpush1.msra.mxu0 0.0
    %3226 = vmatprep.subr.mxu0 0.0
    %3227 = vmatpush1.msra.mxu0 0.0
    %3228 = vmatprep.subr.mxu0 0.0
    %3229 = vmatpush1.msra.mxu0 0.0
    %3230 = vmatprep.subr.mxu0 0.0
    %3231 = vmatpush1.msra.mxu0 0.0
    %3232 = vmatprep.subr.mxu0 0.0
    %3233 = vmatpush1.msra.mxu0 0.0
    %3234 = vmatprep.subr.mxu0 0.0
    %3235 = vmatpush1.msra.mxu0 0.0
    %3236 = vmatprep.subr.mxu0 0.0
    %3237 = vmatpush1.msra.mxu0 0.0
    %3238 = vmatprep.subr.mxu0 0.0
    %3239 = vmatpush1.msra.mxu0 0.0
    %3240 = vmatprep.subr.mxu0 0.0
    %3241 = vmatpush1.msra.mxu0 0.0
    %3242 = vmatprep.subr.mxu0 0.0
    %3243 = vmatpush1.msra.mxu0 0.0
    %3244 = vmatprep.subr.mxu0 0.0
    %3245 = vmatpush1.msra.mxu0 0.0
    %3246 = vmatprep.subr.mxu0 0.0
    %3247 = vmatpush1.msra.mxu0 0.0
    %3248 = vmatprep.subr.mxu0 0.0
    %3249 = vmatpush1.msra.mxu0 0.0
    %3250 = vmatprep.subr.mxu0 0.0
    %3251 = vmatpush1.msra.mxu0 0.0
    %3252 = vmatprep.subr.mxu0 0.0
    %3253 = vmatpush1.msra.mxu0 0.0
    %3254 = vmatprep.subr.mxu0 0.0
    %3255 = vmatpush1.msra.mxu0 0.0
    %3256 = vmatprep.subr.mxu0 0.0
    %3257 = vmatpush1.msra.mxu0 0.0
    %3258 = vmatprep.subr.mxu0 0.0
    %3259 = vmatpush1.msra.mxu0 0.0
    %3260 = vmatprep.subr.mxu0 0.0
    %3261 = vmatpush1.msra.mxu0 0.0
    %3262 = vmatprep.subr.mxu0 0.0
    %3263 = vmatpush1.msra.mxu0 0.0
    %3264 = vmatprep.subr.mxu0 0.0
    %3265 = vmatpush1.msra.mxu0 0.0
    %3266 = vmatprep.subr.mxu0 0.0
    %3267 = vmatpush1.msra.mxu0 0.0
    %3268 = vmatprep.mubr.f32.mxu0 0.0
    %3269 = vmatmul.mubr.f32.gmra.mrb[0].mxu0 %v3196
    %v3270 = vpop.f32.mrb[0].mxu0
    %v3271 = vadd.f32 0.0, %v3270
    %v3272 = vpop.f32.mrb[0].mxu0
    %3273 = vmatprep.mubr.f32.mxu0 0.0
    %3274 = vmatmul.mubr.f32.gmra.mrb[0].mxu0 %v3199
    %v3275 = vpop.f32.mrb[0].mxu0
    %v3276 = vadd.f32 0.0, %v3275
    %v3277 = vpop.f32.mrb[0].mxu0
    %3278 = vmatprep.mubr.f32.mxu0 0.0
    %3279 = vmatmul.mubr.f32.gmra.mrb[0].mxu0 %v3202
    %v3280 = vpop.f32.mrb[0].mxu0
    %v3281 = vadd.f32 0.0, %v3280
    %v3282 = vpop.f32.mrb[0].mxu0
    %3283 = vdwg.mxu0
    %v3284 = vadd.f32 %v2040, %v3271
    %v3285 = vadd.f32 %v2041, %v3276
    %v3286 = vadd.f32 %v2042, %v3281
    %s3287 = scalar_lea.vmem %s14, 1
    %v3288 = vld [vmem:[%s3287] sm:$0x1]
    %v3290 = vlaneseq
    %v3291 = vshrl.u32 %v3290, 7
    %v3292 = vsub.s32 0, %v3291
    %v3293 = vrot.slane %v3288, %v3292
    %v3295 = vadd.f32 %v3284, %v3293
    %v3296 = vadd.f32 %v3285, %v3293
    %v3297 = vadd.f32 %v3286, %v3293
    %s3298 = scalar_lea.vmem [#allocation18], 1
    %v3299 = vld [vmem:[%s3298] sm:$0x1]
    %s3300 = scalar_lea.vmem [#allocation20], 1
    %v3301 = vld [vmem:[%s3300] sm:$0x1]
    %v3302 = vsel %vm368, %v3295, 0.0
    %3303 = vadd.xlane.f32.xlu0 %v3302
    %v3304 = vpop.xlane.xlu0 %3303
    %v3305 = vsel %vm368, %v3296, 0.0
    %3306 = vadd.xlane.f32.xlu0 %v3305
    %v3307 = vpop.xlane.xlu0 %3306
    %v3308 = vsel %vm444, %v3297, 0.0
    %3309 = vadd.xlane.f32.xlu0 %v3308
    %v3310 = vpop.xlane.xlu0 %3309
    %v3311 = vmul.f32 %v3304, %v375
    %v3312 = vmul.f32 %v3307, %v375
    %v3313 = vmul.f32 %v3310, %v375
    %v3314 = vsub.f32 %v3295, %v3311
    %v3315 = vsub.f32 %v3296, %v3312
    %v3316 = vsub.f32 %v3297, %v3313
    %v3317 = vmul.f32 %v3314, %v3314
    %v3318 = vmul.f32 %v3315, %v3315
    %v3319 = vmul.f32 %v3316, %v3316
    %v3320 = vsel %vm368, %v3317, 0.0
    %3321 = vadd.xlane.f32.xlu0 %v3320
    %v3322 = vpop.xlane.xlu0 %3321
    %v3323 = vsel %vm368, %v3318, 0.0
    %3324 = vadd.xlane.f32.xlu0 %v3323
    %v3325 = vpop.xlane.xlu0 %3324
    %v3326 = vsel %vm444, %v3319, 0.0
    %3327 = vadd.xlane.f32.xlu0 %v3326
    %v3328 = vpop.xlane.xlu0 %3327
    %v3329 = vmul.f32 %v3322, %v375
    %v3330 = vmul.f32 %v3325, %v375
    %v3331 = vmul.f32 %v3328, %v375
    %v3332 = vadd.f32 %v3329, 1e-05
    %v3333 = vadd.f32 %v3330, 1e-05
    %v3334 = vadd.f32 %v3331, 1e-05
    %v3335 = vrsqrt.pop %v3332
    %v3336 = vrsqrt.pop %v3333
    %v3337 = vrsqrt.pop %v3334
    %v3338 = vmul.f32 %v3314, %v3335
    %v3339 = vmul.f32 %v3315, %v3336
    %v3340 = vmul.f32 %v3316, %v3337
    %v3342 = vlaneseq
    %v3343 = vshrl.u32 %v3342, 7
    %v3344 = vsub.s32 0, %v3343
    %v3345 = vrot.slane %v3299, %v3344
    %v3347 = vmul.f32 %v3338, %v3345
    %v3348 = vmul.f32 %v3339, %v3345
    %v3349 = vmul.f32 %v3340, %v3345
    %v3351 = vlaneseq
    %v3352 = vshrl.u32 %v3351, 7
    %v3353 = vsub.s32 0, %v3352
    %v3354 = vrot.slane %v3301, %v3353
    %v3356 = vadd.f32 %v3347, %v3354
    %v3357 = vadd.f32 %v3348, %v3354
    %v3358 = vadd.f32 %v3349, %v3354
    %s3359 = scalar_lea.vmem %s17, 32
    %v3360 = vld [vmem:[%s3359] sm:$0xff]
    %v3361 = vld [vmem:[%s3359 + $0x8] sm:$0xff]
    %v3362 = vld [vmem:[%s3359 + $0x10] sm:$0xff]
    %v3363 = vld [vmem:[%s3359 + $0x18] sm:$0xff]
    %s3364 = scalar_lea.vmem [#allocation21], 1
    %v3365 = vld [vmem:[%s3364] sm:$0x1]
    %v3367 = vlaneseq
    %v3368 = vshrl.u32 %v3367, 7
    %v3369 = vsub.s32 0, %v3368
    %v3370 = vrot.slane %v3365, %v3369
    %v3373 = vsel %vm368, %v3356, 0
    %v3376 = vsel %vm368, %v3357, 0
    %v3379 = vsel %vm368, %v3358, 0
    %3381 = vmatprep.subr.mxu0 0.0
    %3382 = vmatpush1.msra.mxu0 %v3360
    %3383 = vmatprep.subr.mxu0 0.0
    %3384 = vmatpush1.msra.mxu0 %v3361
    %3385 = vmatprep.subr.mxu0 0.0
    %3386 = vmatpush1.msra.mxu0 %v3362
    %3387 = vmatprep.subr.mxu0 0.0
    %3388 = vmatpush1.msra.mxu0 %v3363
    %3389 = vmatprep.subr.mxu0 0.0
    %3390 = vmatpush1.msra.mxu0 0.0
    %3391 = vmatprep.subr.mxu0 0.0
    %3392 = vmatpush1.msra.mxu0 0.0
    %3393 = vmatprep.subr.mxu0 0.0
    %3394 = vmatpush1.msra.mxu0 0.0
    %3395 = vmatprep.subr.mxu0 0.0
    %3396 = vmatpush1.msra.mxu0 0.0
    %3397 = vmatprep.subr.mxu0 0.0
    %3398 = vmatpush1.msra.mxu0 0.0
    %3399 = vmatprep.subr.mxu0 0.0
    %3400 = vmatpush1.msra.mxu0 0.0
    %3401 = vmatprep.subr.mxu0 0.0
    %3402 = vmatpush1.msra.mxu0 0.0
    %3403 = vmatprep.subr.mxu0 0.0
    %3404 = vmatpush1.msra.mxu0 0.0
    %3405 = vmatprep.subr.mxu0 0.0
    %3406 = vmatpush1.msra.mxu0 0.0
    %3407 = vmatprep.subr.mxu0 0.0
    %3408 = vmatpush1.msra.mxu0 0.0
    %3409 = vmatprep.subr.mxu0 0.0
    %3410 = vmatpush1.msra.mxu0 0.0
    %3411 = vmatprep.subr.mxu0 0.0
    %3412 = vmatpush1.msra.mxu0 0.0
    %3413 = vmatprep.subr.mxu0 0.0
    %3414 = vmatpush1.msra.mxu0 0.0
    %3415 = vmatprep.subr.mxu0 0.0
    %3416 = vmatpush1.msra.mxu0 0.0
    %3417 = vmatprep.subr.mxu0 0.0
    %3418 = vmatpush1.msra.mxu0 0.0
    %3419 = vmatprep.subr.mxu0 0.0
    %3420 = vmatpush1.msra.mxu0 0.0
    %3421 = vmatprep.subr.mxu0 0.0
    %3422 = vmatpush1.msra.mxu0 0.0
    %3423 = vmatprep.subr.mxu0 0.0
    %3424 = vmatpush1.msra.mxu0 0.0
    %3425 = vmatprep.subr.mxu0 0.0
    %3426 = vmatpush1.msra.mxu0 0.0
    %3427 = vmatprep.subr.mxu0 0.0
    %3428 = vmatpush1.msra.mxu0 0.0
    %3429 = vmatprep.subr.mxu0 0.0
    %3430 = vmatpush1.msra.mxu0 0.0
    %3431 = vmatprep.subr.mxu0 0.0
    %3432 = vmatpush1.msra.mxu0 0.0
    %3433 = vmatprep.subr.mxu0 0.0
    %3434 = vmatpush1.msra.mxu0 0.0
    %3435 = vmatprep.subr.mxu0 0.0
    %3436 = vmatpush1.msra.mxu0 0.0
    %3437 = vmatprep.subr.mxu0 0.0
    %3438 = vmatpush1.msra.mxu0 0.0
    %3439 = vmatprep.subr.mxu0 0.0
    %3440 = vmatpush1.msra.mxu0 0.0
    %3441 = vmatprep.subr.mxu0 0.0
    %3442 = vmatpush1.msra.mxu0 0.0
    %3443 = vmatprep.subr.mxu0 0.0
    %3444 = vmatpush1.msra.mxu0 0.0
    %3445 = vmatprep.mubr.f32.mxu0 0.0
    %3446 = vmatmul.mubr.f32.gmra.mrb[0].mxu0 %v3373
    %v3447 = vpop.f32.mrb[0].mxu0
    %v3448 = vadd.f32 %v3370, %v3447
    %v3449 = vpop.f32.mrb[0].mxu0
    %3450 = vmatprep.mubr.f32.mxu0 0.0
    %3451 = vmatmul.mubr.f32.gmra.mrb[0].mxu0 %v3376
    %v3452 = vpop.f32.mrb[0].mxu0
    %v3453 = vadd.f32 %v3370, %v3452
    %v3454 = vpop.f32.mrb[0].mxu0
    %3455 = vmatprep.mubr.f32.mxu0 0.0
    %3456 = vmatmul.mubr.f32.gmra.mrb[0].mxu0 %v3379
    %v3457 = vpop.f32.mrb[0].mxu0
    %v3458 = vadd.f32 %v3370, %v3457
    %v3459 = vpop.f32.mrb[0].mxu0
    %3460 = vdwg.mxu0
    %v3461 = vmul.f32 %v3448, 0.5
    %v3462 = vmul.f32 %v3453, 0.5
    %v3463 = vmul.f32 %v3458, 0.5
    %v3464 = vmul.f32 %v3448, 0.70710677
    %v3465 = vmul.f32 %v3453, 0.70710677
    %v3466 = vmul.f32 %v3458, 0.70710677
    %vm3467 = vcmp.ge.f32.partialorder %v3464, 0.0
    %vm3468 = vcmp.ge.f32.partialorder %v3465, 0.0
    %vm3469 = vcmp.ge.f32.partialorder %v3466, 0.0
    %v3470 = vsel %vm3467, 1.0, -1.0
    %v3471 = vsel %vm3468, 1.0, -1.0
    %v3472 = vsel %vm3469, 1.0, -1.0
    %v3473 = vand.u32 2147483647, %v3464
    %v3474 = vand.u32 2147483647, %v3465
    %v3475 = vand.u32 2147483647, %v3466
    %v3476 = vmul.f32 %v3473, 0.3275911
    %v3477 = vmul.f32 %v3474, 0.3275911
    %v3478 = vmul.f32 %v3475, 0.3275911
    %v3479 = vadd.f32 %v3476, 1.0
    %v3480 = vadd.f32 %v3477, 1.0
    %v3481 = vadd.f32 %v3478, 1.0
    %v3482 = vrcp.pop %v3479
    %v3483 = vmul.f32 1.0, %v3482
    %v3484 = vrcp.pop %v3480
    %v3485 = vmul.f32 1.0, %v3484
    %v3486 = vrcp.pop %v3481
    %v3487 = vmul.f32 1.0, %v3486
    %v3488 = vmul.f32 %v3483, 1.0614054
    %v3489 = vmul.f32 %v3485, 1.0614054
    %v3490 = vmul.f32 %v3487, 1.0614054
    %v3491 = vadd.f32 %v3488, -1.4531521
    %v3492 = vadd.f32 %v3489, -1.4531521
    %v3493 = vadd.f32 %v3490, -1.4531521
    %v3494 = vmul.f32 %v3491, %v3483
    %v3495 = vmul.f32 %v3492, %v3485
    %v3496 = vmul.f32 %v3493, %v3487
    %v3497 = vadd.f32 %v3494, 1.4214138
    %v3498 = vadd.f32 %v3495, 1.4214138
    %v3499 = vadd.f32 %v3496, 1.4214138
    %v3500 = vmul.f32 %v3497, %v3483
    %v3501 = vmul.f32 %v3498, %v3485
    %v3502 = vmul.f32 %v3499, %v3487
    %v3503 = vadd.f32 %v3500, -0.28449672
    %v3504 = vadd.f32 %v3501, -0.28449672
    %v3505 = vadd.f32 %v3502, -0.28449672
    %v3506 = vmul.f32 %v3503, %v3483
    %v3507 = vmul.f32 %v3504, %v3485
    %v3508 = vmul.f32 %v3505, %v3487
    %v3509 = vadd.f32 %v3506, 0.2548296
    %v3510 = vadd.f32 %v3507, 0.2548296
    %v3511 = vadd.f32 %v3508, 0.2548296
    %v3512 = vmul.f32 %v3509, %v3483
    %v3513 = vmul.f32 %v3510, %v3485
    %v3514 = vmul.f32 %v3511, %v3487
    %v3515 = vsub.f32 0.0, %v3473
    %v3516 = vsub.f32 0.0, %v3474
    %v3517 = vsub.f32 0.0, %v3475
    %v3518 = vmul.f32 %v3515, %v3473
    %v3519 = vmul.f32 %v3516, %v3474
    %v3520 = vmul.f32 %v3517, %v3475
    %v3521 = vmul.f32 %v3518, 1.442695
    %v3522 = vpow.pop %v3521
    %v3523 = vmul.f32 %v3519, 1.442695
    %v3524 = vpow.pop %v3523
    %v3525 = vmul.f32 %v3520, 1.442695
    %v3526 = vpow.pop %v3525
    %v3527 = vmul.f32 %v3512, %v3522
    %v3528 = vmul.f32 %v3513, %v3524
    %v3529 = vmul.f32 %v3514, %v3526
    %v3530 = vsub.f32 1.0, %v3527
    %v3531 = vsub.f32 1.0, %v3528
    %v3532 = vsub.f32 1.0, %v3529
    %v3533 = vmul.f32 %v3470, %v3530
    %v3534 = vmul.f32 %v3471, %v3531
    %v3535 = vmul.f32 %v3472, %v3532
    %v3536 = vadd.f32 %v3533, 1.0
    %v3537 = vadd.f32 %v3534, 1.0
    %v3538 = vadd.f32 %v3535, 1.0
    %v3539 = vmul.f32 %v3461, %v3536
    %v3540 = vmul.f32 %v3462, %v3537
    %v3541 = vmul.f32 %v3463, %v3538
    %s3542 = scalar_lea.vmem %s19, 64
    %v3543 = vld [vmem:[%s3542] sm:$0xff]
    %v3544 = vld [vmem:[%s3542 + $0x8] sm:$0xff]
    %v3545 = vld [vmem:[%s3542 + $0x10] sm:$0xff]
    %v3546 = vld [vmem:[%s3542 + $0x18] sm:$0xff]
    %v3547 = vld [vmem:[%s3542 + $0x20] sm:$0xff]
    %v3548 = vld [vmem:[%s3542 + $0x28] sm:$0xff]
    %v3549 = vld [vmem:[%s3542 + $0x30] sm:$0xff]
    %v3550 = vld [vmem:[%s3542 + $0x38] sm:$0xff]
    %v3552 = vsel %vm1940, %v3539, 0
    %v3555 = vsel %vm1940, %v3540, 0
    %v3558 = vsel %vm1940, %v3541, 0
    %3560 = vmatprep.subr.mxu0 0.0
    %3561 = vmatpush1.msra.mxu0 %v3543
    %3562 = vmatprep.subr.mxu0 0.0
    %3563 = vmatpush1.msra.mxu0 %v3544
    %3564 = vmatprep.subr.mxu0 0.0
    %3565 = vmatpush1.msra.mxu0 %v3545
    %3566 = vmatprep.subr.mxu0 0.0
    %3567 = vmatpush1.msra.mxu0 %v3546
    %3568 = vmatprep.subr.mxu0 0.0
    %3569 = vmatpush1.msra.mxu0 %v3547
    %3570 = vmatprep.subr.mxu0 0.0
    %3571 = vmatpush1.msra.mxu0 %v3548
    %3572 = vmatprep.subr.mxu0 0.0
    %3573 = vmatpush1.msra.mxu0 %v3549
    %3574 = vmatprep.subr.mxu0 0.0
    %3575 = vmatpush1.msra.mxu0 %v3550
    %3576 = vmatprep.subr.mxu0 0.0
    %3577 = vmatpush1.msra.mxu0 0.0
    %3578 = vmatprep.subr.mxu0 0.0
    %3579 = vmatpush1.msra.mxu0 0.0
    %3580 = vmatprep.subr.mxu0 0.0
    %3581 = vmatpush1.msra.mxu0 0.0
    %3582 = vmatprep.subr.mxu0 0.0
    %3583 = vmatpush1.msra.mxu0 0.0
    %3584 = vmatprep.subr.mxu0 0.0
    %3585 = vmatpush1.msra.mxu0 0.0
    %3586 = vmatprep.subr.mxu0 0.0
    %3587 = vmatpush1.msra.mxu0 0.0
    %3588 = vmatprep.subr.mxu0 0.0
    %3589 = vmatpush1.msra.mxu0 0.0
    %3590 = vmatprep.subr.mxu0 0.0
    %3591 = vmatpush1.msra.mxu0 0.0
    %3592 = vmatprep.subr.mxu0 0.0
    %3593 = vmatpush1.msra.mxu0 0.0
    %3594 = vmatprep.subr.mxu0 0.0
    %3595 = vmatpush1.msra.mxu0 0.0
    %3596 = vmatprep.subr.mxu0 0.0
    %3597 = vmatpush1.msra.mxu0 0.0
    %3598 = vmatprep.subr.mxu0 0.0
    %3599 = vmatpush1.msra.mxu0 0.0
    %3600 = vmatprep.subr.mxu0 0.0
    %3601 = vmatpush1.msra.mxu0 0.0
    %3602 = vmatprep.subr.mxu0 0.0
    %3603 = vmatpush1.msra.mxu0 0.0
    %3604 = vmatprep.subr.mxu0 0.0
    %3605 = vmatpush1.msra.mxu0 0.0
    %3606 = vmatprep.subr.mxu0 0.0
    %3607 = vmatpush1.msra.mxu0 0.0
    %3608 = vmatprep.subr.mxu0 0.0
    %3609 = vmatpush1.msra.mxu0 0.0
    %3610 = vmatprep.subr.mxu0 0.0
    %3611 = vmatpush1.msra.mxu0 0.0
    %3612 = vmatprep.subr.mxu0 0.0
    %3613 = vmatpush1.msra.mxu0 0.0
    %3614 = vmatprep.subr.mxu0 0.0
    %3615 = vmatpush1.msra.mxu0 0.0
    %3616 = vmatprep.subr.mxu0 0.0
    %3617 = vmatpush1.msra.mxu0 0.0
    %3618 = vmatprep.subr.mxu0 0.0
    %3619 = vmatpush1.msra.mxu0 0.0
    %3620 = vmatprep.subr.mxu0 0.0
    %3621 = vmatpush1.msra.mxu0 0.0
    %3622 = vmatprep.subr.mxu0 0.0
    %3623 = vmatpush1.msra.mxu0 0.0
    %3624 = vmatprep.mubr.f32.mxu0 0.0
    %3625 = vmatmul.mubr.f32.gmra.mrb[0].mxu0 %v3552
    %v3626 = vpop.f32.mrb[0].mxu0
    %v3627 = vadd.f32 0.0, %v3626
    %v3628 = vpop.f32.mrb[0].mxu0
    %3629 = vmatprep.mubr.f32.mxu0 0.0
    %3630 = vmatmul.mubr.f32.gmra.mrb[0].mxu0 %v3555
    %v3631 = vpop.f32.mrb[0].mxu0
    %v3632 = vadd.f32 0.0, %v3631
    %v3633 = vpop.f32.mrb[0].mxu0
    %3634 = vmatprep.mubr.f32.mxu0 0.0
    %3635 = vmatmul.mubr.f32.gmra.mrb[0].mxu0 %v3558
    %v3636 = vpop.f32.mrb[0].mxu0
    %v3637 = vpop.f32.mrb[0].mxu0
    %3638 = vdwg.mxu0
    %v3639 = vadd.f32 %v3295, %v3627
    %v3640 = vadd.f32 %v3296, %v3632
    %s3641 = scalar_lea.vmem %s20, 1
    %v3642 = vld [vmem:[%s3641] sm:$0x1]
    %v3644 = vlaneseq
    %v3645 = vshrl.u32 %v3644, 7
    %v3646 = vsub.s32 0, %v3645
    %v3647 = vrot.slane %v3642, %v3646
    %v3649 = vadd.f32 %v3639, %v3647
    %v3650 = vadd.f32 %v3640, %v3647
    %v3651 = vld [vmem:[%s21] sm:$0x1]
    %v3652 = vld [vmem:[%s22] sm:$0x1]
    %vm3653 = vcmask 1040384
    %v3654 = vsel %vm3653, %v3649, %v3650
    %v3655 = vsel %vm444, %v3654, 0.0
    %3656 = vadd.xlane.f32.xlu0 %v3655
    %v3657 = vpop.xlane.xlu0 %3656
    %v3658 = vmul.f32 %v3657, %v375
    %v3659 = vsub.f32 %v3654, %v3658
    %v3660 = vmul.f32 %v3659, %v3659
    %v3661 = vsel %vm444, %v3660, 0.0
    %3662 = vadd.xlane.f32.xlu0 %v3661
    %v3663 = vpop.xlane.xlu0 %3662
    %v3664 = vmul.f32 %v3663, %v375
    %v3665 = vadd.f32 %v3664, 1e-05
    %v3666 = vrsqrt.pop %v3665
    %v3667 = vmul.f32 %v3659, %v3666
    %v3669 = vlaneseq
    %v3670 = vshrl.u32 %v3669, 7
    %v3671 = vsub.s32 0, %v3670
    %v3672 = vrot.slane %v3651, %v3671
    %v3674 = vmul.f32 %v3667, %v3672
    %v3676 = vlaneseq
    %v3677 = vshrl.u32 %v3676, 7
    %v3678 = vsub.s32 0, %v3677
    %v3679 = vrot.slane %v3652, %v3678
    %v3681 = vadd.f32 %v3674, %v3679
    %3682 = vst.msk [vmem:[#allocation23] sm:$0x3] %vm444, %v3681
    // Predicated region
    $region142: #{tpu_custom_call.1} parent=1 // pred_check
      _
    $region143: #{tpu_custom_call.1} parent=1 // pred_check_branch
      %3684 = sbr.rel (0) target = $region145
    $region144: #{tpu_custom_call.1} parent=1 // pred_region
      %s3686 = ssub.s32 32, 32
      %3687 = vsyncadd [#allocation5], %s3686
      %s3689 = sshll.u32 [#allocation23], 4
      %s3690 = int_to_ptr.vmem [resolvable:$true] %s3689
      %3692 = dma.vmem_to_hbm [thread:$0]  %s3690, 32, %s23, [#allocation5]
    $region145: #{tpu_custom_call.1} parent=1 // pred_fallthru
      _
    // Predicated region
    $region146: #{tpu_custom_call.1} parent=1 // pred_check
      _
    $region147: #{tpu_custom_call.1} parent=1 // pred_check_branch
      %3694 = sbr.rel (0) target = $region149
    $region148: #{tpu_custom_call.1} parent=1 // pred_region
      %3695 = dma.done [#allocation5], 32
    $region149: #{tpu_custom_call.1} parent=1 // pred_fallthru
      _
    %3696 = vsyncpa [#allocation4], 1
    %3697 = vsyncpa [#allocation7], 1
    %3698 = vsyncpa [#allocation10], 1
    %3699 = vsyncpa [#allocation13], 1
    %3700 = vsyncpa [#allocation16], 1
    %3701 = vsyncpa [#allocation19], 1
    %3702 = vsyncpa [#allocation22], 1
    %3703 = vsyncpa [#allocation5], 1

</llo_original>
